<compile_context>
chip_gen: v5e
topology: v5e:2x2
jax: 0.10.0
libtpu: 0.0.40
codegen_flags: <defaults>
</compile_context>

<pallas_src>
import jax
import jax.numpy as jnp
from jax.experimental import pallas as pl
from jax.experimental.pallas import tpu as pltpu


# ------------------------------ Pallas kernel ------------------------------ #

def _lstm_cell(gates, c, g2_mask, H):
    """LSTM cell update with a SINGLE full-width sigmoid.

    PyTorch gate order (i, f, g, o); tanh(x) = 2*sigmoid(2x) - 1, so the g
    quadrant is pre-scaled by 2 (VPU select, hoisted mask) and affinely fixed
    up after one EUP push."""
    s = jax.nn.sigmoid(jnp.where(g2_mask, gates * 2.0, gates))
    i_g = s[:, 0 * H:1 * H]
    f_g = s[:, 1 * H:2 * H]
    g_g = 2.0 * s[:, 2 * H:3 * H] - 1.0
    o_g = s[:, 3 * H:4 * H]
    c_new = f_g * c + i_g * g_g
    h_new = o_g * jnp.tanh(c_new)
    return h_new, c_new


def _run_lstm(seq, z, wih0_ref, wwave_ref, b_ref, wh0_ref, bh0_ref,
              wc0_ref, bc0_ref, T, B, H):
    """Wavefronted multi-layer LSTM over the vreg-resident time-major sequence.

    seq: (T*B, H) value (row t*B+b = time t, batch b).  Returns the top layer's
    output sequence as a value of the same shape.
    z: (B, Dz) latent feeding the tanh(Linear) initial-state heads.
    wih0: (H, 4H) layer-0 input weight (pre-transposed).
    wwave: ((2L-1)*H, 4H) stacked recurrence weight [W_hh_0; W_ih_1; W_hh_1;...]
    b: (L, 1, 4H) = b_ih + b_hh per layer.
    """
    L = b_ref.shape[0]
    fourH = 4 * H
    nblk = 2 * L - 1

    # Initial states for all layers at once (two small MXU calls + EUP).
    h0_all = jnp.tanh(
        jnp.dot(z, wh0_ref[...], preferred_element_type=jnp.float32) + bh0_ref[...])
    c0_all = jnp.tanh(
        jnp.dot(z, wc0_ref[...], preferred_element_type=jnp.float32) + bc0_ref[...])
    h = [h0_all[:, l * H:(l + 1) * H] for l in range(L)]
    c = [c0_all[:, l * H:(l + 1) * H] for l in range(L)]

    # Hoisted layer-0 input projection (+ bias): ONE (T*B, H)x(H, 4H) MXU call.
    pre0 = (jnp.dot(seq, wih0_ref[...], preferred_element_type=jnp.float32)
            + b_ref[0])

    w_wave = wwave_ref[...]                          # ((2L-1)*H, 4H), loaded once
    b_bcast = [jnp.broadcast_to(b_ref[l], (B, fourH)) for l in range(1, L)]
    zeros_bh = jnp.zeros((B, H), jnp.float32)

    # Hoisted g-quadrant lane mask for the single-sigmoid activation.
    lane = jax.lax.broadcasted_iota(jnp.int32, (1, fourH), 1)
    g2_mask = (lane >= 2 * H) & (lane < 3 * H)

    outs = []
    for w in range(T + L - 1):                       # static, fully unrolled
        active = [l for l in range(L) if 0 <= w - l < T]

        # Block-structured LHS: one row block per active layer; column blocks
        # line up with the stacked w_wave rows.  All reads use PRE-wave h's.
        lhs_rows, add_rows = [], []
        for l in active:
            cols = [zeros_bh] * nblk
            if l == 0:
                cols[0] = h[0]
                add_rows.append(pre0[w * B:(w + 1) * B, :])
            else:
                cols[2 * l - 1] = h[l - 1]           # layer l-1 output @ time w-l
                cols[2 * l] = h[l]
                add_rows.append(b_bcast[l - 1])
            lhs_rows.append(jnp.concatenate(cols, axis=1))
        lhs = jnp.concatenate(lhs_rows, axis=0)      # (n_active*B, (2L-1)*H)
        add = jnp.concatenate(add_rows, axis=0)      # (n_active*B, 4H)

        # ONE fused MXU call for every active layer's gates this wave.
        gates = jnp.dot(lhs, w_wave, preferred_element_type=jnp.float32) + add
        c_stack = jnp.concatenate([c[l] for l in active], axis=0)
        h_new, c_new = _lstm_cell(gates, c_stack, g2_mask, H)

        for k, l in enumerate(active):
            h[l] = h_new[k * B:(k + 1) * B, :]
            c[l] = c_new[k * B:(k + 1) * B, :]
        if w >= L - 1:                               # top layer emitted time w-(L-1)
            outs.append(h[L - 1])

    return jnp.concatenate(outs, axis=0)             # (T*B, H), time-major


def _coord_gen_kernel(
        text_len_ref,                                # SMEM (B,) int32
        x_ref, noise_ref,                            # VMEM (T*B, H), (B, Dz)
        e_wih0, e_wwave, e_b, e_wh0, e_bh0, e_wc0, e_bc0,
        d_wih0, d_wwave, d_b, d_wh0, d_bh0, d_wc0, d_bc0,
        pw_ref, pb_ref,                              # (H, 4), (1, 4)
        out_ref):                                    # (T*B, 4)
    B = text_len_ref.shape[0]
    TB, H = x_ref.shape
    T = TB // B

    # ---------------- encoder LSTM (sequence stays in vregs) ----------------
    mid = _run_lstm(x_ref[...], noise_ref[...],
                    e_wih0, e_wwave, e_b, e_wh0, e_bh0, e_wc0, e_bc0, T, B, H)

    # ---- gather mid[time=text_len[b], batch=b, :] as a one-hot MXU matmul ----
    row = jax.lax.broadcasted_iota(jnp.int32, (B, TB), 0)
    col = jax.lax.broadcasted_iota(jnp.int32, (B, TB), 1)
    tgt = jnp.zeros((B, TB), jnp.int32)
    for b in range(B):                               # B static -> unrolled
        r = jnp.clip(text_len_ref[b], 0, T - 1) * B + b   # clamped row index
        tgt = jnp.where(row == b, r, tgt)
    onehot = (col == tgt).astype(jnp.float32)                      # (B, T*B)
    mid_last = jnp.dot(onehot, mid, preferred_element_type=jnp.float32)  # (B, H)

    # ---------------- decoder LSTM ----------------
    out_seq = _run_lstm(mid, mid_last,
                        d_wih0, d_wwave, d_b, d_wh0, d_bh0, d_wc0, d_bc0, T, B, H)

    # ------------- coord_proj epilogue: Linear(H, 4) + Sigmoid ---------------
    out_ref[...] = jax.nn.sigmoid(
        jnp.dot(out_seq, pw_ref[...], preferred_element_type=jnp.float32)
        + pb_ref[...])


# ------------------------------ JAX wrapper -------------------------------- #

_LSTM_KEYS = ("w_ih0", "w_wave", "b", "w_h0", "b_h0", "w_c0", "b_c0")


def coord_generator_forward(params, cond_feat, noise, text_len_):
    """cond_feat: (B, T, H) f32, noise: (B, latent_dim) f32,
    text_len_: (B, 1, H) int32 (index assumed constant across H)."""
    B, T, H = cond_feat.shape

    # time-major flattened input slab; per-batch scalar time index.
    x_flat = jnp.transpose(cond_feat, (1, 0, 2)).reshape(T * B, H)
    text_len_vec = text_len_[:, 0, 0].astype(jnp.int32)            # (B,)

    enc = tuple(params["enc"][k] for k in _LSTM_KEYS)
    dec = tuple(params["dec"][k] for k in _LSTM_KEYS)

    vmem = pl.BlockSpec(memory_space=pltpu.MemorySpace.VMEM)
    smem = pl.BlockSpec(memory_space=pltpu.MemorySpace.SMEM)

    coords_flat = pl.pallas_call(
        _coord_gen_kernel,
        out_shape=jax.ShapeDtypeStruct((T * B, 4), jnp.float32),
        in_specs=[smem] + [vmem] * 18,
        out_specs=vmem,
    )(text_len_vec, x_flat, noise, *enc, *dec, params["proj_w"], params["proj_b"])

    # back to batch-first (B, T, 4)
    return jnp.transpose(coords_flat.reshape(T, B, 4), (1, 0, 2))


# ----------------------- pure-JAX reference (for checking) ------------------ #

def _reference_lstm(seq_tm, z, p, T, B, H):
    L = p["b"].shape[0]
    h0 = jnp.tanh(z @ p["w_h0"] + p["b_h0"])
    c0 = jnp.tanh(z @ p["w_c0"] + p["b_c0"])
    seq = seq_tm
    for l in range(L):
        if l == 0:
            w_ih, w_hh = p["w_ih0"], p["w_wave"][0:H]
        else:
            w_ih = p["w_wave"][(2 * l - 1) * H:2 * l * H]
            w_hh = p["w_wave"][2 * l * H:(2 * l + 1) * H]
        h = h0[:, l * H:(l + 1) * H]
        c = c0[:, l * H:(l + 1) * H]
        outs = []
        for t in range(T):
            g = seq[t * B:(t + 1) * B] @ w_ih + h @ w_hh + p["b"][l]
            i_g = jax.nn.sigmoid(g[:, :H])
            f_g = jax.nn.sigmoid(g[:, H:2 * H])
            g_g = jnp.tanh(g[:, 2 * H:3 * H])
            o_g = jax.nn.sigmoid(g[:, 3 * H:])
            c = f_g * c + i_g * g_g
            h = o_g * jnp.tanh(c)
            outs.append(h)
        seq = jnp.concatenate(outs, axis=0)
    return seq


def coord_generator_reference(params, cond_feat, noise, text_len_):
    B, T, H = cond_feat.shape
    x = jnp.transpose(cond_feat, (1, 0, 2)).reshape(T * B, H)
    mid = _reference_lstm(x, noise, params["enc"], T, B, H)
    rows = jnp.clip(text_len_[:, 0, 0].astype(jnp.int32), 0, T - 1) * B + jnp.arange(B)
    mid_last = jnp.take(mid, rows, axis=0)
    out = _reference_lstm(mid, mid_last, params["dec"], T, B, H)
    coords = jax.nn.sigmoid(out @ params["proj_w"] + params["proj_b"])
    return jnp.transpose(coords.reshape(T, B, 4), (1, 0, 2))


# --------------------------- deterministic params --------------------------- #

def init_custom_lstm(key, hidden, layers, latent_dim):
    ks = jax.random.split(key, 6)
    s = 1.0 / float(jnp.sqrt(hidden))
    u = lambda k, shape: jax.random.uniform(k, shape, jnp.float32, -s, s)
    w_ih = u(ks[0], (layers, hidden, 4 * hidden))       # per-layer, pre-transposed
    w_hh = u(ks[1], (layers, hidden, 4 * hidden))
    # Stacked wavefront recurrence weight: [W_hh_0; W_ih_1; W_hh_1; ...]
    blocks = [w_hh[0]]
    for l in range(1, layers):
        blocks += [w_ih[l], w_hh[l]]
    return {
        "w_ih0": w_ih[0],                               # (H, 4H)
        "w_wave": jnp.concatenate(blocks, axis=0),      # ((2L-1)*H, 4H)
        "b":    u(ks[2], (layers, 1, 4 * hidden)),      # b_ih + b_hh combined
        "w_h0": u(ks[3], (latent_dim, layers * hidden)),
        "b_h0": u(ks[4], (1, layers * hidden)),
        "w_c0": u(ks[5], (latent_dim, layers * hidden)),
        "b_c0": jnp.zeros((1, layers * hidden), jnp.float32),
    }


if __name__ == "__main__":
    hidden_size, num_hidden_layers, latent_dim = 32, 2, 16
    B, T = 2, 8

    key = jax.random.PRNGKey(0)
    k_enc, k_dec, k_proj, k_x, k_z = jax.random.split(key, 5)

    s = 1.0 / float(jnp.sqrt(hidden_size))
    params = {
        "enc": init_custom_lstm(k_enc, hidden_size, num_hidden_layers, latent_dim),
        "dec": init_custom_lstm(k_dec, hidden_size, num_hidden_layers, hidden_size),
        "proj_w": jax.random.uniform(k_proj, (hidden_size, 4), jnp.float32, -s, s),
        "proj_b": jnp.zeros((1, 4), jnp.float32),
    }

    cond_feat = jax.random.normal(k_x, (B, T, hidden_size), jnp.float32)
    noise = jax.random.normal(k_z, (B, latent_dim), jnp.float32)
    # same semantics as torch.gather along dim=1 with a (B, 1, H) index
    text_len_ = jnp.broadcast_to(
        jnp.array([[5], [7]], jnp.int32)[:, :, None], (B, 1, hidden_size))

    coords_pred = jax.jit(coord_generator_forward)(params, cond_feat, noise, text_len_)
    coords_pred = jax.block_until_ready(coords_pred)

    coords_ref = jax.jit(coord_generator_reference)(params, cond_feat, noise, text_len_)
    coords_ref = jax.block_until_ready(coords_ref)

    assert coords_pred.shape == (B, T, 4)
    assert coords_pred.dtype == jnp.float32
    assert bool(jnp.all((coords_pred >= 0.0) & (coords_pred <= 1.0)))
    assert bool(jnp.allclose(coords_pred, coords_ref, atol=1e-4, rtol=1e-4)), (
        "Pallas kernel diverged from the pure-JAX reference")
    print("KERNEL_OK")
</pallas_src>

<mosaic_0001>
module attributes {stable_mosaic.version = 11 : i64} {
  func.func @_coord_gen_kernel(%arg0: memref<2xi32, #tpu.memory_space<smem>>, %arg1: memref<16x32xf32, #tpu.memory_space<vmem>>, %arg2: memref<2x16xf32, #tpu.memory_space<vmem>>, %arg3: memref<32x128xf32, #tpu.memory_space<vmem>>, %arg4: memref<96x128xf32, #tpu.memory_space<vmem>>, %arg5: memref<2x1x128xf32, #tpu.memory_space<vmem>>, %arg6: memref<16x64xf32, #tpu.memory_space<vmem>>, %arg7: memref<1x64xf32, #tpu.memory_space<vmem>>, %arg8: memref<16x64xf32, #tpu.memory_space<vmem>>, %arg9: memref<1x64xf32, #tpu.memory_space<vmem>>, %arg10: memref<32x128xf32, #tpu.memory_space<vmem>>, %arg11: memref<96x128xf32, #tpu.memory_space<vmem>>, %arg12: memref<2x1x128xf32, #tpu.memory_space<vmem>>, %arg13: memref<32x64xf32, #tpu.memory_space<vmem>>, %arg14: memref<1x64xf32, #tpu.memory_space<vmem>>, %arg15: memref<32x64xf32, #tpu.memory_space<vmem>>, %arg16: memref<1x64xf32, #tpu.memory_space<vmem>>, %arg17: memref<32x4xf32, #tpu.memory_space<vmem>>, %arg18: memref<1x4xf32, #tpu.memory_space<vmem>>, %arg19: memref<16x4xf32, #tpu.memory_space<vmem>>) attributes {dimension_semantics = [], scalar_prefetch = 0 : i64, scratch_operands = 0 : i64, tpu.core_type = #tpu.core_type<tc>} {
    %c0 = arith.constant 0 : index
    %c0_0 = arith.constant 0 : index
    %0 = vector.load %arg1[%c0, %c0_0] : memref<16x32xf32, #tpu.memory_space<vmem>>, vector<16x32xf32>
    %c0_1 = arith.constant 0 : index
    %c0_2 = arith.constant 0 : index
    %1 = vector.load %arg2[%c0_1, %c0_2] : memref<2x16xf32, #tpu.memory_space<vmem>>, vector<2x16xf32>
    %c0_3 = arith.constant 0 : index
    %c0_4 = arith.constant 0 : index
    %2 = vector.load %arg6[%c0_3, %c0_4] : memref<16x64xf32, #tpu.memory_space<vmem>>, vector<16x64xf32>
    %cst = arith.constant dense<0.000000e+00> : vector<2x64xf32>
    %3 = tpu.matmul %1, %2, %cst {dimension_numbers = #tpu.dot_dimension_numbers<[1], [0], [0], [1], [0, 0, 1, 1], [], []>} : vector<2x16xf32>, vector<16x64xf32>, vector<2x64xf32> -> vector<2x64xf32>
    %c0_5 = arith.constant 0 : index
    %c0_6 = arith.constant 0 : index
    %4 = vector.load %arg7[%c0_5, %c0_6] : memref<1x64xf32, #tpu.memory_space<vmem>>, vector<1x64xf32>
    %5 = vector.broadcast %4 : vector<1x64xf32> to vector<2x64xf32>
    %6 = arith.addf %3, %5 : vector<2x64xf32>
    %7 = math.tanh %6 : vector<2x64xf32>
    %c0_7 = arith.constant 0 : index
    %c0_8 = arith.constant 0 : index
    %8 = vector.load %arg8[%c0_7, %c0_8] : memref<16x64xf32, #tpu.memory_space<vmem>>, vector<16x64xf32>
    %cst_9 = arith.constant dense<0.000000e+00> : vector<2x64xf32>
    %9 = tpu.matmul %1, %8, %cst_9 {dimension_numbers = #tpu.dot_dimension_numbers<[1], [0], [0], [1], [0, 0, 1, 1], [], []>} : vector<2x16xf32>, vector<16x64xf32>, vector<2x64xf32> -> vector<2x64xf32>
    %c0_10 = arith.constant 0 : index
    %c0_11 = arith.constant 0 : index
    %10 = vector.load %arg9[%c0_10, %c0_11] : memref<1x64xf32, #tpu.memory_space<vmem>>, vector<1x64xf32>
    %11 = vector.broadcast %10 : vector<1x64xf32> to vector<2x64xf32>
    %12 = arith.addf %9, %11 : vector<2x64xf32>
    %13 = math.tanh %12 : vector<2x64xf32>
    %14 = vector.extract_strided_slice %7 {offsets = [0, 0], sizes = [2, 32], strides = [1, 1]} : vector<2x64xf32> to vector<2x32xf32>
    %15 = vector.extract_strided_slice %7 {offsets = [0, 32], sizes = [2, 32], strides = [1, 1]} : vector<2x64xf32> to vector<2x32xf32>
    %16 = vector.extract_strided_slice %13 {offsets = [0, 0], sizes = [2, 32], strides = [1, 1]} : vector<2x64xf32> to vector<2x32xf32>
    %17 = vector.extract_strided_slice %13 {offsets = [0, 32], sizes = [2, 32], strides = [1, 1]} : vector<2x64xf32> to vector<2x32xf32>
    %c0_12 = arith.constant 0 : index
    %c0_13 = arith.constant 0 : index
    %18 = vector.load %arg3[%c0_12, %c0_13] : memref<32x128xf32, #tpu.memory_space<vmem>>, vector<32x128xf32>
    %cst_14 = arith.constant dense<0.000000e+00> : vector<16x128xf32>
    %19 = tpu.matmul %0, %18, %cst_14 {dimension_numbers = #tpu.dot_dimension_numbers<[1], [0], [0], [1], [0, 0, 1, 1], [], []>} : vector<16x32xf32>, vector<32x128xf32>, vector<16x128xf32> -> vector<16x128xf32>
    %c0_15 = arith.constant 0 : index
    %c0_16 = arith.constant 0 : index
    %c0_17 = arith.constant 0 : index
    %20 = vector.load %arg5[%c0_15, %c0_16, %c0_17] : memref<2x1x128xf32, #tpu.memory_space<vmem>>, vector<1x1x128xf32>
    %21 = vector.shape_cast %20 : vector<1x1x128xf32> to vector<1x128xf32>
    %22 = vector.broadcast %21 : vector<1x128xf32> to vector<16x128xf32>
    %23 = arith.addf %19, %22 : vector<16x128xf32>
    %c0_18 = arith.constant 0 : index
    %c0_19 = arith.constant 0 : index
    %24 = vector.load %arg4[%c0_18, %c0_19] : memref<96x128xf32, #tpu.memory_space<vmem>>, vector<96x128xf32>
    %c1 = arith.constant 1 : index
    %c0_20 = arith.constant 0 : index
    %c0_21 = arith.constant 0 : index
    %25 = vector.load %arg5[%c1, %c0_20, %c0_21] : memref<2x1x128xf32, #tpu.memory_space<vmem>>, vector<1x1x128xf32>
    %26 = vector.shape_cast %25 : vector<1x1x128xf32> to vector<1x128xf32>
    %27 = vector.shape_cast %26 : vector<1x128xf32> to vector<1x128xf32>
    %28 = vector.broadcast %27 : vector<1x128xf32> to vector<2x128xf32>
    %cst_22 = arith.constant 0.000000e+00 : f32
    %29 = vector.broadcast %cst_22 : f32 to vector<2x32xf32>
    %30 = tpu.iota {dimensions = array<i32: 1>} : vector<1x128xi32>
    %c64_i32 = arith.constant 64 : i32
    %31 = vector.broadcast %c64_i32 : i32 to vector<1x128xi32>
    %32 = arith.cmpi sge, %30, %31 : vector<1x128xi32>
    %c96_i32 = arith.constant 96 : i32
    %33 = vector.broadcast %c96_i32 : i32 to vector<1x128xi32>
    %34 = arith.cmpi slt, %30, %33 : vector<1x128xi32>
    %35 = arith.andi %32, %34 : vector<1x128xi1>
    %36 = vector.extract_strided_slice %23 {offsets = [0, 0], sizes = [2, 128], strides = [1, 1]} : vector<16x128xf32> to vector<2x128xf32>
    %37 = tpu.concatenate %14, %29, %29 in 1 : vector<2x32xf32>, vector<2x32xf32>, vector<2x32xf32> -> vector<2x96xf32>
    %cst_23 = arith.constant dense<0.000000e+00> : vector<2x128xf32>
    %38 = tpu.matmul %37, %24, %cst_23 {dimension_numbers = #tpu.dot_dimension_numbers<[1], [0], [0], [1], [0, 0, 1, 1], [], []>} : vector<2x96xf32>, vector<96x128xf32>, vector<2x128xf32> -> vector<2x128xf32>
    %39 = arith.addf %38, %36 : vector<2x128xf32>
    %cst_24 = arith.constant 2.000000e+00 : f32
    %40 = vector.broadcast %cst_24 : f32 to vector<2x128xf32>
    %41 = arith.mulf %39, %40 : vector<2x128xf32>
    %42 = vector.shape_cast %35 : vector<1x128xi1> to vector<1x128xi1>
    %43 = vector.broadcast %42 : vector<1x128xi1> to vector<2x128xi1>
    %44 = arith.select %43, %41, %39 : vector<2x128xi1>, vector<2x128xf32>
    %45 = arith.negf %44 : vector<2x128xf32>
    %46 = math.exp %45 : vector<2x128xf32>
    %cst_25 = arith.constant 1.000000e+00 : f32
    %47 = vector.broadcast %cst_25 : f32 to vector<2x128xf32>
    %48 = arith.addf %47, %46 : vector<2x128xf32>
    %49 = arith.divf %47, %48 : vector<2x128xf32>
    %50 = vector.extract_strided_slice %49 {offsets = [0, 0], sizes = [2, 32], strides = [1, 1]} : vector<2x128xf32> to vector<2x32xf32>
    %51 = vector.extract_strided_slice %49 {offsets = [0, 32], sizes = [2, 32], strides = [1, 1]} : vector<2x128xf32> to vector<2x32xf32>
    %52 = vector.extract_strided_slice %49 {offsets = [0, 64], sizes = [2, 32], strides = [1, 1]} : vector<2x128xf32> to vector<2x32xf32>
    %cst_26 = arith.constant 2.000000e+00 : f32
    %53 = vector.broadcast %cst_26 : f32 to vector<2x32xf32>
    %54 = arith.mulf %53, %52 : vector<2x32xf32>
    %cst_27 = arith.constant 1.000000e+00 : f32
    %55 = vector.broadcast %cst_27 : f32 to vector<2x32xf32>
    %56 = arith.subf %54, %55 : vector<2x32xf32>
    %57 = vector.extract_strided_slice %49 {offsets = [0, 96], sizes = [2, 32], strides = [1, 1]} : vector<2x128xf32> to vector<2x32xf32>
    %58 = arith.mulf %51, %16 : vector<2x32xf32>
    %59 = arith.mulf %50, %56 : vector<2x32xf32>
    %60 = arith.addf %58, %59 : vector<2x32xf32>
    %61 = math.tanh %60 : vector<2x32xf32>
    %62 = arith.mulf %57, %61 : vector<2x32xf32>
    %63 = vector.extract_strided_slice %23 {offsets = [2, 0], sizes = [2, 128], strides = [1, 1]} : vector<16x128xf32> to vector<2x128xf32>
    %64 = tpu.concatenate %62, %29, %29 in 1 : vector<2x32xf32>, vector<2x32xf32>, vector<2x32xf32> -> vector<2x96xf32>
    %65 = tpu.concatenate %29, %62, %15 in 1 : vector<2x32xf32>, vector<2x32xf32>, vector<2x32xf32> -> vector<2x96xf32>
    %66 = tpu.concatenate %64, %65 in 0 : vector<2x96xf32>, vector<2x96xf32> -> vector<4x96xf32>
    %67 = tpu.concatenate %63, %28 in 0 : vector<2x128xf32>, vector<2x128xf32> -> vector<4x128xf32>
    %cst_28 = arith.constant dense<0.000000e+00> : vector<4x128xf32>
    %68 = tpu.matmul %66, %24, %cst_28 {dimension_numbers = #tpu.dot_dimension_numbers<[1], [0], [0], [1], [0, 0, 1, 1], [], []>} : vector<4x96xf32>, vector<96x128xf32>, vector<4x128xf32> -> vector<4x128xf32>
    %69 = arith.addf %68, %67 : vector<4x128xf32>
    %70 = tpu.concatenate %60, %17 in 0 : vector<2x32xf32>, vector<2x32xf32> -> vector<4x32xf32>
    %cst_29 = arith.constant 2.000000e+00 : f32
    %71 = vector.broadcast %cst_29 : f32 to vector<4x128xf32>
    %72 = arith.mulf %69, %71 : vector<4x128xf32>
    %73 = vector.shape_cast %35 : vector<1x128xi1> to vector<1x128xi1>
    %74 = vector.broadcast %73 : vector<1x128xi1> to vector<4x128xi1>
    %75 = arith.select %74, %72, %69 : vector<4x128xi1>, vector<4x128xf32>
    %76 = arith.negf %75 : vector<4x128xf32>
    %77 = math.exp %76 : vector<4x128xf32>
    %cst_30 = arith.constant 1.000000e+00 : f32
    %78 = vector.broadcast %cst_30 : f32 to vector<4x128xf32>
    %79 = arith.addf %78, %77 : vector<4x128xf32>
    %80 = arith.divf %78, %79 : vector<4x128xf32>
    %81 = vector.extract_strided_slice %80 {offsets = [0, 0], sizes = [4, 32], strides = [1, 1]} : vector<4x128xf32> to vector<4x32xf32>
    %82 = vector.extract_strided_slice %80 {offsets = [0, 32], sizes = [4, 32], strides = [1, 1]} : vector<4x128xf32> to vector<4x32xf32>
    %83 = vector.extract_strided_slice %80 {offsets = [0, 64], sizes = [4, 32], strides = [1, 1]} : vector<4x128xf32> to vector<4x32xf32>
    %cst_31 = arith.constant 2.000000e+00 : f32
    %84 = vector.broadcast %cst_31 : f32 to vector<4x32xf32>
    %85 = arith.mulf %84, %83 : vector<4x32xf32>
    %cst_32 = arith.constant 1.000000e+00 : f32
    %86 = vector.broadcast %cst_32 : f32 to vector<4x32xf32>
    %87 = arith.subf %85, %86 : vector<4x32xf32>
    %88 = vector.extract_strided_slice %80 {offsets = [0, 96], sizes = [4, 32], strides = [1, 1]} : vector<4x128xf32> to vector<4x32xf32>
    %89 = arith.mulf %82, %70 : vector<4x32xf32>
    %90 = arith.mulf %81, %87 : vector<4x32xf32>
    %91 = arith.addf %89, %90 : vector<4x32xf32>
    %92 = math.tanh %91 : vector<4x32xf32>
    %93 = arith.mulf %88, %92 : vector<4x32xf32>
    %94 = vector.extract_strided_slice %93 {offsets = [0, 0], sizes = [2, 32], strides = [1, 1]} : vector<4x32xf32> to vector<2x32xf32>
    %95 = vector.extract_strided_slice %91 {offsets = [0, 0], sizes = [2, 32], strides = [1, 1]} : vector<4x32xf32> to vector<2x32xf32>
    %96 = vector.extract_strided_slice %93 {offsets = [2, 0], sizes = [2, 32], strides = [1, 1]} : vector<4x32xf32> to vector<2x32xf32>
    %97 = vector.extract_strided_slice %91 {offsets = [2, 0], sizes = [2, 32], strides = [1, 1]} : vector<4x32xf32> to vector<2x32xf32>
    %98 = vector.extract_strided_slice %23 {offsets = [4, 0], sizes = [2, 128], strides = [1, 1]} : vector<16x128xf32> to vector<2x128xf32>
    %99 = tpu.concatenate %94, %29, %29 in 1 : vector<2x32xf32>, vector<2x32xf32>, vector<2x32xf32> -> vector<2x96xf32>
    %100 = tpu.concatenate %29, %94, %96 in 1 : vector<2x32xf32>, vector<2x32xf32>, vector<2x32xf32> -> vector<2x96xf32>
    %101 = tpu.concatenate %99, %100 in 0 : vector<2x96xf32>, vector<2x96xf32> -> vector<4x96xf32>
    %102 = tpu.concatenate %98, %28 in 0 : vector<2x128xf32>, vector<2x128xf32> -> vector<4x128xf32>
    %cst_33 = arith.constant dense<0.000000e+00> : vector<4x128xf32>
    %103 = tpu.matmul %101, %24, %cst_33 {dimension_numbers = #tpu.dot_dimension_numbers<[1], [0], [0], [1], [0, 0, 1, 1], [], []>} : vector<4x96xf32>, vector<96x128xf32>, vector<4x128xf32> -> vector<4x128xf32>
    %104 = arith.addf %103, %102 : vector<4x128xf32>
    %105 = tpu.concatenate %95, %97 in 0 : vector<2x32xf32>, vector<2x32xf32> -> vector<4x32xf32>
    %cst_34 = arith.constant 2.000000e+00 : f32
    %106 = vector.broadcast %cst_34 : f32 to vector<4x128xf32>
    %107 = arith.mulf %104, %106 : vector<4x128xf32>
    %108 = vector.shape_cast %35 : vector<1x128xi1> to vector<1x128xi1>
    %109 = vector.broadcast %108 : vector<1x128xi1> to vector<4x128xi1>
    %110 = arith.select %109, %107, %104 : vector<4x128xi1>, vector<4x128xf32>
    %111 = arith.negf %110 : vector<4x128xf32>
    %112 = math.exp %111 : vector<4x128xf32>
    %cst_35 = arith.constant 1.000000e+00 : f32
    %113 = vector.broadcast %cst_35 : f32 to vector<4x128xf32>
    %114 = arith.addf %113, %112 : vector<4x128xf32>
    %115 = arith.divf %113, %114 : vector<4x128xf32>
    %116 = vector.extract_strided_slice %115 {offsets = [0, 0], sizes = [4, 32], strides = [1, 1]} : vector<4x128xf32> to vector<4x32xf32>
    %117 = vector.extract_strided_slice %115 {offsets = [0, 32], sizes = [4, 32], strides = [1, 1]} : vector<4x128xf32> to vector<4x32xf32>
    %118 = vector.extract_strided_slice %115 {offsets = [0, 64], sizes = [4, 32], strides = [1, 1]} : vector<4x128xf32> to vector<4x32xf32>
    %cst_36 = arith.constant 2.000000e+00 : f32
    %119 = vector.broadcast %cst_36 : f32 to vector<4x32xf32>
    %120 = arith.mulf %119, %118 : vector<4x32xf32>
    %cst_37 = arith.constant 1.000000e+00 : f32
    %121 = vector.broadcast %cst_37 : f32 to vector<4x32xf32>
    %122 = arith.subf %120, %121 : vector<4x32xf32>
    %123 = vector.extract_strided_slice %115 {offsets = [0, 96], sizes = [4, 32], strides = [1, 1]} : vector<4x128xf32> to vector<4x32xf32>
    %124 = arith.mulf %117, %105 : vector<4x32xf32>
    %125 = arith.mulf %116, %122 : vector<4x32xf32>
    %126 = arith.addf %124, %125 : vector<4x32xf32>
    %127 = math.tanh %126 : vector<4x32xf32>
    %128 = arith.mulf %123, %127 : vector<4x32xf32>
    %129 = vector.extract_strided_slice %128 {offsets = [0, 0], sizes = [2, 32], strides = [1, 1]} : vector<4x32xf32> to vector<2x32xf32>
    %130 = vector.extract_strided_slice %126 {offsets = [0, 0], sizes = [2, 32], strides = [1, 1]} : vector<4x32xf32> to vector<2x32xf32>
    %131 = vector.extract_strided_slice %128 {offsets = [2, 0], sizes = [2, 32], strides = [1, 1]} : vector<4x32xf32> to vector<2x32xf32>
    %132 = vector.extract_strided_slice %126 {offsets = [2, 0], sizes = [2, 32], strides = [1, 1]} : vector<4x32xf32> to vector<2x32xf32>
    %133 = vector.extract_strided_slice %23 {offsets = [6, 0], sizes = [2, 128], strides = [1, 1]} : vector<16x128xf32> to vector<2x128xf32>
    %134 = tpu.concatenate %129, %29, %29 in 1 : vector<2x32xf32>, vector<2x32xf32>, vector<2x32xf32> -> vector<2x96xf32>
    %135 = tpu.concatenate %29, %129, %131 in 1 : vector<2x32xf32>, vector<2x32xf32>, vector<2x32xf32> -> vector<2x96xf32>
    %136 = tpu.concatenate %134, %135 in 0 : vector<2x96xf32>, vector<2x96xf32> -> vector<4x96xf32>
    %137 = tpu.concatenate %133, %28 in 0 : vector<2x128xf32>, vector<2x128xf32> -> vector<4x128xf32>
    %cst_38 = arith.constant dense<0.000000e+00> : vector<4x128xf32>
    %138 = tpu.matmul %136, %24, %cst_38 {dimension_numbers = #tpu.dot_dimension_numbers<[1], [0], [0], [1], [0, 0, 1, 1], [], []>} : vector<4x96xf32>, vector<96x128xf32>, vector<4x128xf32> -> vector<4x128xf32>
    %139 = arith.addf %138, %137 : vector<4x128xf32>
    %140 = tpu.concatenate %130, %132 in 0 : vector<2x32xf32>, vector<2x32xf32> -> vector<4x32xf32>
    %cst_39 = arith.constant 2.000000e+00 : f32
    %141 = vector.broadcast %cst_39 : f32 to vector<4x128xf32>
    %142 = arith.mulf %139, %141 : vector<4x128xf32>
    %143 = vector.shape_cast %35 : vector<1x128xi1> to vector<1x128xi1>
    %144 = vector.broadcast %143 : vector<1x128xi1> to vector<4x128xi1>
    %145 = arith.select %144, %142, %139 : vector<4x128xi1>, vector<4x128xf32>
    %146 = arith.negf %145 : vector<4x128xf32>
    %147 = math.exp %146 : vector<4x128xf32>
    %cst_40 = arith.constant 1.000000e+00 : f32
    %148 = vector.broadcast %cst_40 : f32 to vector<4x128xf32>
    %149 = arith.addf %148, %147 : vector<4x128xf32>
    %150 = arith.divf %148, %149 : vector<4x128xf32>
    %151 = vector.extract_strided_slice %150 {offsets = [0, 0], sizes = [4, 32], strides = [1, 1]} : vector<4x128xf32> to vector<4x32xf32>
    %152 = vector.extract_strided_slice %150 {offsets = [0, 32], sizes = [4, 32], strides = [1, 1]} : vector<4x128xf32> to vector<4x32xf32>
    %153 = vector.extract_strided_slice %150 {offsets = [0, 64], sizes = [4, 32], strides = [1, 1]} : vector<4x128xf32> to vector<4x32xf32>
    %cst_41 = arith.constant 2.000000e+00 : f32
    %154 = vector.broadcast %cst_41 : f32 to vector<4x32xf32>
    %155 = arith.mulf %154, %153 : vector<4x32xf32>
    %cst_42 = arith.constant 1.000000e+00 : f32
    %156 = vector.broadcast %cst_42 : f32 to vector<4x32xf32>
    %157 = arith.subf %155, %156 : vector<4x32xf32>
    %158 = vector.extract_strided_slice %150 {offsets = [0, 96], sizes = [4, 32], strides = [1, 1]} : vector<4x128xf32> to vector<4x32xf32>
    %159 = arith.mulf %152, %140 : vector<4x32xf32>
    %160 = arith.mulf %151, %157 : vector<4x32xf32>
    %161 = arith.addf %159, %160 : vector<4x32xf32>
    %162 = math.tanh %161 : vector<4x32xf32>
    %163 = arith.mulf %158, %162 : vector<4x32xf32>
    %164 = vector.extract_strided_slice %163 {offsets = [0, 0], sizes = [2, 32], strides = [1, 1]} : vector<4x32xf32> to vector<2x32xf32>
    %165 = vector.extract_strided_slice %161 {offsets = [0, 0], sizes = [2, 32], strides = [1, 1]} : vector<4x32xf32> to vector<2x32xf32>
    %166 = vector.extract_strided_slice %163 {offsets = [2, 0], sizes = [2, 32], strides = [1, 1]} : vector<4x32xf32> to vector<2x32xf32>
    %167 = vector.extract_strided_slice %161 {offsets = [2, 0], sizes = [2, 32], strides = [1, 1]} : vector<4x32xf32> to vector<2x32xf32>
    %168 = vector.extract_strided_slice %23 {offsets = [8, 0], sizes = [2, 128], strides = [1, 1]} : vector<16x128xf32> to vector<2x128xf32>
    %169 = tpu.concatenate %164, %29, %29 in 1 : vector<2x32xf32>, vector<2x32xf32>, vector<2x32xf32> -> vector<2x96xf32>
    %170 = tpu.concatenate %29, %164, %166 in 1 : vector<2x32xf32>, vector<2x32xf32>, vector<2x32xf32> -> vector<2x96xf32>
    %171 = tpu.concatenate %169, %170 in 0 : vector<2x96xf32>, vector<2x96xf32> -> vector<4x96xf32>
    %172 = tpu.concatenate %168, %28 in 0 : vector<2x128xf32>, vector<2x128xf32> -> vector<4x128xf32>
    %cst_43 = arith.constant dense<0.000000e+00> : vector<4x128xf32>
    %173 = tpu.matmul %171, %24, %cst_43 {dimension_numbers = #tpu.dot_dimension_numbers<[1], [0], [0], [1], [0, 0, 1, 1], [], []>} : vector<4x96xf32>, vector<96x128xf32>, vector<4x128xf32> -> vector<4x128xf32>
    %174 = arith.addf %173, %172 : vector<4x128xf32>
    %175 = tpu.concatenate %165, %167 in 0 : vector<2x32xf32>, vector<2x32xf32> -> vector<4x32xf32>
    %cst_44 = arith.constant 2.000000e+00 : f32
    %176 = vector.broadcast %cst_44 : f32 to vector<4x128xf32>
    %177 = arith.mulf %174, %176 : vector<4x128xf32>
    %178 = vector.shape_cast %35 : vector<1x128xi1> to vector<1x128xi1>
    %179 = vector.broadcast %178 : vector<1x128xi1> to vector<4x128xi1>
    %180 = arith.select %179, %177, %174 : vector<4x128xi1>, vector<4x128xf32>
    %181 = arith.negf %180 : vector<4x128xf32>
    %182 = math.exp %181 : vector<4x128xf32>
    %cst_45 = arith.constant 1.000000e+00 : f32
    %183 = vector.broadcast %cst_45 : f32 to vector<4x128xf32>
    %184 = arith.addf %183, %182 : vector<4x128xf32>
    %185 = arith.divf %183, %184 : vector<4x128xf32>
    %186 = vector.extract_strided_slice %185 {offsets = [0, 0], sizes = [4, 32], strides = [1, 1]} : vector<4x128xf32> to vector<4x32xf32>
    %187 = vector.extract_strided_slice %185 {offsets = [0, 32], sizes = [4, 32], strides = [1, 1]} : vector<4x128xf32> to vector<4x32xf32>
    %188 = vector.extract_strided_slice %185 {offsets = [0, 64], sizes = [4, 32], strides = [1, 1]} : vector<4x128xf32> to vector<4x32xf32>
    %cst_46 = arith.constant 2.000000e+00 : f32
    %189 = vector.broadcast %cst_46 : f32 to vector<4x32xf32>
    %190 = arith.mulf %189, %188 : vector<4x32xf32>
    %cst_47 = arith.constant 1.000000e+00 : f32
    %191 = vector.broadcast %cst_47 : f32 to vector<4x32xf32>
    %192 = arith.subf %190, %191 : vector<4x32xf32>
    %193 = vector.extract_strided_slice %185 {offsets = [0, 96], sizes = [4, 32], strides = [1, 1]} : vector<4x128xf32> to vector<4x32xf32>
    %194 = arith.mulf %187, %175 : vector<4x32xf32>
    %195 = arith.mulf %186, %192 : vector<4x32xf32>
    %196 = arith.addf %194, %195 : vector<4x32xf32>
    %197 = math.tanh %196 : vector<4x32xf32>
    %198 = arith.mulf %193, %197 : vector<4x32xf32>
    %199 = vector.extract_strided_slice %198 {offsets = [0, 0], sizes = [2, 32], strides = [1, 1]} : vector<4x32xf32> to vector<2x32xf32>
    %200 = vector.extract_strided_slice %196 {offsets = [0, 0], sizes = [2, 32], strides = [1, 1]} : vector<4x32xf32> to vector<2x32xf32>
    %201 = vector.extract_strided_slice %198 {offsets = [2, 0], sizes = [2, 32], strides = [1, 1]} : vector<4x32xf32> to vector<2x32xf32>
    %202 = vector.extract_strided_slice %196 {offsets = [2, 0], sizes = [2, 32], strides = [1, 1]} : vector<4x32xf32> to vector<2x32xf32>
    %203 = vector.extract_strided_slice %23 {offsets = [10, 0], sizes = [2, 128], strides = [1, 1]} : vector<16x128xf32> to vector<2x128xf32>
    %204 = tpu.concatenate %199, %29, %29 in 1 : vector<2x32xf32>, vector<2x32xf32>, vector<2x32xf32> -> vector<2x96xf32>
    %205 = tpu.concatenate %29, %199, %201 in 1 : vector<2x32xf32>, vector<2x32xf32>, vector<2x32xf32> -> vector<2x96xf32>
    %206 = tpu.concatenate %204, %205 in 0 : vector<2x96xf32>, vector<2x96xf32> -> vector<4x96xf32>
    %207 = tpu.concatenate %203, %28 in 0 : vector<2x128xf32>, vector<2x128xf32> -> vector<4x128xf32>
    %cst_48 = arith.constant dense<0.000000e+00> : vector<4x128xf32>
    %208 = tpu.matmul %206, %24, %cst_48 {dimension_numbers = #tpu.dot_dimension_numbers<[1], [0], [0], [1], [0, 0, 1, 1], [], []>} : vector<4x96xf32>, vector<96x128xf32>, vector<4x128xf32> -> vector<4x128xf32>
    %209 = arith.addf %208, %207 : vector<4x128xf32>
    %210 = tpu.concatenate %200, %202 in 0 : vector<2x32xf32>, vector<2x32xf32> -> vector<4x32xf32>
    %cst_49 = arith.constant 2.000000e+00 : f32
    %211 = vector.broadcast %cst_49 : f32 to vector<4x128xf32>
    %212 = arith.mulf %209, %211 : vector<4x128xf32>
    %213 = vector.shape_cast %35 : vector<1x128xi1> to vector<1x128xi1>
    %214 = vector.broadcast %213 : vector<1x128xi1> to vector<4x128xi1>
    %215 = arith.select %214, %212, %209 : vector<4x128xi1>, vector<4x128xf32>
    %216 = arith.negf %215 : vector<4x128xf32>
    %217 = math.exp %216 : vector<4x128xf32>
    %cst_50 = arith.constant 1.000000e+00 : f32
    %218 = vector.broadcast %cst_50 : f32 to vector<4x128xf32>
    %219 = arith.addf %218, %217 : vector<4x128xf32>
    %220 = arith.divf %218, %219 : vector<4x128xf32>
    %221 = vector.extract_strided_slice %220 {offsets = [0, 0], sizes = [4, 32], strides = [1, 1]} : vector<4x128xf32> to vector<4x32xf32>
    %222 = vector.extract_strided_slice %220 {offsets = [0, 32], sizes = [4, 32], strides = [1, 1]} : vector<4x128xf32> to vector<4x32xf32>
    %223 = vector.extract_strided_slice %220 {offsets = [0, 64], sizes = [4, 32], strides = [1, 1]} : vector<4x128xf32> to vector<4x32xf32>
    %cst_51 = arith.constant 2.000000e+00 : f32
    %224 = vector.broadcast %cst_51 : f32 to vector<4x32xf32>
    %225 = arith.mulf %224, %223 : vector<4x32xf32>
    %cst_52 = arith.constant 1.000000e+00 : f32
    %226 = vector.broadcast %cst_52 : f32 to vector<4x32xf32>
    %227 = arith.subf %225, %226 : vector<4x32xf32>
    %228 = vector.extract_strided_slice %220 {offsets = [0, 96], sizes = [4, 32], strides = [1, 1]} : vector<4x128xf32> to vector<4x32xf32>
    %229 = arith.mulf %222, %210 : vector<4x32xf32>
    %230 = arith.mulf %221, %227 : vector<4x32xf32>
    %231 = arith.addf %229, %230 : vector<4x32xf32>
    %232 = math.tanh %231 : vector<4x32xf32>
    %233 = arith.mulf %228, %232 : vector<4x32xf32>
    %234 = vector.extract_strided_slice %233 {offsets = [0, 0], sizes = [2, 32], strides = [1, 1]} : vector<4x32xf32> to vector<2x32xf32>
    %235 = vector.extract_strided_slice %231 {offsets = [0, 0], sizes = [2, 32], strides = [1, 1]} : vector<4x32xf32> to vector<2x32xf32>
    %236 = vector.extract_strided_slice %233 {offsets = [2, 0], sizes = [2, 32], strides = [1, 1]} : vector<4x32xf32> to vector<2x32xf32>
    %237 = vector.extract_strided_slice %231 {offsets = [2, 0], sizes = [2, 32], strides = [1, 1]} : vector<4x32xf32> to vector<2x32xf32>
    %238 = vector.extract_strided_slice %23 {offsets = [12, 0], sizes = [2, 128], strides = [1, 1]} : vector<16x128xf32> to vector<2x128xf32>
    %239 = tpu.concatenate %234, %29, %29 in 1 : vector<2x32xf32>, vector<2x32xf32>, vector<2x32xf32> -> vector<2x96xf32>
    %240 = tpu.concatenate %29, %234, %236 in 1 : vector<2x32xf32>, vector<2x32xf32>, vector<2x32xf32> -> vector<2x96xf32>
    %241 = tpu.concatenate %239, %240 in 0 : vector<2x96xf32>, vector<2x96xf32> -> vector<4x96xf32>
    %242 = tpu.concatenate %238, %28 in 0 : vector<2x128xf32>, vector<2x128xf32> -> vector<4x128xf32>
    %cst_53 = arith.constant dense<0.000000e+00> : vector<4x128xf32>
    %243 = tpu.matmul %241, %24, %cst_53 {dimension_numbers = #tpu.dot_dimension_numbers<[1], [0], [0], [1], [0, 0, 1, 1], [], []>} : vector<4x96xf32>, vector<96x128xf32>, vector<4x128xf32> -> vector<4x128xf32>
    %244 = arith.addf %243, %242 : vector<4x128xf32>
    %245 = tpu.concatenate %235, %237 in 0 : vector<2x32xf32>, vector<2x32xf32> -> vector<4x32xf32>
    %cst_54 = arith.constant 2.000000e+00 : f32
    %246 = vector.broadcast %cst_54 : f32 to vector<4x128xf32>
    %247 = arith.mulf %244, %246 : vector<4x128xf32>
    %248 = vector.shape_cast %35 : vector<1x128xi1> to vector<1x128xi1>
    %249 = vector.broadcast %248 : vector<1x128xi1> to vector<4x128xi1>
    %250 = arith.select %249, %247, %244 : vector<4x128xi1>, vector<4x128xf32>
    %251 = arith.negf %250 : vector<4x128xf32>
    %252 = math.exp %251 : vector<4x128xf32>
    %cst_55 = arith.constant 1.000000e+00 : f32
    %253 = vector.broadcast %cst_55 : f32 to vector<4x128xf32>
    %254 = arith.addf %253, %252 : vector<4x128xf32>
    %255 = arith.divf %253, %254 : vector<4x128xf32>
    %256 = vector.extract_strided_slice %255 {offsets = [0, 0], sizes = [4, 32], strides = [1, 1]} : vector<4x128xf32> to vector<4x32xf32>
    %257 = vector.extract_strided_slice %255 {offsets = [0, 32], sizes = [4, 32], strides = [1, 1]} : vector<4x128xf32> to vector<4x32xf32>
    %258 = vector.extract_strided_slice %255 {offsets = [0, 64], sizes = [4, 32], strides = [1, 1]} : vector<4x128xf32> to vector<4x32xf32>
    %cst_56 = arith.constant 2.000000e+00 : f32
    %259 = vector.broadcast %cst_56 : f32 to vector<4x32xf32>
    %260 = arith.mulf %259, %258 : vector<4x32xf32>
    %cst_57 = arith.constant 1.000000e+00 : f32
    %261 = vector.broadcast %cst_57 : f32 to vector<4x32xf32>
    %262 = arith.subf %260, %261 : vector<4x32xf32>
    %263 = vector.extract_strided_slice %255 {offsets = [0, 96], sizes = [4, 32], strides = [1, 1]} : vector<4x128xf32> to vector<4x32xf32>
    %264 = arith.mulf %257, %245 : vector<4x32xf32>
    %265 = arith.mulf %256, %262 : vector<4x32xf32>
    %266 = arith.addf %264, %265 : vector<4x32xf32>
    %267 = math.tanh %266 : vector<4x32xf32>
    %268 = arith.mulf %263, %267 : vector<4x32xf32>
    %269 = vector.extract_strided_slice %268 {offsets = [0, 0], sizes = [2, 32], strides = [1, 1]} : vector<4x32xf32> to vector<2x32xf32>
    %270 = vector.extract_strided_slice %266 {offsets = [0, 0], sizes = [2, 32], strides = [1, 1]} : vector<4x32xf32> to vector<2x32xf32>
    %271 = vector.extract_strided_slice %268 {offsets = [2, 0], sizes = [2, 32], strides = [1, 1]} : vector<4x32xf32> to vector<2x32xf32>
    %272 = vector.extract_strided_slice %266 {offsets = [2, 0], sizes = [2, 32], strides = [1, 1]} : vector<4x32xf32> to vector<2x32xf32>
    %273 = vector.extract_strided_slice %23 {offsets = [14, 0], sizes = [2, 128], strides = [1, 1]} : vector<16x128xf32> to vector<2x128xf32>
    %274 = tpu.concatenate %269, %29, %29 in 1 : vector<2x32xf32>, vector<2x32xf32>, vector<2x32xf32> -> vector<2x96xf32>
    %275 = tpu.concatenate %29, %269, %271 in 1 : vector<2x32xf32>, vector<2x32xf32>, vector<2x32xf32> -> vector<2x96xf32>
    %276 = tpu.concatenate %274, %275 in 0 : vector<2x96xf32>, vector<2x96xf32> -> vector<4x96xf32>
    %277 = tpu.concatenate %273, %28 in 0 : vector<2x128xf32>, vector<2x128xf32> -> vector<4x128xf32>
    %cst_58 = arith.constant dense<0.000000e+00> : vector<4x128xf32>
    %278 = tpu.matmul %276, %24, %cst_58 {dimension_numbers = #tpu.dot_dimension_numbers<[1], [0], [0], [1], [0, 0, 1, 1], [], []>} : vector<4x96xf32>, vector<96x128xf32>, vector<4x128xf32> -> vector<4x128xf32>
    %279 = arith.addf %278, %277 : vector<4x128xf32>
    %280 = tpu.concatenate %270, %272 in 0 : vector<2x32xf32>, vector<2x32xf32> -> vector<4x32xf32>
    %cst_59 = arith.constant 2.000000e+00 : f32
    %281 = vector.broadcast %cst_59 : f32 to vector<4x128xf32>
    %282 = arith.mulf %279, %281 : vector<4x128xf32>
    %283 = vector.shape_cast %35 : vector<1x128xi1> to vector<1x128xi1>
    %284 = vector.broadcast %283 : vector<1x128xi1> to vector<4x128xi1>
    %285 = arith.select %284, %282, %279 : vector<4x128xi1>, vector<4x128xf32>
    %286 = arith.negf %285 : vector<4x128xf32>
    %287 = math.exp %286 : vector<4x128xf32>
    %cst_60 = arith.constant 1.000000e+00 : f32
    %288 = vector.broadcast %cst_60 : f32 to vector<4x128xf32>
    %289 = arith.addf %288, %287 : vector<4x128xf32>
    %290 = arith.divf %288, %289 : vector<4x128xf32>
    %291 = vector.extract_strided_slice %290 {offsets = [0, 0], sizes = [4, 32], strides = [1, 1]} : vector<4x128xf32> to vector<4x32xf32>
    %292 = vector.extract_strided_slice %290 {offsets = [0, 32], sizes = [4, 32], strides = [1, 1]} : vector<4x128xf32> to vector<4x32xf32>
    %293 = vector.extract_strided_slice %290 {offsets = [0, 64], sizes = [4, 32], strides = [1, 1]} : vector<4x128xf32> to vector<4x32xf32>
    %cst_61 = arith.constant 2.000000e+00 : f32
    %294 = vector.broadcast %cst_61 : f32 to vector<4x32xf32>
    %295 = arith.mulf %294, %293 : vector<4x32xf32>
    %cst_62 = arith.constant 1.000000e+00 : f32
    %296 = vector.broadcast %cst_62 : f32 to vector<4x32xf32>
    %297 = arith.subf %295, %296 : vector<4x32xf32>
    %298 = vector.extract_strided_slice %290 {offsets = [0, 96], sizes = [4, 32], strides = [1, 1]} : vector<4x128xf32> to vector<4x32xf32>
    %299 = arith.mulf %292, %280 : vector<4x32xf32>
    %300 = arith.mulf %291, %297 : vector<4x32xf32>
    %301 = arith.addf %299, %300 : vector<4x32xf32>
    %302 = math.tanh %301 : vector<4x32xf32>
    %303 = arith.mulf %298, %302 : vector<4x32xf32>
    %304 = vector.extract_strided_slice %303 {offsets = [0, 0], sizes = [2, 32], strides = [1, 1]} : vector<4x32xf32> to vector<2x32xf32>
    %305 = vector.extract_strided_slice %303 {offsets = [2, 0], sizes = [2, 32], strides = [1, 1]} : vector<4x32xf32> to vector<2x32xf32>
    %306 = vector.extract_strided_slice %301 {offsets = [2, 0], sizes = [2, 32], strides = [1, 1]} : vector<4x32xf32> to vector<2x32xf32>
    %307 = tpu.concatenate %29, %304, %305 in 1 : vector<2x32xf32>, vector<2x32xf32>, vector<2x32xf32> -> vector<2x96xf32>
    %cst_63 = arith.constant dense<0.000000e+00> : vector<2x128xf32>
    %308 = tpu.matmul %307, %24, %cst_63 {dimension_numbers = #tpu.dot_dimension_numbers<[1], [0], [0], [1], [0, 0, 1, 1], [], []>} : vector<2x96xf32>, vector<96x128xf32>, vector<2x128xf32> -> vector<2x128xf32>
    %309 = arith.addf %308, %28 : vector<2x128xf32>
    %cst_64 = arith.constant 2.000000e+00 : f32
    %310 = vector.broadcast %cst_64 : f32 to vector<2x128xf32>
    %311 = arith.mulf %309, %310 : vector<2x128xf32>
    %312 = vector.shape_cast %35 : vector<1x128xi1> to vector<1x128xi1>
    %313 = vector.broadcast %312 : vector<1x128xi1> to vector<2x128xi1>
    %314 = arith.select %313, %311, %309 : vector<2x128xi1>, vector<2x128xf32>
    %315 = arith.negf %314 : vector<2x128xf32>
    %316 = math.exp %315 : vector<2x128xf32>
    %cst_65 = arith.constant 1.000000e+00 : f32
    %317 = vector.broadcast %cst_65 : f32 to vector<2x128xf32>
    %318 = arith.addf %317, %316 : vector<2x128xf32>
    %319 = arith.divf %317, %318 : vector<2x128xf32>
    %320 = vector.extract_strided_slice %319 {offsets = [0, 0], sizes = [2, 32], strides = [1, 1]} : vector<2x128xf32> to vector<2x32xf32>
    %321 = vector.extract_strided_slice %319 {offsets = [0, 32], sizes = [2, 32], strides = [1, 1]} : vector<2x128xf32> to vector<2x32xf32>
    %322 = vector.extract_strided_slice %319 {offsets = [0, 64], sizes = [2, 32], strides = [1, 1]} : vector<2x128xf32> to vector<2x32xf32>
    %cst_66 = arith.constant 2.000000e+00 : f32
    %323 = vector.broadcast %cst_66 : f32 to vector<2x32xf32>
    %324 = arith.mulf %323, %322 : vector<2x32xf32>
    %cst_67 = arith.constant 1.000000e+00 : f32
    %325 = vector.broadcast %cst_67 : f32 to vector<2x32xf32>
    %326 = arith.subf %324, %325 : vector<2x32xf32>
    %327 = vector.extract_strided_slice %319 {offsets = [0, 96], sizes = [2, 32], strides = [1, 1]} : vector<2x128xf32> to vector<2x32xf32>
    %328 = arith.mulf %321, %306 : vector<2x32xf32>
    %329 = arith.mulf %320, %326 : vector<2x32xf32>
    %330 = arith.addf %328, %329 : vector<2x32xf32>
    %331 = math.tanh %330 : vector<2x32xf32>
    %332 = arith.mulf %327, %331 : vector<2x32xf32>
    %333 = tpu.concatenate %96, %131, %166, %201, %236, %271, %305, %332 in 0 : vector<2x32xf32>, vector<2x32xf32>, vector<2x32xf32>, vector<2x32xf32>, vector<2x32xf32>, vector<2x32xf32>, vector<2x32xf32>, vector<2x32xf32> -> vector<16x32xf32>
    %334 = tpu.iota {dimensions = array<i32: 0>} : vector<2x16xi32>
    %335 = tpu.iota {dimensions = array<i32: 1>} : vector<2x16xi32>
    %c0_i32 = arith.constant 0 : i32
    %336 = vector.broadcast %c0_i32 : i32 to vector<2x16xi32>
    %c0_68 = arith.constant 0 : index
    %337 = memref.load %arg0[%c0_68] : memref<2xi32, #tpu.memory_space<smem>>
    %c0_i32_69 = arith.constant 0 : i32
    %c7_i32 = arith.constant 7 : i32
    %338 = arith.maxsi %c0_i32_69, %337 : i32
    %339 = arith.minsi %c7_i32, %338 : i32
    %c2_i32 = arith.constant 2 : i32
    %340 = arith.muli %339, %c2_i32 : i32
    %c0_i32_70 = arith.constant 0 : i32
    %341 = arith.addi %340, %c0_i32_70 : i32
    %c0_i32_71 = arith.constant 0 : i32
    %342 = vector.broadcast %c0_i32_71 : i32 to vector<2x16xi32>
    %343 = arith.cmpi eq, %334, %342 : vector<2x16xi32>
    %344 = vector.broadcast %341 : i32 to vector<2x16xi32>
    %345 = arith.select %343, %344, %336 : vector<2x16xi1>, vector<2x16xi32>
    %c1_72 = arith.constant 1 : index
    %346 = memref.load %arg0[%c1_72] : memref<2xi32, #tpu.memory_space<smem>>
    %c0_i32_73 = arith.constant 0 : i32
    %c7_i32_74 = arith.constant 7 : i32
    %347 = arith.maxsi %c0_i32_73, %346 : i32
    %348 = arith.minsi %c7_i32_74, %347 : i32
    %c2_i32_75 = arith.constant 2 : i32
    %349 = arith.muli %348, %c2_i32_75 : i32
    %c1_i32 = arith.constant 1 : i32
    %350 = arith.addi %349, %c1_i32 : i32
    %c1_i32_76 = arith.constant 1 : i32
    %351 = vector.broadcast %c1_i32_76 : i32 to vector<2x16xi32>
    %352 = arith.cmpi eq, %334, %351 : vector<2x16xi32>
    %353 = vector.broadcast %350 : i32 to vector<2x16xi32>
    %354 = arith.select %352, %353, %345 : vector<2x16xi1>, vector<2x16xi32>
    %355 = arith.cmpi eq, %335, %354 : vector<2x16xi32>
    %356 = arith.extui %355 : vector<2x16xi1> to vector<2x16xi32>
    %357 = arith.sitofp %356 : vector<2x16xi32> to vector<2x16xf32>
    %cst_77 = arith.constant dense<0.000000e+00> : vector<2x32xf32>
    %358 = tpu.matmul %357, %333, %cst_77 {dimension_numbers = #tpu.dot_dimension_numbers<[1], [0], [0], [1], [0, 0, 1, 1], [], []>} : vector<2x16xf32>, vector<16x32xf32>, vector<2x32xf32> -> vector<2x32xf32>
    %c0_78 = arith.constant 0 : index
    %c0_79 = arith.constant 0 : index
    %359 = vector.load %arg13[%c0_78, %c0_79] : memref<32x64xf32, #tpu.memory_space<vmem>>, vector<32x64xf32>
    %cst_80 = arith.constant dense<0.000000e+00> : vector<2x64xf32>
    %360 = tpu.matmul %358, %359, %cst_80 {dimension_numbers = #tpu.dot_dimension_numbers<[1], [0], [0], [1], [0, 0, 1, 1], [], []>} : vector<2x32xf32>, vector<32x64xf32>, vector<2x64xf32> -> vector<2x64xf32>
    %c0_81 = arith.constant 0 : index
    %c0_82 = arith.constant 0 : index
    %361 = vector.load %arg14[%c0_81, %c0_82] : memref<1x64xf32, #tpu.memory_space<vmem>>, vector<1x64xf32>
    %362 = vector.broadcast %361 : vector<1x64xf32> to vector<2x64xf32>
    %363 = arith.addf %360, %362 : vector<2x64xf32>
    %364 = math.tanh %363 : vector<2x64xf32>
    %c0_83 = arith.constant 0 : index
    %c0_84 = arith.constant 0 : index
    %365 = vector.load %arg15[%c0_83, %c0_84] : memref<32x64xf32, #tpu.memory_space<vmem>>, vector<32x64xf32>
    %cst_85 = arith.constant dense<0.000000e+00> : vector<2x64xf32>
    %366 = tpu.matmul %358, %365, %cst_85 {dimension_numbers = #tpu.dot_dimension_numbers<[1], [0], [0], [1], [0, 0, 1, 1], [], []>} : vector<2x32xf32>, vector<32x64xf32>, vector<2x64xf32> -> vector<2x64xf32>
    %c0_86 = arith.constant 0 : index
    %c0_87 = arith.constant 0 : index
    %367 = vector.load %arg16[%c0_86, %c0_87] : memref<1x64xf32, #tpu.memory_space<vmem>>, vector<1x64xf32>
    %368 = vector.broadcast %367 : vector<1x64xf32> to vector<2x64xf32>
    %369 = arith.addf %366, %368 : vector<2x64xf32>
    %370 = math.tanh %369 : vector<2x64xf32>
    %371 = vector.extract_strided_slice %364 {offsets = [0, 0], sizes = [2, 32], strides = [1, 1]} : vector<2x64xf32> to vector<2x32xf32>
    %372 = vector.extract_strided_slice %364 {offsets = [0, 32], sizes = [2, 32], strides = [1, 1]} : vector<2x64xf32> to vector<2x32xf32>
    %373 = vector.extract_strided_slice %370 {offsets = [0, 0], sizes = [2, 32], strides = [1, 1]} : vector<2x64xf32> to vector<2x32xf32>
    %374 = vector.extract_strided_slice %370 {offsets = [0, 32], sizes = [2, 32], strides = [1, 1]} : vector<2x64xf32> to vector<2x32xf32>
    %c0_88 = arith.constant 0 : index
    %c0_89 = arith.constant 0 : index
    %375 = vector.load %arg10[%c0_88, %c0_89] : memref<32x128xf32, #tpu.memory_space<vmem>>, vector<32x128xf32>
    %cst_90 = arith.constant dense<0.000000e+00> : vector<16x128xf32>
    %376 = tpu.matmul %333, %375, %cst_90 {dimension_numbers = #tpu.dot_dimension_numbers<[1], [0], [0], [1], [0, 0, 1, 1], [], []>} : vector<16x32xf32>, vector<32x128xf32>, vector<16x128xf32> -> vector<16x128xf32>
    %c0_91 = arith.constant 0 : index
    %c0_92 = arith.constant 0 : index
    %c0_93 = arith.constant 0 : index
    %377 = vector.load %arg12[%c0_91, %c0_92, %c0_93] : memref<2x1x128xf32, #tpu.memory_space<vmem>>, vector<1x1x128xf32>
    %378 = vector.shape_cast %377 : vector<1x1x128xf32> to vector<1x128xf32>
    %379 = vector.broadcast %378 : vector<1x128xf32> to vector<16x128xf32>
    %380 = arith.addf %376, %379 : vector<16x128xf32>
    %c0_94 = arith.constant 0 : index
    %c0_95 = arith.constant 0 : index
    %381 = vector.load %arg11[%c0_94, %c0_95] : memref<96x128xf32, #tpu.memory_space<vmem>>, vector<96x128xf32>
    %c1_96 = arith.constant 1 : index
    %c0_97 = arith.constant 0 : index
    %c0_98 = arith.constant 0 : index
    %382 = vector.load %arg12[%c1_96, %c0_97, %c0_98] : memref<2x1x128xf32, #tpu.memory_space<vmem>>, vector<1x1x128xf32>
    %383 = vector.shape_cast %382 : vector<1x1x128xf32> to vector<1x128xf32>
    %384 = vector.shape_cast %383 : vector<1x128xf32> to vector<1x128xf32>
    %385 = vector.broadcast %384 : vector<1x128xf32> to vector<2x128xf32>
    %cst_99 = arith.constant 0.000000e+00 : f32
    %386 = vector.broadcast %cst_99 : f32 to vector<2x32xf32>
    %387 = tpu.iota {dimensions = array<i32: 1>} : vector<1x128xi32>
    %c64_i32_100 = arith.constant 64 : i32
    %388 = vector.broadcast %c64_i32_100 : i32 to vector<1x128xi32>
    %389 = arith.cmpi sge, %387, %388 : vector<1x128xi32>
    %c96_i32_101 = arith.constant 96 : i32
    %390 = vector.broadcast %c96_i32_101 : i32 to vector<1x128xi32>
    %391 = arith.cmpi slt, %387, %390 : vector<1x128xi32>
    %392 = arith.andi %389, %391 : vector<1x128xi1>
    %393 = vector.extract_strided_slice %380 {offsets = [0, 0], sizes = [2, 128], strides = [1, 1]} : vector<16x128xf32> to vector<2x128xf32>
    %394 = tpu.concatenate %371, %386, %386 in 1 : vector<2x32xf32>, vector<2x32xf32>, vector<2x32xf32> -> vector<2x96xf32>
    %cst_102 = arith.constant dense<0.000000e+00> : vector<2x128xf32>
    %395 = tpu.matmul %394, %381, %cst_102 {dimension_numbers = #tpu.dot_dimension_numbers<[1], [0], [0], [1], [0, 0, 1, 1], [], []>} : vector<2x96xf32>, vector<96x128xf32>, vector<2x128xf32> -> vector<2x128xf32>
    %396 = arith.addf %395, %393 : vector<2x128xf32>
    %cst_103 = arith.constant 2.000000e+00 : f32
    %397 = vector.broadcast %cst_103 : f32 to vector<2x128xf32>
    %398 = arith.mulf %396, %397 : vector<2x128xf32>
    %399 = vector.shape_cast %392 : vector<1x128xi1> to vector<1x128xi1>
    %400 = vector.broadcast %399 : vector<1x128xi1> to vector<2x128xi1>
    %401 = arith.select %400, %398, %396 : vector<2x128xi1>, vector<2x128xf32>
    %402 = arith.negf %401 : vector<2x128xf32>
    %403 = math.exp %402 : vector<2x128xf32>
    %cst_104 = arith.constant 1.000000e+00 : f32
    %404 = vector.broadcast %cst_104 : f32 to vector<2x128xf32>
    %405 = arith.addf %404, %403 : vector<2x128xf32>
    %406 = arith.divf %404, %405 : vector<2x128xf32>
    %407 = vector.extract_strided_slice %406 {offsets = [0, 0], sizes = [2, 32], strides = [1, 1]} : vector<2x128xf32> to vector<2x32xf32>
    %408 = vector.extract_strided_slice %406 {offsets = [0, 32], sizes = [2, 32], strides = [1, 1]} : vector<2x128xf32> to vector<2x32xf32>
    %409 = vector.extract_strided_slice %406 {offsets = [0, 64], sizes = [2, 32], strides = [1, 1]} : vector<2x128xf32> to vector<2x32xf32>
    %cst_105 = arith.constant 2.000000e+00 : f32
    %410 = vector.broadcast %cst_105 : f32 to vector<2x32xf32>
    %411 = arith.mulf %410, %409 : vector<2x32xf32>
    %cst_106 = arith.constant 1.000000e+00 : f32
    %412 = vector.broadcast %cst_106 : f32 to vector<2x32xf32>
    %413 = arith.subf %411, %412 : vector<2x32xf32>
    %414 = vector.extract_strided_slice %406 {offsets = [0, 96], sizes = [2, 32], strides = [1, 1]} : vector<2x128xf32> to vector<2x32xf32>
    %415 = arith.mulf %408, %373 : vector<2x32xf32>
    %416 = arith.mulf %407, %413 : vector<2x32xf32>
    %417 = arith.addf %415, %416 : vector<2x32xf32>
    %418 = math.tanh %417 : vector<2x32xf32>
    %419 = arith.mulf %414, %418 : vector<2x32xf32>
    %420 = vector.extract_strided_slice %380 {offsets = [2, 0], sizes = [2, 128], strides = [1, 1]} : vector<16x128xf32> to vector<2x128xf32>
    %421 = tpu.concatenate %419, %386, %386 in 1 : vector<2x32xf32>, vector<2x32xf32>, vector<2x32xf32> -> vector<2x96xf32>
    %422 = tpu.concatenate %386, %419, %372 in 1 : vector<2x32xf32>, vector<2x32xf32>, vector<2x32xf32> -> vector<2x96xf32>
    %423 = tpu.concatenate %421, %422 in 0 : vector<2x96xf32>, vector<2x96xf32> -> vector<4x96xf32>
    %424 = tpu.concatenate %420, %385 in 0 : vector<2x128xf32>, vector<2x128xf32> -> vector<4x128xf32>
    %cst_107 = arith.constant dense<0.000000e+00> : vector<4x128xf32>
    %425 = tpu.matmul %423, %381, %cst_107 {dimension_numbers = #tpu.dot_dimension_numbers<[1], [0], [0], [1], [0, 0, 1, 1], [], []>} : vector<4x96xf32>, vector<96x128xf32>, vector<4x128xf32> -> vector<4x128xf32>
    %426 = arith.addf %425, %424 : vector<4x128xf32>
    %427 = tpu.concatenate %417, %374 in 0 : vector<2x32xf32>, vector<2x32xf32> -> vector<4x32xf32>
    %cst_108 = arith.constant 2.000000e+00 : f32
    %428 = vector.broadcast %cst_108 : f32 to vector<4x128xf32>
    %429 = arith.mulf %426, %428 : vector<4x128xf32>
    %430 = vector.shape_cast %392 : vector<1x128xi1> to vector<1x128xi1>
    %431 = vector.broadcast %430 : vector<1x128xi1> to vector<4x128xi1>
    %432 = arith.select %431, %429, %426 : vector<4x128xi1>, vector<4x128xf32>
    %433 = arith.negf %432 : vector<4x128xf32>
    %434 = math.exp %433 : vector<4x128xf32>
    %cst_109 = arith.constant 1.000000e+00 : f32
    %435 = vector.broadcast %cst_109 : f32 to vector<4x128xf32>
    %436 = arith.addf %435, %434 : vector<4x128xf32>
    %437 = arith.divf %435, %436 : vector<4x128xf32>
    %438 = vector.extract_strided_slice %437 {offsets = [0, 0], sizes = [4, 32], strides = [1, 1]} : vector<4x128xf32> to vector<4x32xf32>
    %439 = vector.extract_strided_slice %437 {offsets = [0, 32], sizes = [4, 32], strides = [1, 1]} : vector<4x128xf32> to vector<4x32xf32>
    %440 = vector.extract_strided_slice %437 {offsets = [0, 64], sizes = [4, 32], strides = [1, 1]} : vector<4x128xf32> to vector<4x32xf32>
    %cst_110 = arith.constant 2.000000e+00 : f32
    %441 = vector.broadcast %cst_110 : f32 to vector<4x32xf32>
    %442 = arith.mulf %441, %440 : vector<4x32xf32>
    %cst_111 = arith.constant 1.000000e+00 : f32
    %443 = vector.broadcast %cst_111 : f32 to vector<4x32xf32>
    %444 = arith.subf %442, %443 : vector<4x32xf32>
    %445 = vector.extract_strided_slice %437 {offsets = [0, 96], sizes = [4, 32], strides = [1, 1]} : vector<4x128xf32> to vector<4x32xf32>
    %446 = arith.mulf %439, %427 : vector<4x32xf32>
    %447 = arith.mulf %438, %444 : vector<4x32xf32>
    %448 = arith.addf %446, %447 : vector<4x32xf32>
    %449 = math.tanh %448 : vector<4x32xf32>
    %450 = arith.mulf %445, %449 : vector<4x32xf32>
    %451 = vector.extract_strided_slice %450 {offsets = [0, 0], sizes = [2, 32], strides = [1, 1]} : vector<4x32xf32> to vector<2x32xf32>
    %452 = vector.extract_strided_slice %448 {offsets = [0, 0], sizes = [2, 32], strides = [1, 1]} : vector<4x32xf32> to vector<2x32xf32>
    %453 = vector.extract_strided_slice %450 {offsets = [2, 0], sizes = [2, 32], strides = [1, 1]} : vector<4x32xf32> to vector<2x32xf32>
    %454 = vector.extract_strided_slice %448 {offsets = [2, 0], sizes = [2, 32], strides = [1, 1]} : vector<4x32xf32> to vector<2x32xf32>
    %455 = vector.extract_strided_slice %380 {offsets = [4, 0], sizes = [2, 128], strides = [1, 1]} : vector<16x128xf32> to vector<2x128xf32>
    %456 = tpu.concatenate %451, %386, %386 in 1 : vector<2x32xf32>, vector<2x32xf32>, vector<2x32xf32> -> vector<2x96xf32>
    %457 = tpu.concatenate %386, %451, %453 in 1 : vector<2x32xf32>, vector<2x32xf32>, vector<2x32xf32> -> vector<2x96xf32>
    %458 = tpu.concatenate %456, %457 in 0 : vector<2x96xf32>, vector<2x96xf32> -> vector<4x96xf32>
    %459 = tpu.concatenate %455, %385 in 0 : vector<2x128xf32>, vector<2x128xf32> -> vector<4x128xf32>
    %cst_112 = arith.constant dense<0.000000e+00> : vector<4x128xf32>
    %460 = tpu.matmul %458, %381, %cst_112 {dimension_numbers = #tpu.dot_dimension_numbers<[1], [0], [0], [1], [0, 0, 1, 1], [], []>} : vector<4x96xf32>, vector<96x128xf32>, vector<4x128xf32> -> vector<4x128xf32>
    %461 = arith.addf %460, %459 : vector<4x128xf32>
    %462 = tpu.concatenate %452, %454 in 0 : vector<2x32xf32>, vector<2x32xf32> -> vector<4x32xf32>
    %cst_113 = arith.constant 2.000000e+00 : f32
    %463 = vector.broadcast %cst_113 : f32 to vector<4x128xf32>
    %464 = arith.mulf %461, %463 : vector<4x128xf32>
    %465 = vector.shape_cast %392 : vector<1x128xi1> to vector<1x128xi1>
    %466 = vector.broadcast %465 : vector<1x128xi1> to vector<4x128xi1>
    %467 = arith.select %466, %464, %461 : vector<4x128xi1>, vector<4x128xf32>
    %468 = arith.negf %467 : vector<4x128xf32>
    %469 = math.exp %468 : vector<4x128xf32>
    %cst_114 = arith.constant 1.000000e+00 : f32
    %470 = vector.broadcast %cst_114 : f32 to vector<4x128xf32>
    %471 = arith.addf %470, %469 : vector<4x128xf32>
    %472 = arith.divf %470, %471 : vector<4x128xf32>
    %473 = vector.extract_strided_slice %472 {offsets = [0, 0], sizes = [4, 32], strides = [1, 1]} : vector<4x128xf32> to vector<4x32xf32>
    %474 = vector.extract_strided_slice %472 {offsets = [0, 32], sizes = [4, 32], strides = [1, 1]} : vector<4x128xf32> to vector<4x32xf32>
    %475 = vector.extract_strided_slice %472 {offsets = [0, 64], sizes = [4, 32], strides = [1, 1]} : vector<4x128xf32> to vector<4x32xf32>
    %cst_115 = arith.constant 2.000000e+00 : f32
    %476 = vector.broadcast %cst_115 : f32 to vector<4x32xf32>
    %477 = arith.mulf %476, %475 : vector<4x32xf32>
    %cst_116 = arith.constant 1.000000e+00 : f32
    %478 = vector.broadcast %cst_116 : f32 to vector<4x32xf32>
    %479 = arith.subf %477, %478 : vector<4x32xf32>
    %480 = vector.extract_strided_slice %472 {offsets = [0, 96], sizes = [4, 32], strides = [1, 1]} : vector<4x128xf32> to vector<4x32xf32>
    %481 = arith.mulf %474, %462 : vector<4x32xf32>
    %482 = arith.mulf %473, %479 : vector<4x32xf32>
    %483 = arith.addf %481, %482 : vector<4x32xf32>
    %484 = math.tanh %483 : vector<4x32xf32>
    %485 = arith.mulf %480, %484 : vector<4x32xf32>
    %486 = vector.extract_strided_slice %485 {offsets = [0, 0], sizes = [2, 32], strides = [1, 1]} : vector<4x32xf32> to vector<2x32xf32>
    %487 = vector.extract_strided_slice %483 {offsets = [0, 0], sizes = [2, 32], strides = [1, 1]} : vector<4x32xf32> to vector<2x32xf32>
    %488 = vector.extract_strided_slice %485 {offsets = [2, 0], sizes = [2, 32], strides = [1, 1]} : vector<4x32xf32> to vector<2x32xf32>
    %489 = vector.extract_strided_slice %483 {offsets = [2, 0], sizes = [2, 32], strides = [1, 1]} : vector<4x32xf32> to vector<2x32xf32>
    %490 = vector.extract_strided_slice %380 {offsets = [6, 0], sizes = [2, 128], strides = [1, 1]} : vector<16x128xf32> to vector<2x128xf32>
    %491 = tpu.concatenate %486, %386, %386 in 1 : vector<2x32xf32>, vector<2x32xf32>, vector<2x32xf32> -> vector<2x96xf32>
    %492 = tpu.concatenate %386, %486, %488 in 1 : vector<2x32xf32>, vector<2x32xf32>, vector<2x32xf32> -> vector<2x96xf32>
    %493 = tpu.concatenate %491, %492 in 0 : vector<2x96xf32>, vector<2x96xf32> -> vector<4x96xf32>
    %494 = tpu.concatenate %490, %385 in 0 : vector<2x128xf32>, vector<2x128xf32> -> vector<4x128xf32>
    %cst_117 = arith.constant dense<0.000000e+00> : vector<4x128xf32>
    %495 = tpu.matmul %493, %381, %cst_117 {dimension_numbers = #tpu.dot_dimension_numbers<[1], [0], [0], [1], [0, 0, 1, 1], [], []>} : vector<4x96xf32>, vector<96x128xf32>, vector<4x128xf32> -> vector<4x128xf32>
    %496 = arith.addf %495, %494 : vector<4x128xf32>
    %497 = tpu.concatenate %487, %489 in 0 : vector<2x32xf32>, vector<2x32xf32> -> vector<4x32xf32>
    %cst_118 = arith.constant 2.000000e+00 : f32
    %498 = vector.broadcast %cst_118 : f32 to vector<4x128xf32>
    %499 = arith.mulf %496, %498 : vector<4x128xf32>
    %500 = vector.shape_cast %392 : vector<1x128xi1> to vector<1x128xi1>
    %501 = vector.broadcast %500 : vector<1x128xi1> to vector<4x128xi1>
    %502 = arith.select %501, %499, %496 : vector<4x128xi1>, vector<4x128xf32>
    %503 = arith.negf %502 : vector<4x128xf32>
    %504 = math.exp %503 : vector<4x128xf32>
    %cst_119 = arith.constant 1.000000e+00 : f32
    %505 = vector.broadcast %cst_119 : f32 to vector<4x128xf32>
    %506 = arith.addf %505, %504 : vector<4x128xf32>
    %507 = arith.divf %505, %506 : vector<4x128xf32>
    %508 = vector.extract_strided_slice %507 {offsets = [0, 0], sizes = [4, 32], strides = [1, 1]} : vector<4x128xf32> to vector<4x32xf32>
    %509 = vector.extract_strided_slice %507 {offsets = [0, 32], sizes = [4, 32], strides = [1, 1]} : vector<4x128xf32> to vector<4x32xf32>
    %510 = vector.extract_strided_slice %507 {offsets = [0, 64], sizes = [4, 32], strides = [1, 1]} : vector<4x128xf32> to vector<4x32xf32>
    %cst_120 = arith.constant 2.000000e+00 : f32
    %511 = vector.broadcast %cst_120 : f32 to vector<4x32xf32>
    %512 = arith.mulf %511, %510 : vector<4x32xf32>
    %cst_121 = arith.constant 1.000000e+00 : f32
    %513 = vector.broadcast %cst_121 : f32 to vector<4x32xf32>
    %514 = arith.subf %512, %513 : vector<4x32xf32>
    %515 = vector.extract_strided_slice %507 {offsets = [0, 96], sizes = [4, 32], strides = [1, 1]} : vector<4x128xf32> to vector<4x32xf32>
    %516 = arith.mulf %509, %497 : vector<4x32xf32>
    %517 = arith.mulf %508, %514 : vector<4x32xf32>
    %518 = arith.addf %516, %517 : vector<4x32xf32>
    %519 = math.tanh %518 : vector<4x32xf32>
    %520 = arith.mulf %515, %519 : vector<4x32xf32>
    %521 = vector.extract_strided_slice %520 {offsets = [0, 0], sizes = [2, 32], strides = [1, 1]} : vector<4x32xf32> to vector<2x32xf32>
    %522 = vector.extract_strided_slice %518 {offsets = [0, 0], sizes = [2, 32], strides = [1, 1]} : vector<4x32xf32> to vector<2x32xf32>
    %523 = vector.extract_strided_slice %520 {offsets = [2, 0], sizes = [2, 32], strides = [1, 1]} : vector<4x32xf32> to vector<2x32xf32>
    %524 = vector.extract_strided_slice %518 {offsets = [2, 0], sizes = [2, 32], strides = [1, 1]} : vector<4x32xf32> to vector<2x32xf32>
    %525 = vector.extract_strided_slice %380 {offsets = [8, 0], sizes = [2, 128], strides = [1, 1]} : vector<16x128xf32> to vector<2x128xf32>
    %526 = tpu.concatenate %521, %386, %386 in 1 : vector<2x32xf32>, vector<2x32xf32>, vector<2x32xf32> -> vector<2x96xf32>
    %527 = tpu.concatenate %386, %521, %523 in 1 : vector<2x32xf32>, vector<2x32xf32>, vector<2x32xf32> -> vector<2x96xf32>
    %528 = tpu.concatenate %526, %527 in 0 : vector<2x96xf32>, vector<2x96xf32> -> vector<4x96xf32>
    %529 = tpu.concatenate %525, %385 in 0 : vector<2x128xf32>, vector<2x128xf32> -> vector<4x128xf32>
    %cst_122 = arith.constant dense<0.000000e+00> : vector<4x128xf32>
    %530 = tpu.matmul %528, %381, %cst_122 {dimension_numbers = #tpu.dot_dimension_numbers<[1], [0], [0], [1], [0, 0, 1, 1], [], []>} : vector<4x96xf32>, vector<96x128xf32>, vector<4x128xf32> -> vector<4x128xf32>
    %531 = arith.addf %530, %529 : vector<4x128xf32>
    %532 = tpu.concatenate %522, %524 in 0 : vector<2x32xf32>, vector<2x32xf32> -> vector<4x32xf32>
    %cst_123 = arith.constant 2.000000e+00 : f32
    %533 = vector.broadcast %cst_123 : f32 to vector<4x128xf32>
    %534 = arith.mulf %531, %533 : vector<4x128xf32>
    %535 = vector.shape_cast %392 : vector<1x128xi1> to vector<1x128xi1>
    %536 = vector.broadcast %535 : vector<1x128xi1> to vector<4x128xi1>
    %537 = arith.select %536, %534, %531 : vector<4x128xi1>, vector<4x128xf32>
    %538 = arith.negf %537 : vector<4x128xf32>
    %539 = math.exp %538 : vector<4x128xf32>
    %cst_124 = arith.constant 1.000000e+00 : f32
    %540 = vector.broadcast %cst_124 : f32 to vector<4x128xf32>
    %541 = arith.addf %540, %539 : vector<4x128xf32>
    %542 = arith.divf %540, %541 : vector<4x128xf32>
    %543 = vector.extract_strided_slice %542 {offsets = [0, 0], sizes = [4, 32], strides = [1, 1]} : vector<4x128xf32> to vector<4x32xf32>
    %544 = vector.extract_strided_slice %542 {offsets = [0, 32], sizes = [4, 32], strides = [1, 1]} : vector<4x128xf32> to vector<4x32xf32>
    %545 = vector.extract_strided_slice %542 {offsets = [0, 64], sizes = [4, 32], strides = [1, 1]} : vector<4x128xf32> to vector<4x32xf32>
    %cst_125 = arith.constant 2.000000e+00 : f32
    %546 = vector.broadcast %cst_125 : f32 to vector<4x32xf32>
    %547 = arith.mulf %546, %545 : vector<4x32xf32>
    %cst_126 = arith.constant 1.000000e+00 : f32
    %548 = vector.broadcast %cst_126 : f32 to vector<4x32xf32>
    %549 = arith.subf %547, %548 : vector<4x32xf32>
    %550 = vector.extract_strided_slice %542 {offsets = [0, 96], sizes = [4, 32], strides = [1, 1]} : vector<4x128xf32> to vector<4x32xf32>
    %551 = arith.mulf %544, %532 : vector<4x32xf32>
    %552 = arith.mulf %543, %549 : vector<4x32xf32>
    %553 = arith.addf %551, %552 : vector<4x32xf32>
    %554 = math.tanh %553 : vector<4x32xf32>
    %555 = arith.mulf %550, %554 : vector<4x32xf32>
    %556 = vector.extract_strided_slice %555 {offsets = [0, 0], sizes = [2, 32], strides = [1, 1]} : vector<4x32xf32> to vector<2x32xf32>
    %557 = vector.extract_strided_slice %553 {offsets = [0, 0], sizes = [2, 32], strides = [1, 1]} : vector<4x32xf32> to vector<2x32xf32>
    %558 = vector.extract_strided_slice %555 {offsets = [2, 0], sizes = [2, 32], strides = [1, 1]} : vector<4x32xf32> to vector<2x32xf32>
    %559 = vector.extract_strided_slice %553 {offsets = [2, 0], sizes = [2, 32], strides = [1, 1]} : vector<4x32xf32> to vector<2x32xf32>
    %560 = vector.extract_strided_slice %380 {offsets = [10, 0], sizes = [2, 128], strides = [1, 1]} : vector<16x128xf32> to vector<2x128xf32>
    %561 = tpu.concatenate %556, %386, %386 in 1 : vector<2x32xf32>, vector<2x32xf32>, vector<2x32xf32> -> vector<2x96xf32>
    %562 = tpu.concatenate %386, %556, %558 in 1 : vector<2x32xf32>, vector<2x32xf32>, vector<2x32xf32> -> vector<2x96xf32>
    %563 = tpu.concatenate %561, %562 in 0 : vector<2x96xf32>, vector<2x96xf32> -> vector<4x96xf32>
    %564 = tpu.concatenate %560, %385 in 0 : vector<2x128xf32>, vector<2x128xf32> -> vector<4x128xf32>
    %cst_127 = arith.constant dense<0.000000e+00> : vector<4x128xf32>
    %565 = tpu.matmul %563, %381, %cst_127 {dimension_numbers = #tpu.dot_dimension_numbers<[1], [0], [0], [1], [0, 0, 1, 1], [], []>} : vector<4x96xf32>, vector<96x128xf32>, vector<4x128xf32> -> vector<4x128xf32>
    %566 = arith.addf %565, %564 : vector<4x128xf32>
    %567 = tpu.concatenate %557, %559 in 0 : vector<2x32xf32>, vector<2x32xf32> -> vector<4x32xf32>
    %cst_128 = arith.constant 2.000000e+00 : f32
    %568 = vector.broadcast %cst_128 : f32 to vector<4x128xf32>
    %569 = arith.mulf %566, %568 : vector<4x128xf32>
    %570 = vector.shape_cast %392 : vector<1x128xi1> to vector<1x128xi1>
    %571 = vector.broadcast %570 : vector<1x128xi1> to vector<4x128xi1>
    %572 = arith.select %571, %569, %566 : vector<4x128xi1>, vector<4x128xf32>
    %573 = arith.negf %572 : vector<4x128xf32>
    %574 = math.exp %573 : vector<4x128xf32>
    %cst_129 = arith.constant 1.000000e+00 : f32
    %575 = vector.broadcast %cst_129 : f32 to vector<4x128xf32>
    %576 = arith.addf %575, %574 : vector<4x128xf32>
    %577 = arith.divf %575, %576 : vector<4x128xf32>
    %578 = vector.extract_strided_slice %577 {offsets = [0, 0], sizes = [4, 32], strides = [1, 1]} : vector<4x128xf32> to vector<4x32xf32>
    %579 = vector.extract_strided_slice %577 {offsets = [0, 32], sizes = [4, 32], strides = [1, 1]} : vector<4x128xf32> to vector<4x32xf32>
    %580 = vector.extract_strided_slice %577 {offsets = [0, 64], sizes = [4, 32], strides = [1, 1]} : vector<4x128xf32> to vector<4x32xf32>
    %cst_130 = arith.constant 2.000000e+00 : f32
    %581 = vector.broadcast %cst_130 : f32 to vector<4x32xf32>
    %582 = arith.mulf %581, %580 : vector<4x32xf32>
    %cst_131 = arith.constant 1.000000e+00 : f32
    %583 = vector.broadcast %cst_131 : f32 to vector<4x32xf32>
    %584 = arith.subf %582, %583 : vector<4x32xf32>
    %585 = vector.extract_strided_slice %577 {offsets = [0, 96], sizes = [4, 32], strides = [1, 1]} : vector<4x128xf32> to vector<4x32xf32>
    %586 = arith.mulf %579, %567 : vector<4x32xf32>
    %587 = arith.mulf %578, %584 : vector<4x32xf32>
    %588 = arith.addf %586, %587 : vector<4x32xf32>
    %589 = math.tanh %588 : vector<4x32xf32>
    %590 = arith.mulf %585, %589 : vector<4x32xf32>
    %591 = vector.extract_strided_slice %590 {offsets = [0, 0], sizes = [2, 32], strides = [1, 1]} : vector<4x32xf32> to vector<2x32xf32>
    %592 = vector.extract_strided_slice %588 {offsets = [0, 0], sizes = [2, 32], strides = [1, 1]} : vector<4x32xf32> to vector<2x32xf32>
    %593 = vector.extract_strided_slice %590 {offsets = [2, 0], sizes = [2, 32], strides = [1, 1]} : vector<4x32xf32> to vector<2x32xf32>
    %594 = vector.extract_strided_slice %588 {offsets = [2, 0], sizes = [2, 32], strides = [1, 1]} : vector<4x32xf32> to vector<2x32xf32>
    %595 = vector.extract_strided_slice %380 {offsets = [12, 0], sizes = [2, 128], strides = [1, 1]} : vector<16x128xf32> to vector<2x128xf32>
    %596 = tpu.concatenate %591, %386, %386 in 1 : vector<2x32xf32>, vector<2x32xf32>, vector<2x32xf32> -> vector<2x96xf32>
    %597 = tpu.concatenate %386, %591, %593 in 1 : vector<2x32xf32>, vector<2x32xf32>, vector<2x32xf32> -> vector<2x96xf32>
    %598 = tpu.concatenate %596, %597 in 0 : vector<2x96xf32>, vector<2x96xf32> -> vector<4x96xf32>
    %599 = tpu.concatenate %595, %385 in 0 : vector<2x128xf32>, vector<2x128xf32> -> vector<4x128xf32>
    %cst_132 = arith.constant dense<0.000000e+00> : vector<4x128xf32>
    %600 = tpu.matmul %598, %381, %cst_132 {dimension_numbers = #tpu.dot_dimension_numbers<[1], [0], [0], [1], [0, 0, 1, 1], [], []>} : vector<4x96xf32>, vector<96x128xf32>, vector<4x128xf32> -> vector<4x128xf32>
    %601 = arith.addf %600, %599 : vector<4x128xf32>
    %602 = tpu.concatenate %592, %594 in 0 : vector<2x32xf32>, vector<2x32xf32> -> vector<4x32xf32>
    %cst_133 = arith.constant 2.000000e+00 : f32
    %603 = vector.broadcast %cst_133 : f32 to vector<4x128xf32>
    %604 = arith.mulf %601, %603 : vector<4x128xf32>
    %605 = vector.shape_cast %392 : vector<1x128xi1> to vector<1x128xi1>
    %606 = vector.broadcast %605 : vector<1x128xi1> to vector<4x128xi1>
    %607 = arith.select %606, %604, %601 : vector<4x128xi1>, vector<4x128xf32>
    %608 = arith.negf %607 : vector<4x128xf32>
    %609 = math.exp %608 : vector<4x128xf32>
    %cst_134 = arith.constant 1.000000e+00 : f32
    %610 = vector.broadcast %cst_134 : f32 to vector<4x128xf32>
    %611 = arith.addf %610, %609 : vector<4x128xf32>
    %612 = arith.divf %610, %611 : vector<4x128xf32>
    %613 = vector.extract_strided_slice %612 {offsets = [0, 0], sizes = [4, 32], strides = [1, 1]} : vector<4x128xf32> to vector<4x32xf32>
    %614 = vector.extract_strided_slice %612 {offsets = [0, 32], sizes = [4, 32], strides = [1, 1]} : vector<4x128xf32> to vector<4x32xf32>
    %615 = vector.extract_strided_slice %612 {offsets = [0, 64], sizes = [4, 32], strides = [1, 1]} : vector<4x128xf32> to vector<4x32xf32>
    %cst_135 = arith.constant 2.000000e+00 : f32
    %616 = vector.broadcast %cst_135 : f32 to vector<4x32xf32>
    %617 = arith.mulf %616, %615 : vector<4x32xf32>
    %cst_136 = arith.constant 1.000000e+00 : f32
    %618 = vector.broadcast %cst_136 : f32 to vector<4x32xf32>
    %619 = arith.subf %617, %618 : vector<4x32xf32>
    %620 = vector.extract_strided_slice %612 {offsets = [0, 96], sizes = [4, 32], strides = [1, 1]} : vector<4x128xf32> to vector<4x32xf32>
    %621 = arith.mulf %614, %602 : vector<4x32xf32>
    %622 = arith.mulf %613, %619 : vector<4x32xf32>
    %623 = arith.addf %621, %622 : vector<4x32xf32>
    %624 = math.tanh %623 : vector<4x32xf32>
    %625 = arith.mulf %620, %624 : vector<4x32xf32>
    %626 = vector.extract_strided_slice %625 {offsets = [0, 0], sizes = [2, 32], strides = [1, 1]} : vector<4x32xf32> to vector<2x32xf32>
    %627 = vector.extract_strided_slice %623 {offsets = [0, 0], sizes = [2, 32], strides = [1, 1]} : vector<4x32xf32> to vector<2x32xf32>
    %628 = vector.extract_strided_slice %625 {offsets = [2, 0], sizes = [2, 32], strides = [1, 1]} : vector<4x32xf32> to vector<2x32xf32>
    %629 = vector.extract_strided_slice %623 {offsets = [2, 0], sizes = [2, 32], strides = [1, 1]} : vector<4x32xf32> to vector<2x32xf32>
    %630 = vector.extract_strided_slice %380 {offsets = [14, 0], sizes = [2, 128], strides = [1, 1]} : vector<16x128xf32> to vector<2x128xf32>
    %631 = tpu.concatenate %626, %386, %386 in 1 : vector<2x32xf32>, vector<2x32xf32>, vector<2x32xf32> -> vector<2x96xf32>
    %632 = tpu.concatenate %386, %626, %628 in 1 : vector<2x32xf32>, vector<2x32xf32>, vector<2x32xf32> -> vector<2x96xf32>
    %633 = tpu.concatenate %631, %632 in 0 : vector<2x96xf32>, vector<2x96xf32> -> vector<4x96xf32>
    %634 = tpu.concatenate %630, %385 in 0 : vector<2x128xf32>, vector<2x128xf32> -> vector<4x128xf32>
    %cst_137 = arith.constant dense<0.000000e+00> : vector<4x128xf32>
    %635 = tpu.matmul %633, %381, %cst_137 {dimension_numbers = #tpu.dot_dimension_numbers<[1], [0], [0], [1], [0, 0, 1, 1], [], []>} : vector<4x96xf32>, vector<96x128xf32>, vector<4x128xf32> -> vector<4x128xf32>
    %636 = arith.addf %635, %634 : vector<4x128xf32>
    %637 = tpu.concatenate %627, %629 in 0 : vector<2x32xf32>, vector<2x32xf32> -> vector<4x32xf32>
    %cst_138 = arith.constant 2.000000e+00 : f32
    %638 = vector.broadcast %cst_138 : f32 to vector<4x128xf32>
    %639 = arith.mulf %636, %638 : vector<4x128xf32>
    %640 = vector.shape_cast %392 : vector<1x128xi1> to vector<1x128xi1>
    %641 = vector.broadcast %640 : vector<1x128xi1> to vector<4x128xi1>
    %642 = arith.select %641, %639, %636 : vector<4x128xi1>, vector<4x128xf32>
    %643 = arith.negf %642 : vector<4x128xf32>
    %644 = math.exp %643 : vector<4x128xf32>
    %cst_139 = arith.constant 1.000000e+00 : f32
    %645 = vector.broadcast %cst_139 : f32 to vector<4x128xf32>
    %646 = arith.addf %645, %644 : vector<4x128xf32>
    %647 = arith.divf %645, %646 : vector<4x128xf32>
    %648 = vector.extract_strided_slice %647 {offsets = [0, 0], sizes = [4, 32], strides = [1, 1]} : vector<4x128xf32> to vector<4x32xf32>
    %649 = vector.extract_strided_slice %647 {offsets = [0, 32], sizes = [4, 32], strides = [1, 1]} : vector<4x128xf32> to vector<4x32xf32>
    %650 = vector.extract_strided_slice %647 {offsets = [0, 64], sizes = [4, 32], strides = [1, 1]} : vector<4x128xf32> to vector<4x32xf32>
    %cst_140 = arith.constant 2.000000e+00 : f32
    %651 = vector.broadcast %cst_140 : f32 to vector<4x32xf32>
    %652 = arith.mulf %651, %650 : vector<4x32xf32>
    %cst_141 = arith.constant 1.000000e+00 : f32
    %653 = vector.broadcast %cst_141 : f32 to vector<4x32xf32>
    %654 = arith.subf %652, %653 : vector<4x32xf32>
    %655 = vector.extract_strided_slice %647 {offsets = [0, 96], sizes = [4, 32], strides = [1, 1]} : vector<4x128xf32> to vector<4x32xf32>
    %656 = arith.mulf %649, %637 : vector<4x32xf32>
    %657 = arith.mulf %648, %654 : vector<4x32xf32>
    %658 = arith.addf %656, %657 : vector<4x32xf32>
    %659 = math.tanh %658 : vector<4x32xf32>
    %660 = arith.mulf %655, %659 : vector<4x32xf32>
    %661 = vector.extract_strided_slice %660 {offsets = [0, 0], sizes = [2, 32], strides = [1, 1]} : vector<4x32xf32> to vector<2x32xf32>
    %662 = vector.extract_strided_slice %660 {offsets = [2, 0], sizes = [2, 32], strides = [1, 1]} : vector<4x32xf32> to vector<2x32xf32>
    %663 = vector.extract_strided_slice %658 {offsets = [2, 0], sizes = [2, 32], strides = [1, 1]} : vector<4x32xf32> to vector<2x32xf32>
    %664 = tpu.concatenate %386, %661, %662 in 1 : vector<2x32xf32>, vector<2x32xf32>, vector<2x32xf32> -> vector<2x96xf32>
    %cst_142 = arith.constant dense<0.000000e+00> : vector<2x128xf32>
    %665 = tpu.matmul %664, %381, %cst_142 {dimension_numbers = #tpu.dot_dimension_numbers<[1], [0], [0], [1], [0, 0, 1, 1], [], []>} : vector<2x96xf32>, vector<96x128xf32>, vector<2x128xf32> -> vector<2x128xf32>
    %666 = arith.addf %665, %385 : vector<2x128xf32>
    %cst_143 = arith.constant 2.000000e+00 : f32
    %667 = vector.broadcast %cst_143 : f32 to vector<2x128xf32>
    %668 = arith.mulf %666, %667 : vector<2x128xf32>
    %669 = vector.shape_cast %392 : vector<1x128xi1> to vector<1x128xi1>
    %670 = vector.broadcast %669 : vector<1x128xi1> to vector<2x128xi1>
    %671 = arith.select %670, %668, %666 : vector<2x128xi1>, vector<2x128xf32>
    %672 = arith.negf %671 : vector<2x128xf32>
    %673 = math.exp %672 : vector<2x128xf32>
    %cst_144 = arith.constant 1.000000e+00 : f32
    %674 = vector.broadcast %cst_144 : f32 to vector<2x128xf32>
    %675 = arith.addf %674, %673 : vector<2x128xf32>
    %676 = arith.divf %674, %675 : vector<2x128xf32>
    %677 = vector.extract_strided_slice %676 {offsets = [0, 0], sizes = [2, 32], strides = [1, 1]} : vector<2x128xf32> to vector<2x32xf32>
    %678 = vector.extract_strided_slice %676 {offsets = [0, 32], sizes = [2, 32], strides = [1, 1]} : vector<2x128xf32> to vector<2x32xf32>
    %679 = vector.extract_strided_slice %676 {offsets = [0, 64], sizes = [2, 32], strides = [1, 1]} : vector<2x128xf32> to vector<2x32xf32>
    %cst_145 = arith.constant 2.000000e+00 : f32
    %680 = vector.broadcast %cst_145 : f32 to vector<2x32xf32>
    %681 = arith.mulf %680, %679 : vector<2x32xf32>
    %cst_146 = arith.constant 1.000000e+00 : f32
    %682 = vector.broadcast %cst_146 : f32 to vector<2x32xf32>
    %683 = arith.subf %681, %682 : vector<2x32xf32>
    %684 = vector.extract_strided_slice %676 {offsets = [0, 96], sizes = [2, 32], strides = [1, 1]} : vector<2x128xf32> to vector<2x32xf32>
    %685 = arith.mulf %678, %663 : vector<2x32xf32>
    %686 = arith.mulf %677, %683 : vector<2x32xf32>
    %687 = arith.addf %685, %686 : vector<2x32xf32>
    %688 = math.tanh %687 : vector<2x32xf32>
    %689 = arith.mulf %684, %688 : vector<2x32xf32>
    %690 = tpu.concatenate %453, %488, %523, %558, %593, %628, %662, %689 in 0 : vector<2x32xf32>, vector<2x32xf32>, vector<2x32xf32>, vector<2x32xf32>, vector<2x32xf32>, vector<2x32xf32>, vector<2x32xf32>, vector<2x32xf32> -> vector<16x32xf32>
    %c0_147 = arith.constant 0 : index
    %c0_148 = arith.constant 0 : index
    %691 = vector.load %arg17[%c0_147, %c0_148] : memref<32x4xf32, #tpu.memory_space<vmem>>, vector<32x4xf32>
    %cst_149 = arith.constant dense<0.000000e+00> : vector<16x4xf32>
    %692 = tpu.matmul %690, %691, %cst_149 {dimension_numbers = #tpu.dot_dimension_numbers<[1], [0], [0], [1], [0, 0, 1, 1], [], []>} : vector<16x32xf32>, vector<32x4xf32>, vector<16x4xf32> -> vector<16x4xf32>
    %c0_150 = arith.constant 0 : index
    %c0_151 = arith.constant 0 : index
    %693 = vector.load %arg18[%c0_150, %c0_151] : memref<1x4xf32, #tpu.memory_space<vmem>>, vector<1x4xf32>
    %694 = vector.broadcast %693 : vector<1x4xf32> to vector<16x4xf32>
    %695 = arith.addf %692, %694 : vector<16x4xf32>
    %696 = arith.negf %695 : vector<16x4xf32>
    %697 = math.exp %696 : vector<16x4xf32>
    %cst_152 = arith.constant 1.000000e+00 : f32
    %698 = vector.broadcast %cst_152 : f32 to vector<16x4xf32>
    %699 = arith.addf %698, %697 : vector<16x4xf32>
    %700 = arith.divf %698, %699 : vector<16x4xf32>
    %c0_153 = arith.constant 0 : index
    %c0_154 = arith.constant 0 : index
    %701 = vector.load %arg19[%c0_153, %c0_154] : memref<16x4xf32, #tpu.memory_space<vmem>>, vector<16x4xf32>
    tpu.vector_store %arg19[%c0_153, %c0_154], %700 {strides = array<i32>} : memref<16x4xf32, #tpu.memory_space<vmem>>, vector<16x4xf32>,
    return
  }
}

</mosaic_0001>

<llo_original>
// kernel: coord_generator_forward.1
$region0: #{coord_generator_forward.1}
  #allocation0 [shape = 'u32[]', space=smem, size = 0x4, offset = 0x4, fixed_abs, tag = 'smem constant byte address 0x4 - core index']
  #allocation1 [shape = 'u32[72,128]{1,0:T(1,128)}', space=vmem, size = 0x9000, scoped, tag = 'internal scratch']
  %s0 = inlined_call_operand.vmem [shape: s32[2], index: 0, kind: input, shape index: {}]
  %s1 = inlined_call_operand.vmem [shape: f32[16,32], index: 1, kind: input, shape index: {}]
  %s2 = inlined_call_operand.vmem [shape: f32[2,16], index: 2, kind: input, shape index: {}]
  %s3 = inlined_call_operand.vmem [shape: f32[32,128], index: 3, kind: input, shape index: {}]
  %s4 = inlined_call_operand.hbm [shape: f32[96,128], index: 4, kind: input, shape index: {}]
  %s5 = inlined_call_operand.hbm [shape: f32[2,1,128], index: 5, kind: input, shape index: {}]
  %s6 = inlined_call_operand.hbm [shape: f32[16,64], index: 6, kind: input, shape index: {}]
  %s7 = inlined_call_operand.vmem [shape: f32[1,64], index: 7, kind: input, shape index: {}]
  %s8 = inlined_call_operand.hbm [shape: f32[16,64], index: 8, kind: input, shape index: {}]
  %s9 = inlined_call_operand.hbm [shape: f32[1,64], index: 9, kind: input, shape index: {}]
  %s10 = inlined_call_operand.vmem [shape: f32[32,128], index: 10, kind: input, shape index: {}]
  %s11 = inlined_call_operand.hbm [shape: f32[96,128], index: 11, kind: input, shape index: {}]
  %s12 = inlined_call_operand.hbm [shape: f32[2,1,128], index: 12, kind: input, shape index: {}]
  %s13 = inlined_call_operand.hbm [shape: f32[32,64], index: 13, kind: input, shape index: {}]
  %s14 = inlined_call_operand.hbm [shape: f32[1,64], index: 14, kind: input, shape index: {}]
  %s15 = inlined_call_operand.hbm [shape: f32[32,64], index: 15, kind: input, shape index: {}]
  %s16 = inlined_call_operand.hbm [shape: f32[1,64], index: 16, kind: input, shape index: {}]
  %s17 = inlined_call_operand.vmem [shape: f32[32,4], index: 17, kind: input, shape index: {}]
  %s18 = inlined_call_operand.hbm [shape: f32[1,4], index: 18, kind: input, shape index: {}]
  %s19 = inlined_call_operand.vmem [shape: f32[16,4], index: 19, kind: output, shape index: {}]
  %s20 = sld [smem:[#allocation0]]
  $region138: #{coord_generator_forward.1} parent=0
    _
  %s22 = ssub.s32 1, %s20
  %s23 = scalar_select 0, %s22, %s20
  $region1: #{coord_generator_forward.1} parent=0
    #allocation2 [shape = 'u8[512]{0}', space=smem, size = 0x200, scoped, tag = 'input window, operand 0, single buffered']
    #allocation3 [shape = 's32[1]{0}', space=sflag, size = 0x4, scoped, tag = 'scoped memory for coord_generator_forward.1']
    #allocation4 [shape = 's32[1]{0}', space=sflag, size = 0x4, scoped, tag = 'scoped memory for coord_generator_forward.1']
    #allocation5 [shape = 'u8[49152]{0}', space=vmem, size = 0xc000, scoped, tag = 'input window, operand 4, single buffered']
    #allocation6 [shape = 'u8[1024]{0}', space=vmem, size = 0x400, scoped, tag = 'input window, operand 5, single buffered']
    #allocation7 [shape = 's32[1]{0}', space=sflag, size = 0x4, scoped, tag = 'scoped memory for coord_generator_forward.1']
    #allocation8 [shape = 'u8[8192]{0}', space=vmem, size = 0x2000, scoped, tag = 'input window, operand 6, single buffered']
    #allocation9 [shape = 'u8[8192]{0}', space=vmem, size = 0x2000, scoped, tag = 'input window, operand 8, single buffered']
    #allocation10 [shape = 's32[1]{0}', space=sflag, size = 0x4, scoped, tag = 'scoped memory for coord_generator_forward.1']
    #allocation11 [shape = 'u8[512]{0}', space=vmem, size = 0x400, scoped, tag = 'input window, operand 9, single buffered']
    #allocation12 [shape = 'u8[49152]{0}', space=vmem, size = 0xc000, scoped, tag = 'input window, operand 11, single buffered']
    #allocation13 [shape = 's32[1]{0}', space=sflag, size = 0x4, scoped, tag = 'scoped memory for coord_generator_forward.1']
    #allocation14 [shape = 'u8[1024]{0}', space=vmem, size = 0x400, scoped, tag = 'input window, operand 12, single buffered']
    #allocation15 [shape = 'u8[16384]{0}', space=vmem, size = 0x4000, scoped, tag = 'input window, operand 13, single buffered']
    #allocation16 [shape = 's32[1]{0}', space=sflag, size = 0x4, scoped, tag = 'scoped memory for coord_generator_forward.1']
    #allocation17 [shape = 'u8[512]{0}', space=vmem, size = 0x400, scoped, tag = 'input window, operand 14, single buffered']
    #allocation18 [shape = 'u8[16384]{0}', space=vmem, size = 0x4000, scoped, tag = 'input window, operand 15, single buffered']
    #allocation19 [shape = 's32[1]{0}', space=sflag, size = 0x4, scoped, tag = 'scoped memory for coord_generator_forward.1']
    #allocation20 [shape = 'u8[512]{0}', space=vmem, size = 0x400, scoped, tag = 'input window, operand 16, single buffered']
    #allocation21 [shape = 'u8[512]{0}', space=vmem, size = 0x400, scoped, tag = 'input window, operand 18, single buffered']
    #allocation22 [shape = 's32[1]{0}', space=sflag, size = 0x4, scoped, tag = 'scoped memory for coord_generator_forward.1']
    %24 = vsyncpa [#allocation4], 0
    %25 = vsyncpa [#allocation3], 0
    %26 = vsyncpa [#allocation7], 0
    %27 = vsyncpa [#allocation10], 0
    %28 = vsyncpa [#allocation13], 0
    %29 = vsyncpa [#allocation16], 0
    %30 = vsyncpa [#allocation19], 0
    %31 = vsyncpa [#allocation22], 0
    // Predicated region
    $region2: #{coord_generator_forward.1} parent=1 // pred_check
      _
    $region3: #{coord_generator_forward.1} parent=1 // pred_check_branch
      %33 = sbr.rel (0) target = $region5
    $region4: #{coord_generator_forward.1} parent=1 // pred_region
      %35 = vsyncadd [#allocation4], 0
      %s37 = sshll.u32 %s0, 4
      %s38 = int_to_ptr.vmem [resolvable:$true] %s37
      %40 = dma.vmem_to_smem %s38, 16, [#allocation2], [#allocation4]
    $region5: #{coord_generator_forward.1} parent=1 // pred_fallthru
      _
    // Predicated region
    $region6: #{coord_generator_forward.1} parent=1 // pred_check
      _
    $region7: #{coord_generator_forward.1} parent=1 // pred_check_branch
      %42 = sbr.rel (0) target = $region9
    $region8: #{coord_generator_forward.1} parent=1 // pred_region
      _
    $region9: #{coord_generator_forward.1} parent=1 // pred_fallthru
      _
    // Predicated region
    $region10: #{coord_generator_forward.1} parent=1 // pred_check
      _
    $region11: #{coord_generator_forward.1} parent=1 // pred_check_branch
      %44 = sbr.rel (0) target = $region13
    $region12: #{coord_generator_forward.1} parent=1 // pred_region
      _
    $region13: #{coord_generator_forward.1} parent=1 // pred_fallthru
      _
    // Predicated region
    $region14: #{coord_generator_forward.1} parent=1 // pred_check
      _
    $region15: #{coord_generator_forward.1} parent=1 // pred_check_branch
      %46 = sbr.rel (0) target = $region17
    $region16: #{coord_generator_forward.1} parent=1 // pred_region
      _
    $region17: #{coord_generator_forward.1} parent=1 // pred_fallthru
      _
    // Predicated region
    $region18: #{coord_generator_forward.1} parent=1 // pred_check
      _
    $region19: #{coord_generator_forward.1} parent=1 // pred_check_branch
      %48 = sbr.rel (0) target = $region21
    $region20: #{coord_generator_forward.1} parent=1 // pred_region
      %50 = vsyncadd [#allocation3], 0
      %s51 = sshll.u32 %s4, 4
      %s52 = int_to_ptr.hbm [resolvable:$true] %s51
      %s53 = sshll.u32 [#allocation5], 4
      %s54 = int_to_ptr.vmem [resolvable:$true] %s53
      %59 = dma.hbm_to_vmem [thread:$0]  %s52, 1536, %s54, [#allocation3], 128, 128, 8
    $region21: #{coord_generator_forward.1} parent=1 // pred_fallthru
      _
    // Predicated region
    $region22: #{coord_generator_forward.1} parent=1 // pred_check
      _
    $region23: #{coord_generator_forward.1} parent=1 // pred_check_branch
      %61 = sbr.rel (0) target = $region25
    $region24: #{coord_generator_forward.1} parent=1 // pred_region
      %63 = vsyncadd [#allocation7], 0
      %s64 = sshll.u32 %s5, 4
      %s65 = int_to_ptr.hbm [resolvable:$true] %s64
      %s66 = sshll.u32 [#allocation6], 4
      %s67 = int_to_ptr.vmem [resolvable:$true] %s66
      %72 = dma.hbm_to_vmem [thread:$0]  %s65, 32, %s67, [#allocation7], 16, 16, 1
    $region25: #{coord_generator_forward.1} parent=1 // pred_fallthru
      _
    // Predicated region
    $region26: #{coord_generator_forward.1} parent=1 // pred_check
      _
    $region27: #{coord_generator_forward.1} parent=1 // pred_check_branch
      %74 = sbr.rel (0) target = $region29
    $region28: #{coord_generator_forward.1} parent=1 // pred_region
      %76 = vsyncadd [#allocation7], 0
      %s77 = sshll.u32 %s6, 4
      %s78 = int_to_ptr.hbm [resolvable:$true] %s77
      %s79 = sshll.u32 [#allocation8], 4
      %s80 = int_to_ptr.vmem [resolvable:$true] %s79
      %85 = dma.hbm_to_vmem [thread:$0]  %s78, 256, %s80, [#allocation7], 128, 128, 8
    $region29: #{coord_generator_forward.1} parent=1 // pred_fallthru
      _
    // Predicated region
    $region30: #{coord_generator_forward.1} parent=1 // pred_check
      _
    $region31: #{coord_generator_forward.1} parent=1 // pred_check_branch
      %87 = sbr.rel (0) target = $region33
    $region32: #{coord_generator_forward.1} parent=1 // pred_region
      _
    $region33: #{coord_generator_forward.1} parent=1 // pred_fallthru
      _
    // Predicated region
    $region34: #{coord_generator_forward.1} parent=1 // pred_check
      _
    $region35: #{coord_generator_forward.1} parent=1 // pred_check_branch
      %89 = sbr.rel (0) target = $region37
    $region36: #{coord_generator_forward.1} parent=1 // pred_region
      %91 = vsyncadd [#allocation10], 0
      %s92 = sshll.u32 %s8, 4
      %s93 = int_to_ptr.hbm [resolvable:$true] %s92
      %s94 = sshll.u32 [#allocation9], 4
      %s95 = int_to_ptr.vmem [resolvable:$true] %s94
      %100 = dma.hbm_to_vmem [thread:$0]  %s93, 256, %s95, [#allocation10], 128, 128, 8
    $region37: #{coord_generator_forward.1} parent=1 // pred_fallthru
      _
    // Predicated region
    $region38: #{coord_generator_forward.1} parent=1 // pred_check
      _
    $region39: #{coord_generator_forward.1} parent=1 // pred_check_branch
      %102 = sbr.rel (0) target = $region41
    $region40: #{coord_generator_forward.1} parent=1 // pred_region
      %104 = vsyncadd [#allocation10], 0
      %s106 = sshll.u32 %s9, 4
      %s107 = int_to_ptr.hbm [resolvable:$true] %s106
      %s108 = sshll.u32 [#allocation11], 4
      %s109 = int_to_ptr.vmem [resolvable:$true] %s108
      %111 = dma.hbm_to_vmem [thread:$0]  %s107, 16, %s109, [#allocation10]
    $region41: #{coord_generator_forward.1} parent=1 // pred_fallthru
      _
    // Predicated region
    $region42: #{coord_generator_forward.1} parent=1 // pred_check
      _
    $region43: #{coord_generator_forward.1} parent=1 // pred_check_branch
      %113 = sbr.rel (0) target = $region45
    $region44: #{coord_generator_forward.1} parent=1 // pred_region
      _
    $region45: #{coord_generator_forward.1} parent=1 // pred_fallthru
      _
    // Predicated region
    $region46: #{coord_generator_forward.1} parent=1 // pred_check
      _
    $region47: #{coord_generator_forward.1} parent=1 // pred_check_branch
      %115 = sbr.rel (0) target = $region49
    $region48: #{coord_generator_forward.1} parent=1 // pred_region
      %117 = vsyncadd [#allocation13], 0
      %s118 = sshll.u32 %s11, 4
      %s119 = int_to_ptr.hbm [resolvable:$true] %s118
      %s120 = sshll.u32 [#allocation12], 4
      %s121 = int_to_ptr.vmem [resolvable:$true] %s120
      %126 = dma.hbm_to_vmem [thread:$0]  %s119, 1536, %s121, [#allocation13], 128, 128, 8
    $region49: #{coord_generator_forward.1} parent=1 // pred_fallthru
      _
    // Predicated region
    $region50: #{coord_generator_forward.1} parent=1 // pred_check
      _
    $region51: #{coord_generator_forward.1} parent=1 // pred_check_branch
      %128 = sbr.rel (0) target = $region53
    $region52: #{coord_generator_forward.1} parent=1 // pred_region
      %130 = vsyncadd [#allocation13], 0
      %s131 = sshll.u32 %s12, 4
      %s132 = int_to_ptr.hbm [resolvable:$true] %s131
      %s133 = sshll.u32 [#allocation14], 4
      %s134 = int_to_ptr.vmem [resolvable:$true] %s133
      %139 = dma.hbm_to_vmem [thread:$0]  %s132, 32, %s134, [#allocation13], 16, 16, 1
    $region53: #{coord_generator_forward.1} parent=1 // pred_fallthru
      _
    // Predicated region
    $region54: #{coord_generator_forward.1} parent=1 // pred_check
      _
    $region55: #{coord_generator_forward.1} parent=1 // pred_check_branch
      %141 = sbr.rel (0) target = $region57
    $region56: #{coord_generator_forward.1} parent=1 // pred_region
      %143 = vsyncadd [#allocation16], 0
      %s144 = sshll.u32 %s13, 4
      %s145 = int_to_ptr.hbm [resolvable:$true] %s144
      %s146 = sshll.u32 [#allocation15], 4
      %s147 = int_to_ptr.vmem [resolvable:$true] %s146
      %152 = dma.hbm_to_vmem [thread:$0]  %s145, 512, %s147, [#allocation16], 128, 128, 8
    $region57: #{coord_generator_forward.1} parent=1 // pred_fallthru
      _
    // Predicated region
    $region58: #{coord_generator_forward.1} parent=1 // pred_check
      _
    $region59: #{coord_generator_forward.1} parent=1 // pred_check_branch
      %154 = sbr.rel (0) target = $region61
    $region60: #{coord_generator_forward.1} parent=1 // pred_region
      %156 = vsyncadd [#allocation16], 0
      %s158 = sshll.u32 %s14, 4
      %s159 = int_to_ptr.hbm [resolvable:$true] %s158
      %s160 = sshll.u32 [#allocation17], 4
      %s161 = int_to_ptr.vmem [resolvable:$true] %s160
      %163 = dma.hbm_to_vmem [thread:$0]  %s159, 16, %s161, [#allocation16]
    $region61: #{coord_generator_forward.1} parent=1 // pred_fallthru
      _
    // Predicated region
    $region62: #{coord_generator_forward.1} parent=1 // pred_check
      _
    $region63: #{coord_generator_forward.1} parent=1 // pred_check_branch
      %165 = sbr.rel (0) target = $region65
    $region64: #{coord_generator_forward.1} parent=1 // pred_region
      %167 = vsyncadd [#allocation19], 0
      %s168 = sshll.u32 %s15, 4
      %s169 = int_to_ptr.hbm [resolvable:$true] %s168
      %s170 = sshll.u32 [#allocation18], 4
      %s171 = int_to_ptr.vmem [resolvable:$true] %s170
      %176 = dma.hbm_to_vmem [thread:$0]  %s169, 512, %s171, [#allocation19], 128, 128, 8
    $region65: #{coord_generator_forward.1} parent=1 // pred_fallthru
      _
    // Predicated region
    $region66: #{coord_generator_forward.1} parent=1 // pred_check
      _
    $region67: #{coord_generator_forward.1} parent=1 // pred_check_branch
      %178 = sbr.rel (0) target = $region69
    $region68: #{coord_generator_forward.1} parent=1 // pred_region
      %180 = vsyncadd [#allocation19], 0
      %s182 = sshll.u32 %s16, 4
      %s183 = int_to_ptr.hbm [resolvable:$true] %s182
      %s184 = sshll.u32 [#allocation20], 4
      %s185 = int_to_ptr.vmem [resolvable:$true] %s184
      %187 = dma.hbm_to_vmem [thread:$0]  %s183, 16, %s185, [#allocation19]
    $region69: #{coord_generator_forward.1} parent=1 // pred_fallthru
      _
    // Predicated region
    $region70: #{coord_generator_forward.1} parent=1 // pred_check
      _
    $region71: #{coord_generator_forward.1} parent=1 // pred_check_branch
      %189 = sbr.rel (0) target = $region73
    $region72: #{coord_generator_forward.1} parent=1 // pred_region
      _
    $region73: #{coord_generator_forward.1} parent=1 // pred_fallthru
      _
    // Predicated region
    $region74: #{coord_generator_forward.1} parent=1 // pred_check
      _
    $region75: #{coord_generator_forward.1} parent=1 // pred_check_branch
      %191 = sbr.rel (0) target = $region77
    $region76: #{coord_generator_forward.1} parent=1 // pred_region
      %193 = vsyncadd [#allocation22], 0
      %s195 = sshll.u32 %s18, 4
      %s196 = int_to_ptr.hbm [resolvable:$true] %s195
      %s197 = sshll.u32 [#allocation21], 4
      %s198 = int_to_ptr.vmem [resolvable:$true] %s197
      %200 = dma.hbm_to_vmem [thread:$0]  %s196, 16, %s198, [#allocation22]
    $region77: #{coord_generator_forward.1} parent=1 // pred_fallthru
      _
    // Predicated region
    $region78: #{coord_generator_forward.1} parent=1 // pred_check
      _
    $region79: #{coord_generator_forward.1} parent=1 // pred_check_branch
      %202 = sbr.rel (0) target = $region81
    $region80: #{coord_generator_forward.1} parent=1 // pred_region
      %204 = dma.done [#allocation4], 16
    $region81: #{coord_generator_forward.1} parent=1 // pred_fallthru
      _
    // Predicated region
    $region82: #{coord_generator_forward.1} parent=1 // pred_check
      _
    $region83: #{coord_generator_forward.1} parent=1 // pred_check_branch
      %206 = sbr.rel (0) target = $region85
    $region84: #{coord_generator_forward.1} parent=1 // pred_region
      %208 = dma.done [#allocation3], 1536
    $region85: #{coord_generator_forward.1} parent=1 // pred_fallthru
      _
    // Predicated region
    $region86: #{coord_generator_forward.1} parent=1 // pred_check
      _
    $region87: #{coord_generator_forward.1} parent=1 // pred_check_branch
      %210 = sbr.rel (0) target = $region89
    $region88: #{coord_generator_forward.1} parent=1 // pred_region
      %212 = dma.done [#allocation7], 32
    $region89: #{coord_generator_forward.1} parent=1 // pred_fallthru
      _
    // Predicated region
    $region90: #{coord_generator_forward.1} parent=1 // pred_check
      _
    $region91: #{coord_generator_forward.1} parent=1 // pred_check_branch
      %214 = sbr.rel (0) target = $region93
    $region92: #{coord_generator_forward.1} parent=1 // pred_region
      %216 = dma.done [#allocation7], 256
    $region93: #{coord_generator_forward.1} parent=1 // pred_fallthru
      _
    // Predicated region
    $region94: #{coord_generator_forward.1} parent=1 // pred_check
      _
    $region95: #{coord_generator_forward.1} parent=1 // pred_check_branch
      %218 = sbr.rel (0) target = $region97
    $region96: #{coord_generator_forward.1} parent=1 // pred_region
      %220 = dma.done [#allocation10], 256
    $region97: #{coord_generator_forward.1} parent=1 // pred_fallthru
      _
    // Predicated region
    $region98: #{coord_generator_forward.1} parent=1 // pred_check
      _
    $region99: #{coord_generator_forward.1} parent=1 // pred_check_branch
      %222 = sbr.rel (0) target = $region101
    $region100: #{coord_generator_forward.1} parent=1 // pred_region
      %224 = dma.done [#allocation10], 16
    $region101: #{coord_generator_forward.1} parent=1 // pred_fallthru
      _
    // Predicated region
    $region102: #{coord_generator_forward.1} parent=1 // pred_check
      _
    $region103: #{coord_generator_forward.1} parent=1 // pred_check_branch
      %226 = sbr.rel (0) target = $region105
    $region104: #{coord_generator_forward.1} parent=1 // pred_region
      %228 = dma.done [#allocation13], 1536
    $region105: #{coord_generator_forward.1} parent=1 // pred_fallthru
      _
    // Predicated region
    $region106: #{coord_generator_forward.1} parent=1 // pred_check
      _
    $region107: #{coord_generator_forward.1} parent=1 // pred_check_branch
      %230 = sbr.rel (0) target = $region109
    $region108: #{coord_generator_forward.1} parent=1 // pred_region
      %232 = dma.done [#allocation13], 32
    $region109: #{coord_generator_forward.1} parent=1 // pred_fallthru
      _
    // Predicated region
    $region110: #{coord_generator_forward.1} parent=1 // pred_check
      _
    $region111: #{coord_generator_forward.1} parent=1 // pred_check_branch
      %234 = sbr.rel (0) target = $region113
    $region112: #{coord_generator_forward.1} parent=1 // pred_region
      %236 = dma.done [#allocation16], 512
    $region113: #{coord_generator_forward.1} parent=1 // pred_fallthru
      _
    // Predicated region
    $region114: #{coord_generator_forward.1} parent=1 // pred_check
      _
    $region115: #{coord_generator_forward.1} parent=1 // pred_check_branch
      %238 = sbr.rel (0) target = $region117
    $region116: #{coord_generator_forward.1} parent=1 // pred_region
      %240 = dma.done [#allocation16], 16
    $region117: #{coord_generator_forward.1} parent=1 // pred_fallthru
      _
    // Predicated region
    $region118: #{coord_generator_forward.1} parent=1 // pred_check
      _
    $region119: #{coord_generator_forward.1} parent=1 // pred_check_branch
      %242 = sbr.rel (0) target = $region121
    $region120: #{coord_generator_forward.1} parent=1 // pred_region
      %244 = dma.done [#allocation19], 512
    $region121: #{coord_generator_forward.1} parent=1 // pred_fallthru
      _
    // Predicated region
    $region122: #{coord_generator_forward.1} parent=1 // pred_check
      _
    $region123: #{coord_generator_forward.1} parent=1 // pred_check_branch
      %246 = sbr.rel (0) target = $region125
    $region124: #{coord_generator_forward.1} parent=1 // pred_region
      %248 = dma.done [#allocation19], 16
    $region125: #{coord_generator_forward.1} parent=1 // pred_fallthru
      _
    // Predicated region
    $region126: #{coord_generator_forward.1} parent=1 // pred_check
      _
    $region127: #{coord_generator_forward.1} parent=1 // pred_check_branch
      %250 = sbr.rel (0) target = $region129
    $region128: #{coord_generator_forward.1} parent=1 // pred_region
      %252 = dma.done [#allocation22], 16
    $region129: #{coord_generator_forward.1} parent=1 // pred_fallthru
      _
    %253 = sfence
    %v254 = vld [vmem:[%s1] sm:$0xff]
    %v255 = vld [vmem:[%s1 + $0x8] sm:$0xff]
    %v256 = vld [vmem:[%s2] sm:$0x3]
    %v257 = vld [vmem:[#allocation8] sm:$0xff]
    %v258 = vld [vmem:[#allocation8 + $0x8] sm:$0xff]
    %v259 = vld [vmem:[%s7] sm:$0x1]
    %v261 = vperm.slane %v259, 0
    %vm263 = vcmask 130048
    %v265 = vsel %vm263, %v256, 0
    %267 = vmatpush.msra.mxu0 0.0
    %268 = vmatpush.msra.mxu0 0.0
    %269 = vmatpush.msra.mxu0 0.0
    %270 = vmatpush.msra.mxu0 0.0
    %271 = vmatpush.msra.mxu0 0.0
    %272 = vmatpush.msra.mxu0 0.0
    %273 = vmatpush.msra.mxu0 0.0
    %274 = vmatpush.msra.mxu0 0.0
    %275 = vmatpush.msra.mxu0 0.0
    %276 = vmatpush.msra.mxu0 0.0
    %277 = vmatpush.msra.mxu0 0.0
    %278 = vmatpush.msra.mxu0 0.0
    %279 = vmatpush.msra.mxu0 0.0
    %280 = vmatpush.msra.mxu0 0.0
    %281 = vmatpush.msra.mxu0 %v258
    %282 = vmatpush.msra.mxu0 %v257
    %283 = vmatmul.f32.gmra.mxu0 %v265
    %v284 = vpop.f32.mrf.mxu0
    %v285 = vadd.f32 %v261, %v284
    %286 = vdwg.mxu0
    %v287 = vtanh.pop %v285
    %v288 = vld [vmem:[#allocation9] sm:$0xff]
    %v289 = vld [vmem:[#allocation9 + $0x8] sm:$0xff]
    %v290 = vld [vmem:[#allocation11] sm:$0x1]
    %v292 = vperm.slane %v290, 0
    %294 = vmatpush.msra.mxu0 0.0
    %295 = vmatpush.msra.mxu0 0.0
    %296 = vmatpush.msra.mxu0 0.0
    %297 = vmatpush.msra.mxu0 0.0
    %298 = vmatpush.msra.mxu0 0.0
    %299 = vmatpush.msra.mxu0 0.0
    %300 = vmatpush.msra.mxu0 0.0
    %301 = vmatpush.msra.mxu0 0.0
    %302 = vmatpush.msra.mxu0 0.0
    %303 = vmatpush.msra.mxu0 0.0
    %304 = vmatpush.msra.mxu0 0.0
    %305 = vmatpush.msra.mxu0 0.0
    %306 = vmatpush.msra.mxu0 0.0
    %307 = vmatpush.msra.mxu0 0.0
    %308 = vmatpush.msra.mxu0 %v289
    %309 = vmatpush.msra.mxu0 %v288
    %310 = vmatmul.f32.gmra.mxu0 %v265
    %v311 = vpop.f32.mrf.mxu0
    %v312 = vadd.f32 %v292, %v311
    %313 = vdwg.mxu0
    %v314 = vtanh.pop %v312
    %v315 = vld [vmem:[%s3] sm:$0xff]
    %v316 = vld [vmem:[%s3 + $0x8] sm:$0xff]
    %v317 = vld [vmem:[%s3 + $0x10] sm:$0xff]
    %v318 = vld [vmem:[%s3 + $0x18] sm:$0xff]
    %v319 = vld [vmem:[#allocation6] sm:$0x1]
    %v321 = vperm.slane %v319, 0
    %vm323 = vcmask 261120
    %v325 = vsel %vm323, %v254, 0
    %v328 = vsel %vm323, %v255, 0
    %330 = vmatpush.msra.mxu0 0.0
    %331 = vmatpush.msra.mxu0 0.0
    %332 = vmatpush.msra.mxu0 0.0
    %333 = vmatpush.msra.mxu0 0.0
    %334 = vmatpush.msra.mxu0 0.0
    %335 = vmatpush.msra.mxu0 0.0
    %336 = vmatpush.msra.mxu0 0.0
    %337 = vmatpush.msra.mxu0 0.0
    %338 = vmatpush.msra.mxu0 0.0
    %339 = vmatpush.msra.mxu0 0.0
    %340 = vmatpush.msra.mxu0 0.0
    %341 = vmatpush.msra.mxu0 0.0
    %342 = vmatpush.msra.mxu0 %v318
    %343 = vmatpush.msra.mxu0 %v317
    %344 = vmatpush.msra.mxu0 %v316
    %345 = vmatpush.msra.mxu0 %v315
    %346 = vmatmul.f32.gmra.mxu0 %v325
    %v347 = vpop.f32.mrf.mxu0
    %v348 = vadd.f32 %v321, %v347
    %349 = vmatmul.f32.gmra.mxu0 %v328
    %v350 = vpop.f32.mrf.mxu0
    %v351 = vadd.f32 %v321, %v350
    %352 = vdwg.mxu0
    %v353 = vld [vmem:[#allocation5] sm:$0xff]
    %v354 = vld [vmem:[#allocation5 + $0x8] sm:$0xff]
    %v355 = vld [vmem:[#allocation5 + $0x10] sm:$0xff]
    %v356 = vld [vmem:[#allocation5 + $0x18] sm:$0xff]
    %v357 = vld [vmem:[#allocation5 + $0x20] sm:$0xff]
    %v358 = vld [vmem:[#allocation5 + $0x28] sm:$0xff]
    %v359 = vld [vmem:[#allocation5 + $0x30] sm:$0xff]
    %v360 = vld [vmem:[#allocation5 + $0x38] sm:$0xff]
    %v361 = vld [vmem:[#allocation5 + $0x40] sm:$0xff]
    %v362 = vld [vmem:[#allocation5 + $0x48] sm:$0xff]
    %v363 = vld [vmem:[#allocation5 + $0x50] sm:$0xff]
    %v364 = vld [vmem:[#allocation5 + $0x58] sm:$0xff]
    %s365 = scalar_lea.vmem [#allocation6], 1
    %v366 = vld [vmem:[%s365] sm:$0x1]
    %v368 = vperm.slane %v366, 0
    %v370 = vlaneseq
    %v371 = vand.u32 %v370, 127
    %vm372 = vcmp.ge.s32.totalorder %v371, 64
    %vm373 = vcmp.lt.s32.totalorder %v371, 96
    %vm374 = vmand %vm372, %vm373
    %v375 = vsel %vm323, %v287, 0.0
    %vm376 = vcmask 523264
    %v377 = vsel %vm376, %v375, 0.0
    %vm378 = vcmask 785408
    %v380 = vsel %vm378, %v377, 0
    %382 = vmatpush.msra.mxu0 0.0
    %383 = vmatpush.msra.mxu0 0.0
    %384 = vmatpush.msra.mxu0 0.0
    %385 = vmatpush.msra.mxu0 0.0
    %386 = vmatpush.msra.mxu0 %v364
    %387 = vmatpush.msra.mxu0 %v363
    %388 = vmatpush.msra.mxu0 %v362
    %389 = vmatpush.msra.mxu0 %v361
    %390 = vmatpush.msra.mxu0 %v360
    %391 = vmatpush.msra.mxu0 %v359
    %392 = vmatpush.msra.mxu0 %v358
    %393 = vmatpush.msra.mxu0 %v357
    %394 = vmatpush.msra.mxu0 %v356
    %395 = vmatpush.msra.mxu0 %v355
    %396 = vmatpush.msra.mxu0 %v354
    %397 = vmatpush.msra.mxu0 %v353
    %398 = vmatmul.f32.gmra.mxu0 %v380
    %v399 = vpop.f32.mrf.mxu0
    %v400 = vadd.f32 %v348, %v399
    %401 = vdwg.mxu0
    %v402 = vmul.f32 %v400, 2.0
    %v403 = vsel %vm374, 1, 0
    %vm404 = vcmp.eq.s32.totalorder %v403, 1
    %v405 = vsel %vm404, %v402, %v400
    %v406 = vxor.u32 %v405, 2147483648
    %v407 = vmul.f32 %v406, 1.442695
    %v408 = vpow.pop %v407
    %v409 = vadd.f32 %v408, 1.0
    %v410 = vrcp.pop %v409
    %v411 = vmul.f32 %v409, %v410
    %v412 = vsub.f32 1.0, %v411
    %v413 = vmul.f32 %v410, %v412
    %v414 = vadd.f32 %v410, %v413
    %vm415 = vweird.f32 %v409
    %vm416 = vweird.f32 %v410
    %vm417 = vmor %vm415, %vm416
    %v418 = vsel %vm417, %v410, %v414
    %v419 = vand.u32 2147483647, %v409
    %vm420 = vcmp.eq.f32.partialorder %v419, 8.507059e+37
    %v421 = vand.u32 %v409, 2147483648
    %v422 = vor.u32 1.1754944e-38, %v421
    %v423 = vsel %vm420, %v422, %v418
    %v424 = vmul.f32 1.0, %v423
    %v425 = vmul.f32 %v424, 2.0
    %v426 = vsub.f32 %v425, 1.0
    %428 = vrot.lane.b32.xlu0 %v314, 32
    %v429 = vpop.permute.xlu0 %428
    %v431 = vmul.f32 %v424, %v429
    %433 = vrot.lane.b32.xlu0 %v426, 64
    %v434 = vpop.permute.xlu0 %433
    %v436 = vmul.f32 %v424, %v434
    %438 = vrot.lane.b32.xlu0 %v436, 32
    %v439 = vpop.permute.xlu0 %438
    %v441 = vadd.f32 %v431, %v439
    %v442 = vtanh.pop %v441
    %444 = vrot.lane.b32.xlu0 %v442, 64
    %v445 = vpop.permute.xlu0 %444
    %v447 = vmul.f32 %v424, %v445
    %449 = vrot.lane.b32.xlu0 %v447, 32
    %v450 = vpop.permute.xlu0 %449
    %v452 = vsel %vm323, %v450, 0.0
    %v453 = vsel %vm376, %v452, 0.0
    %454 = vrot.lane.b32.xlu0 %v447, 64
    %v455 = vpop.permute.xlu0 %454
    %458 = vrot.lane.b32.xlu0 %v287, 32
    %v459 = vpop.permute.xlu0 %458
    %v461 = vsel %vm323, 0.0, %v455
    %v462 = vsel %vm376, %v461, %v459
    %v464 = vrot.slane %v462, 6
    %vm466 = vcmask 1041408
    %v467 = vsel %vm466, %v453, %v464
    %v469 = vrot.slane %v348, 2
    %v471 = vsel %vm466, %v469, %v368
    %v473 = vsel %vm378, %v467, 0
    %475 = vmatpush.msra.mxu0 0.0
    %476 = vmatpush.msra.mxu0 0.0
    %477 = vmatpush.msra.mxu0 0.0
    %478 = vmatpush.msra.mxu0 0.0
    %479 = vmatpush.msra.mxu0 %v364
    %480 = vmatpush.msra.mxu0 %v363
    %481 = vmatpush.msra.mxu0 %v362
    %482 = vmatpush.msra.mxu0 %v361
    %483 = vmatpush.msra.mxu0 %v360
    %484 = vmatpush.msra.mxu0 %v359
    %485 = vmatpush.msra.mxu0 %v358
    %486 = vmatpush.msra.mxu0 %v357
    %487 = vmatpush.msra.mxu0 %v356
    %488 = vmatpush.msra.mxu0 %v355
    %489 = vmatpush.msra.mxu0 %v354
    %490 = vmatpush.msra.mxu0 %v353
    %491 = vmatmul.f32.gmra.mxu0 %v473
    %v492 = vpop.f32.mrf.mxu0
    %v493 = vadd.f32 %v471, %v492
    %494 = vdwg.mxu0
    %v495 = vrot.slane %v314, 6
    %v497 = vsel %vm466, %v441, %v495
    %v498 = vmul.f32 %v493, 2.0
    %v499 = vsel %vm404, %v498, %v493
    %v500 = vxor.u32 %v499, 2147483648
    %v501 = vmul.f32 %v500, 1.442695
    %v502 = vpow.pop %v501
    %v503 = vadd.f32 %v502, 1.0
    %v504 = vrcp.pop %v503
    %v505 = vmul.f32 %v503, %v504
    %v506 = vsub.f32 1.0, %v505
    %v507 = vmul.f32 %v504, %v506
    %v508 = vadd.f32 %v504, %v507
    %vm509 = vweird.f32 %v503
    %vm510 = vweird.f32 %v504
    %vm511 = vmor %vm509, %vm510
    %v512 = vsel %vm511, %v504, %v508
    %v513 = vand.u32 2147483647, %v503
    %vm514 = vcmp.eq.f32.partialorder %v513, 8.507059e+37
    %v515 = vand.u32 %v503, 2147483648
    %v516 = vor.u32 1.1754944e-38, %v515
    %v517 = vsel %vm514, %v516, %v512
    %v518 = vmul.f32 1.0, %v517
    %v519 = vmul.f32 %v518, 2.0
    %v520 = vsub.f32 %v519, 1.0
    %v521 = vmul.f32 %v518, %v497
    %523 = vrot.lane.b32.xlu0 %v520, 64
    %v524 = vpop.permute.xlu0 %523
    %v526 = vmul.f32 %v518, %v524
    %528 = vrot.lane.b32.xlu0 %v526, 32
    %v529 = vpop.permute.xlu0 %528
    %v531 = vadd.f32 %v521, %v529
    %v532 = vtanh.pop %v531
    %534 = vrot.lane.b32.xlu0 %v532, 64
    %v535 = vpop.permute.xlu0 %534
    %v537 = vmul.f32 %v518, %v535
    %539 = vrot.lane.b32.xlu0 %v537, 32
    %v540 = vpop.permute.xlu0 %539
    %v542 = vsel %vm323, %v540, 0.0
    %v543 = vsel %vm376, %v542, 0.0
    %544 = vrot.lane.b32.xlu0 %v537, 64
    %v545 = vpop.permute.xlu0 %544
    %v547 = vrot.slane %v537, 2
    %548 = vrot.lane.b32.xlu0 %v547, 96
    %v549 = vpop.permute.xlu0 %548
    %v551 = vsel %vm323, 0.0, %v545
    %v552 = vsel %vm376, %v551, %v549
    %v554 = vrot.slane %v552, 6
    %v556 = vsel %vm466, %v543, %v554
    %v557 = vrot.slane %v348, 4
    %v559 = vsel %vm466, %v557, %v368
    %v561 = vsel %vm378, %v556, 0
    %563 = vmatpush.msra.mxu0 0.0
    %564 = vmatpush.msra.mxu0 0.0
    %565 = vmatpush.msra.mxu0 0.0
    %566 = vmatpush.msra.mxu0 0.0
    %567 = vmatpush.msra.mxu0 %v364
    %568 = vmatpush.msra.mxu0 %v363
    %569 = vmatpush.msra.mxu0 %v362
    %570 = vmatpush.msra.mxu0 %v361
    %571 = vmatpush.msra.mxu0 %v360
    %572 = vmatpush.msra.mxu0 %v359
    %573 = vmatpush.msra.mxu0 %v358
    %574 = vmatpush.msra.mxu0 %v357
    %575 = vmatpush.msra.mxu0 %v356
    %576 = vmatpush.msra.mxu0 %v355
    %577 = vmatpush.msra.mxu0 %v354
    %578 = vmatpush.msra.mxu0 %v353
    %579 = vmatmul.f32.gmra.mxu0 %v561
    %v580 = vpop.f32.mrf.mxu0
    %v581 = vadd.f32 %v559, %v580
    %582 = vdwg.mxu0
    %v583 = vmul.f32 %v581, 2.0
    %v584 = vsel %vm404, %v583, %v581
    %v585 = vxor.u32 %v584, 2147483648
    %v586 = vmul.f32 %v585, 1.442695
    %v587 = vpow.pop %v586
    %v588 = vadd.f32 %v587, 1.0
    %v589 = vrcp.pop %v588
    %v590 = vmul.f32 %v588, %v589
    %v591 = vsub.f32 1.0, %v590
    %v592 = vmul.f32 %v589, %v591
    %v593 = vadd.f32 %v589, %v592
    %vm594 = vweird.f32 %v588
    %vm595 = vweird.f32 %v589
    %vm596 = vmor %vm594, %vm595
    %v597 = vsel %vm596, %v589, %v593
    %v598 = vand.u32 2147483647, %v588
    %vm599 = vcmp.eq.f32.partialorder %v598, 8.507059e+37
    %v600 = vand.u32 %v588, 2147483648
    %v601 = vor.u32 1.1754944e-38, %v600
    %v602 = vsel %vm599, %v601, %v597
    %v603 = vmul.f32 1.0, %v602
    %v604 = vmul.f32 %v603, 2.0
    %v605 = vsub.f32 %v604, 1.0
    %v606 = vmul.f32 %v603, %v531
    %608 = vrot.lane.b32.xlu0 %v605, 64
    %v609 = vpop.permute.xlu0 %608
    %v611 = vmul.f32 %v603, %v609
    %613 = vrot.lane.b32.xlu0 %v611, 32
    %v614 = vpop.permute.xlu0 %613
    %v616 = vadd.f32 %v606, %v614
    %v617 = vtanh.pop %v616
    %619 = vrot.lane.b32.xlu0 %v617, 64
    %v620 = vpop.permute.xlu0 %619
    %v622 = vmul.f32 %v603, %v620
    %624 = vrot.lane.b32.xlu0 %v622, 32
    %v625 = vpop.permute.xlu0 %624
    %v627 = vsel %vm323, %v625, 0.0
    %v628 = vsel %vm376, %v627, 0.0
    %629 = vrot.lane.b32.xlu0 %v622, 64
    %v630 = vpop.permute.xlu0 %629
    %v632 = vrot.slane %v622, 2
    %633 = vrot.lane.b32.xlu0 %v632, 96
    %v634 = vpop.permute.xlu0 %633
    %v636 = vsel %vm323, 0.0, %v630
    %v637 = vsel %vm376, %v636, %v634
    %v639 = vrot.slane %v637, 6
    %v641 = vsel %vm466, %v628, %v639
    %v642 = vrot.slane %v348, 6
    %v644 = vsel %vm466, %v642, %v368
    %v646 = vsel %vm378, %v641, 0
    %648 = vmatpush.msra.mxu0 0.0
    %649 = vmatpush.msra.mxu0 0.0
    %650 = vmatpush.msra.mxu0 0.0
    %651 = vmatpush.msra.mxu0 0.0
    %652 = vmatpush.msra.mxu0 %v364
    %653 = vmatpush.msra.mxu0 %v363
    %654 = vmatpush.msra.mxu0 %v362
    %655 = vmatpush.msra.mxu0 %v361
    %656 = vmatpush.msra.mxu0 %v360
    %657 = vmatpush.msra.mxu0 %v359
    %658 = vmatpush.msra.mxu0 %v358
    %659 = vmatpush.msra.mxu0 %v357
    %660 = vmatpush.msra.mxu0 %v356
    %661 = vmatpush.msra.mxu0 %v355
    %662 = vmatpush.msra.mxu0 %v354
    %663 = vmatpush.msra.mxu0 %v353
    %664 = vmatmul.f32.gmra.mxu0 %v646
    %v665 = vpop.f32.mrf.mxu0
    %v666 = vadd.f32 %v644, %v665
    %667 = vdwg.mxu0
    %v668 = vmul.f32 %v666, 2.0
    %v669 = vsel %vm404, %v668, %v666
    %v670 = vxor.u32 %v669, 2147483648
    %v671 = vmul.f32 %v670, 1.442695
    %v672 = vpow.pop %v671
    %v673 = vadd.f32 %v672, 1.0
    %v674 = vrcp.pop %v673
    %v675 = vmul.f32 %v673, %v674
    %v676 = vsub.f32 1.0, %v675
    %v677 = vmul.f32 %v674, %v676
    %v678 = vadd.f32 %v674, %v677
    %vm679 = vweird.f32 %v673
    %vm680 = vweird.f32 %v674
    %vm681 = vmor %vm679, %vm680
    %v682 = vsel %vm681, %v674, %v678
    %v683 = vand.u32 2147483647, %v673
    %vm684 = vcmp.eq.f32.partialorder %v683, 8.507059e+37
    %v685 = vand.u32 %v673, 2147483648
    %v686 = vor.u32 1.1754944e-38, %v685
    %v687 = vsel %vm684, %v686, %v682
    %v688 = vmul.f32 1.0, %v687
    %v689 = vmul.f32 %v688, 2.0
    %v690 = vsub.f32 %v689, 1.0
    %v691 = vmul.f32 %v688, %v616
    %693 = vrot.lane.b32.xlu0 %v690, 64
    %v694 = vpop.permute.xlu0 %693
    %v696 = vmul.f32 %v688, %v694
    %698 = vrot.lane.b32.xlu0 %v696, 32
    %v699 = vpop.permute.xlu0 %698
    %v701 = vadd.f32 %v691, %v699
    %v702 = vtanh.pop %v701
    %704 = vrot.lane.b32.xlu0 %v702, 64
    %v705 = vpop.permute.xlu0 %704
    %v707 = vmul.f32 %v688, %v705
    %709 = vrot.lane.b32.xlu0 %v707, 32
    %v710 = vpop.permute.xlu0 %709
    %v712 = vsel %vm323, %v710, 0.0
    %v713 = vsel %vm376, %v712, 0.0
    %714 = vrot.lane.b32.xlu0 %v707, 64
    %v715 = vpop.permute.xlu0 %714
    %v717 = vrot.slane %v707, 2
    %718 = vrot.lane.b32.xlu0 %v717, 96
    %v719 = vpop.permute.xlu0 %718
    %v721 = vsel %vm323, 0.0, %v715
    %v722 = vsel %vm376, %v721, %v719
    %v724 = vrot.slane %v722, 6
    %v726 = vsel %vm466, %v713, %v724
    %v727 = vsel %vm466, %v351, %v368
    %v729 = vsel %vm378, %v726, 0
    %731 = vmatpush.msra.mxu0 0.0
    %732 = vmatpush.msra.mxu0 0.0
    %733 = vmatpush.msra.mxu0 0.0
    %734 = vmatpush.msra.mxu0 0.0
    %735 = vmatpush.msra.mxu0 %v364
    %736 = vmatpush.msra.mxu0 %v363
    %737 = vmatpush.msra.mxu0 %v362
    %738 = vmatpush.msra.mxu0 %v361
    %739 = vmatpush.msra.mxu0 %v360
    %740 = vmatpush.msra.mxu0 %v359
    %741 = vmatpush.msra.mxu0 %v358
    %742 = vmatpush.msra.mxu0 %v357
    %743 = vmatpush.msra.mxu0 %v356
    %744 = vmatpush.msra.mxu0 %v355
    %745 = vmatpush.msra.mxu0 %v354
    %746 = vmatpush.msra.mxu0 %v353
    %747 = vmatmul.f32.gmra.mxu0 %v729
    %v748 = vpop.f32.mrf.mxu0
    %v749 = vadd.f32 %v727, %v748
    %750 = vdwg.mxu0
    %v751 = vmul.f32 %v749, 2.0
    %v752 = vsel %vm404, %v751, %v749
    %v753 = vxor.u32 %v752, 2147483648
    %v754 = vmul.f32 %v753, 1.442695
    %v755 = vpow.pop %v754
    %v756 = vadd.f32 %v755, 1.0
    %v757 = vrcp.pop %v756
    %v758 = vmul.f32 %v756, %v757
    %v759 = vsub.f32 1.0, %v758
    %v760 = vmul.f32 %v757, %v759
    %v761 = vadd.f32 %v757, %v760
    %vm762 = vweird.f32 %v756
    %vm763 = vweird.f32 %v757
    %vm764 = vmor %vm762, %vm763
    %v765 = vsel %vm764, %v757, %v761
    %v766 = vand.u32 2147483647, %v756
    %vm767 = vcmp.eq.f32.partialorder %v766, 8.507059e+37
    %v768 = vand.u32 %v756, 2147483648
    %v769 = vor.u32 1.1754944e-38, %v768
    %v770 = vsel %vm767, %v769, %v765
    %v771 = vmul.f32 1.0, %v770
    %v772 = vmul.f32 %v771, 2.0
    %v773 = vsub.f32 %v772, 1.0
    %v774 = vmul.f32 %v771, %v701
    %776 = vrot.lane.b32.xlu0 %v773, 64
    %v777 = vpop.permute.xlu0 %776
    %v779 = vmul.f32 %v771, %v777
    %781 = vrot.lane.b32.xlu0 %v779, 32
    %v782 = vpop.permute.xlu0 %781
    %v784 = vadd.f32 %v774, %v782
    %v785 = vtanh.pop %v784
    %787 = vrot.lane.b32.xlu0 %v785, 64
    %v788 = vpop.permute.xlu0 %787
    %v790 = vmul.f32 %v771, %v788
    %792 = vrot.lane.b32.xlu0 %v790, 32
    %v793 = vpop.permute.xlu0 %792
    %v795 = vsel %vm323, %v793, 0.0
    %v796 = vsel %vm376, %v795, 0.0
    %797 = vrot.lane.b32.xlu0 %v790, 64
    %v798 = vpop.permute.xlu0 %797
    %v800 = vrot.slane %v790, 2
    %801 = vrot.lane.b32.xlu0 %v800, 96
    %v802 = vpop.permute.xlu0 %801
    %v804 = vsel %vm323, 0.0, %v798
    %v805 = vsel %vm376, %v804, %v802
    %v807 = vrot.slane %v805, 6
    %v809 = vsel %vm466, %v796, %v807
    %v811 = vrot.slane %v351, 2
    %v813 = vsel %vm466, %v811, %v368
    %v815 = vsel %vm378, %v809, 0
    %817 = vmatpush.msra.mxu0 0.0
    %818 = vmatpush.msra.mxu0 0.0
    %819 = vmatpush.msra.mxu0 0.0
    %820 = vmatpush.msra.mxu0 0.0
    %821 = vmatpush.msra.mxu0 %v364
    %822 = vmatpush.msra.mxu0 %v363
    %823 = vmatpush.msra.mxu0 %v362
    %824 = vmatpush.msra.mxu0 %v361
    %825 = vmatpush.msra.mxu0 %v360
    %826 = vmatpush.msra.mxu0 %v359
    %827 = vmatpush.msra.mxu0 %v358
    %828 = vmatpush.msra.mxu0 %v357
    %829 = vmatpush.msra.mxu0 %v356
    %830 = vmatpush.msra.mxu0 %v355
    %831 = vmatpush.msra.mxu0 %v354
    %832 = vmatpush.msra.mxu0 %v353
    %833 = vmatmul.f32.gmra.mxu0 %v815
    %v834 = vpop.f32.mrf.mxu0
    %v835 = vadd.f32 %v813, %v834
    %836 = vdwg.mxu0
    %v837 = vmul.f32 %v835, 2.0
    %v838 = vsel %vm404, %v837, %v835
    %v839 = vxor.u32 %v838, 2147483648
    %v840 = vmul.f32 %v839, 1.442695
    %v841 = vpow.pop %v840
    %v842 = vadd.f32 %v841, 1.0
    %v843 = vrcp.pop %v842
    %v844 = vmul.f32 %v842, %v843
    %v845 = vsub.f32 1.0, %v844
    %v846 = vmul.f32 %v843, %v845
    %v847 = vadd.f32 %v843, %v846
    %vm848 = vweird.f32 %v842
    %vm849 = vweird.f32 %v843
    %vm850 = vmor %vm848, %vm849
    %v851 = vsel %vm850, %v843, %v847
    %v852 = vand.u32 2147483647, %v842
    %vm853 = vcmp.eq.f32.partialorder %v852, 8.507059e+37
    %v854 = vand.u32 %v842, 2147483648
    %v855 = vor.u32 1.1754944e-38, %v854
    %v856 = vsel %vm853, %v855, %v851
    %v857 = vmul.f32 1.0, %v856
    %v858 = vmul.f32 %v857, 2.0
    %v859 = vsub.f32 %v858, 1.0
    %v860 = vmul.f32 %v857, %v784
    %862 = vrot.lane.b32.xlu0 %v859, 64
    %v863 = vpop.permute.xlu0 %862
    %v865 = vmul.f32 %v857, %v863
    %867 = vrot.lane.b32.xlu0 %v865, 32
    %v868 = vpop.permute.xlu0 %867
    %v870 = vadd.f32 %v860, %v868
    %v871 = vtanh.pop %v870
    %873 = vrot.lane.b32.xlu0 %v871, 64
    %v874 = vpop.permute.xlu0 %873
    %v876 = vmul.f32 %v857, %v874
    %878 = vrot.lane.b32.xlu0 %v876, 32
    %v879 = vpop.permute.xlu0 %878
    %v881 = vsel %vm323, %v879, 0.0
    %v882 = vsel %vm376, %v881, 0.0
    %883 = vrot.lane.b32.xlu0 %v876, 64
    %v884 = vpop.permute.xlu0 %883
    %v886 = vrot.slane %v876, 2
    %887 = vrot.lane.b32.xlu0 %v886, 96
    %v888 = vpop.permute.xlu0 %887
    %v890 = vsel %vm323, 0.0, %v884
    %v891 = vsel %vm376, %v890, %v888
    %v893 = vrot.slane %v891, 6
    %v895 = vsel %vm466, %v882, %v893
    %v896 = vrot.slane %v351, 4
    %v898 = vsel %vm466, %v896, %v368
    %v900 = vsel %vm378, %v895, 0
    %902 = vmatpush.msra.mxu0 0.0
    %903 = vmatpush.msra.mxu0 0.0
    %904 = vmatpush.msra.mxu0 0.0
    %905 = vmatpush.msra.mxu0 0.0
    %906 = vmatpush.msra.mxu0 %v364
    %907 = vmatpush.msra.mxu0 %v363
    %908 = vmatpush.msra.mxu0 %v362
    %909 = vmatpush.msra.mxu0 %v361
    %910 = vmatpush.msra.mxu0 %v360
    %911 = vmatpush.msra.mxu0 %v359
    %912 = vmatpush.msra.mxu0 %v358
    %913 = vmatpush.msra.mxu0 %v357
    %914 = vmatpush.msra.mxu0 %v356
    %915 = vmatpush.msra.mxu0 %v355
    %916 = vmatpush.msra.mxu0 %v354
    %917 = vmatpush.msra.mxu0 %v353
    %918 = vmatmul.f32.gmra.mxu0 %v900
    %v919 = vpop.f32.mrf.mxu0
    %v920 = vadd.f32 %v898, %v919
    %921 = vdwg.mxu0
    %v922 = vmul.f32 %v920, 2.0
    %v923 = vsel %vm404, %v922, %v920
    %v924 = vxor.u32 %v923, 2147483648
    %v925 = vmul.f32 %v924, 1.442695
    %v926 = vpow.pop %v925
    %v927 = vadd.f32 %v926, 1.0
    %v928 = vrcp.pop %v927
    %v929 = vmul.f32 %v927, %v928
    %v930 = vsub.f32 1.0, %v929
    %v931 = vmul.f32 %v928, %v930
    %v932 = vadd.f32 %v928, %v931
    %vm933 = vweird.f32 %v927
    %vm934 = vweird.f32 %v928
    %vm935 = vmor %vm933, %vm934
    %v936 = vsel %vm935, %v928, %v932
    %v937 = vand.u32 2147483647, %v927
    %vm938 = vcmp.eq.f32.partialorder %v937, 8.507059e+37
    %v939 = vand.u32 %v927, 2147483648
    %v940 = vor.u32 1.1754944e-38, %v939
    %v941 = vsel %vm938, %v940, %v936
    %v942 = vmul.f32 1.0, %v941
    %v943 = vmul.f32 %v942, 2.0
    %v944 = vsub.f32 %v943, 1.0
    %v945 = vmul.f32 %v942, %v870
    %947 = vrot.lane.b32.xlu0 %v944, 64
    %v948 = vpop.permute.xlu0 %947
    %v950 = vmul.f32 %v942, %v948
    %952 = vrot.lane.b32.xlu0 %v950, 32
    %v953 = vpop.permute.xlu0 %952
    %v955 = vadd.f32 %v945, %v953
    %v956 = vtanh.pop %v955
    %958 = vrot.lane.b32.xlu0 %v956, 64
    %v959 = vpop.permute.xlu0 %958
    %v961 = vmul.f32 %v942, %v959
    %963 = vrot.lane.b32.xlu0 %v961, 32
    %v964 = vpop.permute.xlu0 %963
    %v966 = vsel %vm323, %v964, 0.0
    %v967 = vsel %vm376, %v966, 0.0
    %968 = vrot.lane.b32.xlu0 %v961, 64
    %v969 = vpop.permute.xlu0 %968
    %v971 = vrot.slane %v961, 2
    %972 = vrot.lane.b32.xlu0 %v971, 96
    %v973 = vpop.permute.xlu0 %972
    %v975 = vsel %vm323, 0.0, %v969
    %v976 = vsel %vm376, %v975, %v973
    %v978 = vrot.slane %v976, 6
    %v980 = vsel %vm466, %v967, %v978
    %v981 = vrot.slane %v351, 6
    %v983 = vsel %vm466, %v981, %v368
    %v985 = vsel %vm378, %v980, 0
    %987 = vmatpush.msra.mxu0 0.0
    %988 = vmatpush.msra.mxu0 0.0
    %989 = vmatpush.msra.mxu0 0.0
    %990 = vmatpush.msra.mxu0 0.0
    %991 = vmatpush.msra.mxu0 %v364
    %992 = vmatpush.msra.mxu0 %v363
    %993 = vmatpush.msra.mxu0 %v362
    %994 = vmatpush.msra.mxu0 %v361
    %995 = vmatpush.msra.mxu0 %v360
    %996 = vmatpush.msra.mxu0 %v359
    %997 = vmatpush.msra.mxu0 %v358
    %998 = vmatpush.msra.mxu0 %v357
    %999 = vmatpush.msra.mxu0 %v356
    %1000 = vmatpush.msra.mxu0 %v355
    %1001 = vmatpush.msra.mxu0 %v354
    %1002 = vmatpush.msra.mxu0 %v353
    %1003 = vmatmul.f32.gmra.mxu0 %v985
    %v1004 = vpop.f32.mrf.mxu0
    %v1005 = vadd.f32 %v983, %v1004
    %1006 = vdwg.mxu0
    %v1007 = vmul.f32 %v1005, 2.0
    %v1008 = vsel %vm404, %v1007, %v1005
    %v1009 = vxor.u32 %v1008, 2147483648
    %v1010 = vmul.f32 %v1009, 1.442695
    %v1011 = vpow.pop %v1010
    %v1012 = vadd.f32 %v1011, 1.0
    %v1013 = vrcp.pop %v1012
    %v1014 = vmul.f32 %v1012, %v1013
    %v1015 = vsub.f32 1.0, %v1014
    %v1016 = vmul.f32 %v1013, %v1015
    %v1017 = vadd.f32 %v1013, %v1016
    %vm1018 = vweird.f32 %v1012
    %vm1019 = vweird.f32 %v1013
    %vm1020 = vmor %vm1018, %vm1019
    %v1021 = vsel %vm1020, %v1013, %v1017
    %v1022 = vand.u32 2147483647, %v1012
    %vm1023 = vcmp.eq.f32.partialorder %v1022, 8.507059e+37
    %v1024 = vand.u32 %v1012, 2147483648
    %v1025 = vor.u32 1.1754944e-38, %v1024
    %v1026 = vsel %vm1023, %v1025, %v1021
    %v1027 = vmul.f32 1.0, %v1026
    %v1028 = vmul.f32 %v1027, 2.0
    %v1029 = vsub.f32 %v1028, 1.0
    %v1030 = vmul.f32 %v1027, %v955
    %1032 = vrot.lane.b32.xlu0 %v1029, 64
    %v1033 = vpop.permute.xlu0 %1032
    %v1035 = vmul.f32 %v1027, %v1033
    %1037 = vrot.lane.b32.xlu0 %v1035, 32
    %v1038 = vpop.permute.xlu0 %1037
    %v1040 = vadd.f32 %v1030, %v1038
    %v1041 = vtanh.pop %v1040
    %1043 = vrot.lane.b32.xlu0 %v1041, 64
    %v1044 = vpop.permute.xlu0 %1043
    %v1046 = vmul.f32 %v1027, %v1044
    %1048 = vrot.lane.b32.xlu0 %v1046, 64
    %v1049 = vpop.permute.xlu0 %1048
    %v1051 = vrot.slane %v1046, 2
    %1052 = vrot.lane.b32.xlu0 %v1051, 96
    %v1053 = vpop.permute.xlu0 %1052
    %v1055 = vsel %vm323, 0.0, %v1049
    %v1056 = vsel %vm376, %v1055, %v1053
    %v1058 = vsel %vm378, %v1056, 0
    %1060 = vmatpush.msra.mxu0 0.0
    %1061 = vmatpush.msra.mxu0 0.0
    %1062 = vmatpush.msra.mxu0 0.0
    %1063 = vmatpush.msra.mxu0 0.0
    %1064 = vmatpush.msra.mxu0 %v364
    %1065 = vmatpush.msra.mxu0 %v363
    %1066 = vmatpush.msra.mxu0 %v362
    %1067 = vmatpush.msra.mxu0 %v361
    %1068 = vmatpush.msra.mxu0 %v360
    %1069 = vmatpush.msra.mxu0 %v359
    %1070 = vmatpush.msra.mxu0 %v358
    %1071 = vmatpush.msra.mxu0 %v357
    %1072 = vmatpush.msra.mxu0 %v356
    %1073 = vmatpush.msra.mxu0 %v355
    %1074 = vmatpush.msra.mxu0 %v354
    %1075 = vmatpush.msra.mxu0 %v353
    %1076 = vmatmul.f32.gmra.mxu0 %v1058
    %v1077 = vpop.f32.mrf.mxu0
    %v1078 = vadd.f32 %v368, %v1077
    %1079 = vdwg.mxu0
    %v1080 = vmul.f32 %v1078, 2.0
    %v1081 = vsel %vm404, %v1080, %v1078
    %v1082 = vxor.u32 %v1081, 2147483648
    %v1083 = vmul.f32 %v1082, 1.442695
    %v1084 = vpow.pop %v1083
    %v1085 = vadd.f32 %v1084, 1.0
    %v1086 = vrcp.pop %v1085
    %v1087 = vmul.f32 %v1085, %v1086
    %v1088 = vsub.f32 1.0, %v1087
    %v1089 = vmul.f32 %v1086, %v1088
    %v1090 = vadd.f32 %v1086, %v1089
    %vm1091 = vweird.f32 %v1085
    %vm1092 = vweird.f32 %v1086
    %vm1093 = vmor %vm1091, %vm1092
    %v1094 = vsel %vm1093, %v1086, %v1090
    %v1095 = vand.u32 2147483647, %v1085
    %vm1096 = vcmp.eq.f32.partialorder %v1095, 8.507059e+37
    %v1097 = vand.u32 %v1085, 2147483648
    %v1098 = vor.u32 1.1754944e-38, %v1097
    %v1099 = vsel %vm1096, %v1098, %v1094
    %v1100 = vmul.f32 1.0, %v1099
    %v1101 = vmul.f32 %v1100, 2.0
    %v1102 = vsub.f32 %v1101, 1.0
    %v1104 = vrot.slane %v1040, 2
    %v1106 = vmul.f32 %v1100, %v1104
    %1108 = vrot.lane.b32.xlu0 %v1102, 64
    %v1109 = vpop.permute.xlu0 %1108
    %v1111 = vmul.f32 %v1100, %v1109
    %1113 = vrot.lane.b32.xlu0 %v1111, 32
    %v1114 = vpop.permute.xlu0 %1113
    %v1116 = vadd.f32 %v1106, %v1114
    %v1117 = vtanh.pop %v1116
    %1119 = vrot.lane.b32.xlu0 %v1117, 64
    %v1120 = vpop.permute.xlu0 %1119
    %v1122 = vmul.f32 %v1100, %v1120
    %v1124 = vrot.slane %v707, 6
    %v1126 = vrot.slane %v790, 4
    %v1129 = vrot.slane %v1046, 6
    %v1132 = vrot.slane %v1122, 2
    %v1134 = vsel %vm466, %v547, %v622
    %vm1135 = vcmask 1043456
    %v1136 = vsel %vm1135, %v1134, %v1124
    %vm1137 = vcmask 1045504
    %v1138 = vsel %vm1137, %v1136, %v1126
    %v1139 = vsel %vm466, %v886, %v961
    %v1140 = vsel %vm1135, %v1139, %v1129
    %v1141 = vsel %vm1137, %v1140, %v1132
    %v1142 = vlaneseq
    %v1143 = vshrl.u32 %v1142, 7
    %s1144 = sld [smem:[#allocation2]]
    %p1145 = scmp.gt.s32.totalorder %s1144, 0
    %s1146 = scalar_select %p1145, %s1144, 0
    %p1147 = scmp.lt.s32.totalorder %s1146, 7
    %s1148 = scalar_select %p1147, %s1146, 7
    %s1149 = smul.u32 %s1148, 2
    %vm1150 = vcmp.eq.s32.totalorder %v1143, 0
    %v1151 = vstv %s1149
    %v1152 = vsel %vm1150, %v1151, 0
    %s1153 = sld [smem:[#allocation2 + $0x1]]
    %p1154 = scmp.gt.s32.totalorder %s1153, 0
    %s1155 = scalar_select %p1154, %s1153, 0
    %p1156 = scmp.lt.s32.totalorder %s1155, 7
    %s1157 = scalar_select %p1156, %s1155, 7
    %s1158 = smul.u32 %s1157, 2
    %s1159 = sadd.s32 %s1158, 1
    %vm1160 = vcmp.eq.s32.totalorder %v1143, 1
    %v1161 = vstv %s1159
    %v1162 = vsel %vm1160, %v1161, %v1152
    %vm1163 = vcmp.eq.s32.totalorder %v371, %v1162
    %v1164 = vsel %vm1163, 1, 0
    %v1165 = vcvt.s32.f32 %v1164
    %1168 = vrot.lane.b32.xlu0 %v1138, 32
    %v1169 = vpop.permute.xlu0 %1168
    %1170 = vrot.lane.b32.xlu0 %v1141, 32
    %v1171 = vpop.permute.xlu0 %1170
    %v1175 = vsel %vm263, %v1165, 0
    %1177 = vmatpush.msra.mxu0 0.0
    %1178 = vmatpush.msra.mxu0 0.0
    %1179 = vmatpush.msra.mxu0 0.0
    %1180 = vmatpush.msra.mxu0 0.0
    %1181 = vmatpush.msra.mxu0 0.0
    %1182 = vmatpush.msra.mxu0 0.0
    %1183 = vmatpush.msra.mxu0 0.0
    %1184 = vmatpush.msra.mxu0 0.0
    %1185 = vmatpush.msra.mxu0 0.0
    %1186 = vmatpush.msra.mxu0 0.0
    %1187 = vmatpush.msra.mxu0 0.0
    %1188 = vmatpush.msra.mxu0 0.0
    %1189 = vmatpush.msra.mxu0 0.0
    %1190 = vmatpush.msra.mxu0 0.0
    %1191 = vmatpush.msra.mxu0 %v1171
    %1192 = vmatpush.msra.mxu0 %v1169
    %1193 = vmatmul.f32.gmra.mxu0 %v1175
    %v1194 = vpop.f32.mrf.mxu0
    %v1195 = vadd.f32 0.0, %v1194
    %1196 = vdwg.mxu0
    %v1197 = vld [vmem:[#allocation15] sm:$0xff]
    %v1198 = vld [vmem:[#allocation15 + $0x8] sm:$0xff]
    %v1199 = vld [vmem:[#allocation15 + $0x10] sm:$0xff]
    %v1200 = vld [vmem:[#allocation15 + $0x18] sm:$0xff]
    %v1201 = vld [vmem:[#allocation17] sm:$0x1]
    %v1203 = vperm.slane %v1201, 0
    %v1206 = vsel %vm323, %v1195, 0
    %1208 = vmatpush.msra.mxu0 0.0
    %1209 = vmatpush.msra.mxu0 0.0
    %1210 = vmatpush.msra.mxu0 0.0
    %1211 = vmatpush.msra.mxu0 0.0
    %1212 = vmatpush.msra.mxu0 0.0
    %1213 = vmatpush.msra.mxu0 0.0
    %1214 = vmatpush.msra.mxu0 0.0
    %1215 = vmatpush.msra.mxu0 0.0
    %1216 = vmatpush.msra.mxu0 0.0
    %1217 = vmatpush.msra.mxu0 0.0
    %1218 = vmatpush.msra.mxu0 0.0
    %1219 = vmatpush.msra.mxu0 0.0
    %1220 = vmatpush.msra.mxu0 %v1200
    %1221 = vmatpush.msra.mxu0 %v1199
    %1222 = vmatpush.msra.mxu0 %v1198
    %1223 = vmatpush.msra.mxu0 %v1197
    %1224 = vmatmul.f32.gmra.mxu0 %v1206
    %v1225 = vpop.f32.mrf.mxu0
    %v1226 = vadd.f32 %v1203, %v1225
    %1227 = vdwg.mxu0
    %v1228 = vtanh.pop %v1226
    %v1229 = vld [vmem:[#allocation18] sm:$0xff]
    %v1230 = vld [vmem:[#allocation18 + $0x8] sm:$0xff]
    %v1231 = vld [vmem:[#allocation18 + $0x10] sm:$0xff]
    %v1232 = vld [vmem:[#allocation18 + $0x18] sm:$0xff]
    %v1233 = vld [vmem:[#allocation20] sm:$0x1]
    %v1235 = vperm.slane %v1233, 0
    %1237 = vmatpush.msra.mxu0 0.0
    %1238 = vmatpush.msra.mxu0 0.0
    %1239 = vmatpush.msra.mxu0 0.0
    %1240 = vmatpush.msra.mxu0 0.0
    %1241 = vmatpush.msra.mxu0 0.0
    %1242 = vmatpush.msra.mxu0 0.0
    %1243 = vmatpush.msra.mxu0 0.0
    %1244 = vmatpush.msra.mxu0 0.0
    %1245 = vmatpush.msra.mxu0 0.0
    %1246 = vmatpush.msra.mxu0 0.0
    %1247 = vmatpush.msra.mxu0 0.0
    %1248 = vmatpush.msra.mxu0 0.0
    %1249 = vmatpush.msra.mxu0 %v1232
    %1250 = vmatpush.msra.mxu0 %v1231
    %1251 = vmatpush.msra.mxu0 %v1230
    %1252 = vmatpush.msra.mxu0 %v1229
    %1253 = vmatmul.f32.gmra.mxu0 %v1206
    %v1254 = vpop.f32.mrf.mxu0
    %v1255 = vadd.f32 %v1235, %v1254
    %1256 = vdwg.mxu0
    %v1257 = vtanh.pop %v1255
    %v1258 = vld [vmem:[%s10] sm:$0xff]
    %v1259 = vld [vmem:[%s10 + $0x8] sm:$0xff]
    %v1260 = vld [vmem:[%s10 + $0x10] sm:$0xff]
    %v1261 = vld [vmem:[%s10 + $0x18] sm:$0xff]
    %v1262 = vld [vmem:[#allocation14] sm:$0x1]
    %v1264 = vperm.slane %v1262, 0
    %v1266 = vsel %vm323, %v1169, 0
    %v1268 = vsel %vm323, %v1171, 0
    %1270 = vmatpush.msra.mxu0 0.0
    %1271 = vmatpush.msra.mxu0 0.0
    %1272 = vmatpush.msra.mxu0 0.0
    %1273 = vmatpush.msra.mxu0 0.0
    %1274 = vmatpush.msra.mxu0 0.0
    %1275 = vmatpush.msra.mxu0 0.0
    %1276 = vmatpush.msra.mxu0 0.0
    %1277 = vmatpush.msra.mxu0 0.0
    %1278 = vmatpush.msra.mxu0 0.0
    %1279 = vmatpush.msra.mxu0 0.0
    %1280 = vmatpush.msra.mxu0 0.0
    %1281 = vmatpush.msra.mxu0 0.0
    %1282 = vmatpush.msra.mxu0 %v1261
    %1283 = vmatpush.msra.mxu0 %v1260
    %1284 = vmatpush.msra.mxu0 %v1259
    %1285 = vmatpush.msra.mxu0 %v1258
    %1286 = vmatmul.f32.gmra.mxu0 %v1266
    %v1287 = vpop.f32.mrf.mxu0
    %v1288 = vadd.f32 %v1264, %v1287
    %1289 = vmatmul.f32.gmra.mxu0 %v1268
    %v1290 = vpop.f32.mrf.mxu0
    %v1291 = vadd.f32 %v1264, %v1290
    %1292 = vdwg.mxu0
    %v1293 = vld [vmem:[#allocation12] sm:$0xff]
    %v1294 = vld [vmem:[#allocation12 + $0x8] sm:$0xff]
    %v1295 = vld [vmem:[#allocation12 + $0x10] sm:$0xff]
    %v1296 = vld [vmem:[#allocation12 + $0x18] sm:$0xff]
    %v1297 = vld [vmem:[#allocation12 + $0x20] sm:$0xff]
    %v1298 = vld [vmem:[#allocation12 + $0x28] sm:$0xff]
    %v1299 = vld [vmem:[#allocation12 + $0x30] sm:$0xff]
    %v1300 = vld [vmem:[#allocation12 + $0x38] sm:$0xff]
    %v1301 = vld [vmem:[#allocation12 + $0x40] sm:$0xff]
    %v1302 = vld [vmem:[#allocation12 + $0x48] sm:$0xff]
    %v1303 = vld [vmem:[#allocation12 + $0x50] sm:$0xff]
    %v1304 = vld [vmem:[#allocation12 + $0x58] sm:$0xff]
    %s1305 = scalar_lea.vmem [#allocation14], 1
    %v1306 = vld [vmem:[%s1305] sm:$0x1]
    %v1308 = vperm.slane %v1306, 0
    %v1310 = vsel %vm323, %v1228, 0.0
    %v1311 = vsel %vm376, %v1310, 0.0
    %v1313 = vsel %vm378, %v1311, 0
    %1315 = vmatpush.msra.mxu0 0.0
    %1316 = vmatpush.msra.mxu0 0.0
    %1317 = vmatpush.msra.mxu0 0.0
    %1318 = vmatpush.msra.mxu0 0.0
    %1319 = vmatpush.msra.mxu0 %v1304
    %1320 = vmatpush.msra.mxu0 %v1303
    %1321 = vmatpush.msra.mxu0 %v1302
    %1322 = vmatpush.msra.mxu0 %v1301
    %1323 = vmatpush.msra.mxu0 %v1300
    %1324 = vmatpush.msra.mxu0 %v1299
    %1325 = vmatpush.msra.mxu0 %v1298
    %1326 = vmatpush.msra.mxu0 %v1297
    %1327 = vmatpush.msra.mxu0 %v1296
    %1328 = vmatpush.msra.mxu0 %v1295
    %1329 = vmatpush.msra.mxu0 %v1294
    %1330 = vmatpush.msra.mxu0 %v1293
    %1331 = vmatmul.f32.gmra.mxu0 %v1313
    %v1332 = vpop.f32.mrf.mxu0
    %v1333 = vadd.f32 %v1288, %v1332
    %1334 = vdwg.mxu0
    %v1335 = vmul.f32 %v1333, 2.0
    %v1336 = vsel %vm404, %v1335, %v1333
    %v1337 = vxor.u32 %v1336, 2147483648
    %v1338 = vmul.f32 %v1337, 1.442695
    %v1339 = vpow.pop %v1338
    %v1340 = vadd.f32 %v1339, 1.0
    %v1341 = vrcp.pop %v1340
    %v1342 = vmul.f32 %v1340, %v1341
    %v1343 = vsub.f32 1.0, %v1342
    %v1344 = vmul.f32 %v1341, %v1343
    %v1345 = vadd.f32 %v1341, %v1344
    %vm1346 = vweird.f32 %v1340
    %vm1347 = vweird.f32 %v1341
    %vm1348 = vmor %vm1346, %vm1347
    %v1349 = vsel %vm1348, %v1341, %v1345
    %v1350 = vand.u32 2147483647, %v1340
    %vm1351 = vcmp.eq.f32.partialorder %v1350, 8.507059e+37
    %v1352 = vand.u32 %v1340, 2147483648
    %v1353 = vor.u32 1.1754944e-38, %v1352
    %v1354 = vsel %vm1351, %v1353, %v1349
    %v1355 = vmul.f32 1.0, %v1354
    %v1356 = vmul.f32 %v1355, 2.0
    %v1357 = vsub.f32 %v1356, 1.0
    %1359 = vrot.lane.b32.xlu0 %v1257, 32
    %v1360 = vpop.permute.xlu0 %1359
    %v1362 = vmul.f32 %v1355, %v1360
    %1364 = vrot.lane.b32.xlu0 %v1357, 64
    %v1365 = vpop.permute.xlu0 %1364
    %v1367 = vmul.f32 %v1355, %v1365
    %1369 = vrot.lane.b32.xlu0 %v1367, 32
    %v1370 = vpop.permute.xlu0 %1369
    %v1372 = vadd.f32 %v1362, %v1370
    %v1373 = vtanh.pop %v1372
    %1375 = vrot.lane.b32.xlu0 %v1373, 64
    %v1376 = vpop.permute.xlu0 %1375
    %v1378 = vmul.f32 %v1355, %v1376
    %1380 = vrot.lane.b32.xlu0 %v1378, 32
    %v1381 = vpop.permute.xlu0 %1380
    %v1383 = vsel %vm323, %v1381, 0.0
    %v1384 = vsel %vm376, %v1383, 0.0
    %1385 = vrot.lane.b32.xlu0 %v1378, 64
    %v1386 = vpop.permute.xlu0 %1385
    %1389 = vrot.lane.b32.xlu0 %v1228, 32
    %v1390 = vpop.permute.xlu0 %1389
    %v1392 = vsel %vm323, 0.0, %v1386
    %v1393 = vsel %vm376, %v1392, %v1390
    %v1395 = vrot.slane %v1393, 6
    %v1397 = vsel %vm466, %v1384, %v1395
    %v1399 = vrot.slane %v1288, 2
    %v1401 = vsel %vm466, %v1399, %v1308
    %v1403 = vsel %vm378, %v1397, 0
    %1405 = vmatpush.msra.mxu0 0.0
    %1406 = vmatpush.msra.mxu0 0.0
    %1407 = vmatpush.msra.mxu0 0.0
    %1408 = vmatpush.msra.mxu0 0.0
    %1409 = vmatpush.msra.mxu0 %v1304
    %1410 = vmatpush.msra.mxu0 %v1303
    %1411 = vmatpush.msra.mxu0 %v1302
    %1412 = vmatpush.msra.mxu0 %v1301
    %1413 = vmatpush.msra.mxu0 %v1300
    %1414 = vmatpush.msra.mxu0 %v1299
    %1415 = vmatpush.msra.mxu0 %v1298
    %1416 = vmatpush.msra.mxu0 %v1297
    %1417 = vmatpush.msra.mxu0 %v1296
    %1418 = vmatpush.msra.mxu0 %v1295
    %1419 = vmatpush.msra.mxu0 %v1294
    %1420 = vmatpush.msra.mxu0 %v1293
    %1421 = vmatmul.f32.gmra.mxu0 %v1403
    %v1422 = vpop.f32.mrf.mxu0
    %v1423 = vadd.f32 %v1401, %v1422
    %1424 = vdwg.mxu0
    %v1425 = vrot.slane %v1257, 6
    %v1427 = vsel %vm466, %v1372, %v1425
    %v1428 = vmul.f32 %v1423, 2.0
    %v1429 = vsel %vm404, %v1428, %v1423
    %v1430 = vxor.u32 %v1429, 2147483648
    %v1431 = vmul.f32 %v1430, 1.442695
    %v1432 = vpow.pop %v1431
    %v1433 = vadd.f32 %v1432, 1.0
    %v1434 = vrcp.pop %v1433
    %v1435 = vmul.f32 %v1433, %v1434
    %v1436 = vsub.f32 1.0, %v1435
    %v1437 = vmul.f32 %v1434, %v1436
    %v1438 = vadd.f32 %v1434, %v1437
    %vm1439 = vweird.f32 %v1433
    %vm1440 = vweird.f32 %v1434
    %vm1441 = vmor %vm1439, %vm1440
    %v1442 = vsel %vm1441, %v1434, %v1438
    %v1443 = vand.u32 2147483647, %v1433
    %vm1444 = vcmp.eq.f32.partialorder %v1443, 8.507059e+37
    %v1445 = vand.u32 %v1433, 2147483648
    %v1446 = vor.u32 1.1754944e-38, %v1445
    %v1447 = vsel %vm1444, %v1446, %v1442
    %v1448 = vmul.f32 1.0, %v1447
    %v1449 = vmul.f32 %v1448, 2.0
    %v1450 = vsub.f32 %v1449, 1.0
    %v1451 = vmul.f32 %v1448, %v1427
    %1453 = vrot.lane.b32.xlu0 %v1450, 64
    %v1454 = vpop.permute.xlu0 %1453
    %v1456 = vmul.f32 %v1448, %v1454
    %1458 = vrot.lane.b32.xlu0 %v1456, 32
    %v1459 = vpop.permute.xlu0 %1458
    %v1461 = vadd.f32 %v1451, %v1459
    %v1462 = vtanh.pop %v1461
    %1464 = vrot.lane.b32.xlu0 %v1462, 64
    %v1465 = vpop.permute.xlu0 %1464
    %v1467 = vmul.f32 %v1448, %v1465
    %1469 = vrot.lane.b32.xlu0 %v1467, 32
    %v1470 = vpop.permute.xlu0 %1469
    %v1472 = vsel %vm323, %v1470, 0.0
    %v1473 = vsel %vm376, %v1472, 0.0
    %1474 = vrot.lane.b32.xlu0 %v1467, 64
    %v1475 = vpop.permute.xlu0 %1474
    %v1477 = vrot.slane %v1467, 2
    %1478 = vrot.lane.b32.xlu0 %v1477, 96
    %v1479 = vpop.permute.xlu0 %1478
    %v1481 = vsel %vm323, 0.0, %v1475
    %v1482 = vsel %vm376, %v1481, %v1479
    %v1484 = vrot.slane %v1482, 6
    %v1486 = vsel %vm466, %v1473, %v1484
    %v1487 = vrot.slane %v1288, 4
    %v1489 = vsel %vm466, %v1487, %v1308
    %v1491 = vsel %vm378, %v1486, 0
    %1493 = vmatpush.msra.mxu0 0.0
    %1494 = vmatpush.msra.mxu0 0.0
    %1495 = vmatpush.msra.mxu0 0.0
    %1496 = vmatpush.msra.mxu0 0.0
    %1497 = vmatpush.msra.mxu0 %v1304
    %1498 = vmatpush.msra.mxu0 %v1303
    %1499 = vmatpush.msra.mxu0 %v1302
    %1500 = vmatpush.msra.mxu0 %v1301
    %1501 = vmatpush.msra.mxu0 %v1300
    %1502 = vmatpush.msra.mxu0 %v1299
    %1503 = vmatpush.msra.mxu0 %v1298
    %1504 = vmatpush.msra.mxu0 %v1297
    %1505 = vmatpush.msra.mxu0 %v1296
    %1506 = vmatpush.msra.mxu0 %v1295
    %1507 = vmatpush.msra.mxu0 %v1294
    %1508 = vmatpush.msra.mxu0 %v1293
    %1509 = vmatmul.f32.gmra.mxu0 %v1491
    %v1510 = vpop.f32.mrf.mxu0
    %v1511 = vadd.f32 %v1489, %v1510
    %1512 = vdwg.mxu0
    %v1513 = vmul.f32 %v1511, 2.0
    %v1514 = vsel %vm404, %v1513, %v1511
    %v1515 = vxor.u32 %v1514, 2147483648
    %v1516 = vmul.f32 %v1515, 1.442695
    %v1517 = vpow.pop %v1516
    %v1518 = vadd.f32 %v1517, 1.0
    %v1519 = vrcp.pop %v1518
    %v1520 = vmul.f32 %v1518, %v1519
    %v1521 = vsub.f32 1.0, %v1520
    %v1522 = vmul.f32 %v1519, %v1521
    %v1523 = vadd.f32 %v1519, %v1522
    %vm1524 = vweird.f32 %v1518
    %vm1525 = vweird.f32 %v1519
    %vm1526 = vmor %vm1524, %vm1525
    %v1527 = vsel %vm1526, %v1519, %v1523
    %v1528 = vand.u32 2147483647, %v1518
    %vm1529 = vcmp.eq.f32.partialorder %v1528, 8.507059e+37
    %v1530 = vand.u32 %v1518, 2147483648
    %v1531 = vor.u32 1.1754944e-38, %v1530
    %v1532 = vsel %vm1529, %v1531, %v1527
    %v1533 = vmul.f32 1.0, %v1532
    %v1534 = vmul.f32 %v1533, 2.0
    %v1535 = vsub.f32 %v1534, 1.0
    %v1536 = vmul.f32 %v1533, %v1461
    %1538 = vrot.lane.b32.xlu0 %v1535, 64
    %v1539 = vpop.permute.xlu0 %1538
    %v1541 = vmul.f32 %v1533, %v1539
    %1543 = vrot.lane.b32.xlu0 %v1541, 32
    %v1544 = vpop.permute.xlu0 %1543
    %v1546 = vadd.f32 %v1536, %v1544
    %v1547 = vtanh.pop %v1546
    %1549 = vrot.lane.b32.xlu0 %v1547, 64
    %v1550 = vpop.permute.xlu0 %1549
    %v1552 = vmul.f32 %v1533, %v1550
    %1554 = vrot.lane.b32.xlu0 %v1552, 32
    %v1555 = vpop.permute.xlu0 %1554
    %v1557 = vsel %vm323, %v1555, 0.0
    %v1558 = vsel %vm376, %v1557, 0.0
    %1559 = vrot.lane.b32.xlu0 %v1552, 64
    %v1560 = vpop.permute.xlu0 %1559
    %v1562 = vrot.slane %v1552, 2
    %1563 = vrot.lane.b32.xlu0 %v1562, 96
    %v1564 = vpop.permute.xlu0 %1563
    %v1566 = vsel %vm323, 0.0, %v1560
    %v1567 = vsel %vm376, %v1566, %v1564
    %v1569 = vrot.slane %v1567, 6
    %v1571 = vsel %vm466, %v1558, %v1569
    %v1572 = vrot.slane %v1288, 6
    %v1574 = vsel %vm466, %v1572, %v1308
    %v1576 = vsel %vm378, %v1571, 0
    %1578 = vmatpush.msra.mxu0 0.0
    %1579 = vmatpush.msra.mxu0 0.0
    %1580 = vmatpush.msra.mxu0 0.0
    %1581 = vmatpush.msra.mxu0 0.0
    %1582 = vmatpush.msra.mxu0 %v1304
    %1583 = vmatpush.msra.mxu0 %v1303
    %1584 = vmatpush.msra.mxu0 %v1302
    %1585 = vmatpush.msra.mxu0 %v1301
    %1586 = vmatpush.msra.mxu0 %v1300
    %1587 = vmatpush.msra.mxu0 %v1299
    %1588 = vmatpush.msra.mxu0 %v1298
    %1589 = vmatpush.msra.mxu0 %v1297
    %1590 = vmatpush.msra.mxu0 %v1296
    %1591 = vmatpush.msra.mxu0 %v1295
    %1592 = vmatpush.msra.mxu0 %v1294
    %1593 = vmatpush.msra.mxu0 %v1293
    %1594 = vmatmul.f32.gmra.mxu0 %v1576
    %v1595 = vpop.f32.mrf.mxu0
    %v1596 = vadd.f32 %v1574, %v1595
    %1597 = vdwg.mxu0
    %v1598 = vmul.f32 %v1596, 2.0
    %v1599 = vsel %vm404, %v1598, %v1596
    %v1600 = vxor.u32 %v1599, 2147483648
    %v1601 = vmul.f32 %v1600, 1.442695
    %v1602 = vpow.pop %v1601
    %v1603 = vadd.f32 %v1602, 1.0
    %v1604 = vrcp.pop %v1603
    %v1605 = vmul.f32 %v1603, %v1604
    %v1606 = vsub.f32 1.0, %v1605
    %v1607 = vmul.f32 %v1604, %v1606
    %v1608 = vadd.f32 %v1604, %v1607
    %vm1609 = vweird.f32 %v1603
    %vm1610 = vweird.f32 %v1604
    %vm1611 = vmor %vm1609, %vm1610
    %v1612 = vsel %vm1611, %v1604, %v1608
    %v1613 = vand.u32 2147483647, %v1603
    %vm1614 = vcmp.eq.f32.partialorder %v1613, 8.507059e+37
    %v1615 = vand.u32 %v1603, 2147483648
    %v1616 = vor.u32 1.1754944e-38, %v1615
    %v1617 = vsel %vm1614, %v1616, %v1612
    %v1618 = vmul.f32 1.0, %v1617
    %v1619 = vmul.f32 %v1618, 2.0
    %v1620 = vsub.f32 %v1619, 1.0
    %v1621 = vmul.f32 %v1618, %v1546
    %1623 = vrot.lane.b32.xlu0 %v1620, 64
    %v1624 = vpop.permute.xlu0 %1623
    %v1626 = vmul.f32 %v1618, %v1624
    %1628 = vrot.lane.b32.xlu0 %v1626, 32
    %v1629 = vpop.permute.xlu0 %1628
    %v1631 = vadd.f32 %v1621, %v1629
    %v1632 = vtanh.pop %v1631
    %1634 = vrot.lane.b32.xlu0 %v1632, 64
    %v1635 = vpop.permute.xlu0 %1634
    %v1637 = vmul.f32 %v1618, %v1635
    %1639 = vrot.lane.b32.xlu0 %v1637, 32
    %v1640 = vpop.permute.xlu0 %1639
    %v1642 = vsel %vm323, %v1640, 0.0
    %v1643 = vsel %vm376, %v1642, 0.0
    %1644 = vrot.lane.b32.xlu0 %v1637, 64
    %v1645 = vpop.permute.xlu0 %1644
    %v1647 = vrot.slane %v1637, 2
    %1648 = vrot.lane.b32.xlu0 %v1647, 96
    %v1649 = vpop.permute.xlu0 %1648
    %v1651 = vsel %vm323, 0.0, %v1645
    %v1652 = vsel %vm376, %v1651, %v1649
    %v1654 = vrot.slane %v1652, 6
    %v1656 = vsel %vm466, %v1643, %v1654
    %v1657 = vsel %vm466, %v1291, %v1308
    %v1659 = vsel %vm378, %v1656, 0
    %1661 = vmatpush.msra.mxu0 0.0
    %1662 = vmatpush.msra.mxu0 0.0
    %1663 = vmatpush.msra.mxu0 0.0
    %1664 = vmatpush.msra.mxu0 0.0
    %1665 = vmatpush.msra.mxu0 %v1304
    %1666 = vmatpush.msra.mxu0 %v1303
    %1667 = vmatpush.msra.mxu0 %v1302
    %1668 = vmatpush.msra.mxu0 %v1301
    %1669 = vmatpush.msra.mxu0 %v1300
    %1670 = vmatpush.msra.mxu0 %v1299
    %1671 = vmatpush.msra.mxu0 %v1298
    %1672 = vmatpush.msra.mxu0 %v1297
    %1673 = vmatpush.msra.mxu0 %v1296
    %1674 = vmatpush.msra.mxu0 %v1295
    %1675 = vmatpush.msra.mxu0 %v1294
    %1676 = vmatpush.msra.mxu0 %v1293
    %1677 = vmatmul.f32.gmra.mxu0 %v1659
    %v1678 = vpop.f32.mrf.mxu0
    %v1679 = vadd.f32 %v1657, %v1678
    %1680 = vdwg.mxu0
    %v1681 = vmul.f32 %v1679, 2.0
    %v1682 = vsel %vm404, %v1681, %v1679
    %v1683 = vxor.u32 %v1682, 2147483648
    %v1684 = vmul.f32 %v1683, 1.442695
    %v1685 = vpow.pop %v1684
    %v1686 = vadd.f32 %v1685, 1.0
    %v1687 = vrcp.pop %v1686
    %v1688 = vmul.f32 %v1686, %v1687
    %v1689 = vsub.f32 1.0, %v1688
    %v1690 = vmul.f32 %v1687, %v1689
    %v1691 = vadd.f32 %v1687, %v1690
    %vm1692 = vweird.f32 %v1686
    %vm1693 = vweird.f32 %v1687
    %vm1694 = vmor %vm1692, %vm1693
    %v1695 = vsel %vm1694, %v1687, %v1691
    %v1696 = vand.u32 2147483647, %v1686
    %vm1697 = vcmp.eq.f32.partialorder %v1696, 8.507059e+37
    %v1698 = vand.u32 %v1686, 2147483648
    %v1699 = vor.u32 1.1754944e-38, %v1698
    %v1700 = vsel %vm1697, %v1699, %v1695
    %v1701 = vmul.f32 1.0, %v1700
    %v1702 = vmul.f32 %v1701, 2.0
    %v1703 = vsub.f32 %v1702, 1.0
    %v1704 = vmul.f32 %v1701, %v1631
    %1706 = vrot.lane.b32.xlu0 %v1703, 64
    %v1707 = vpop.permute.xlu0 %1706
    %v1709 = vmul.f32 %v1701, %v1707
    %1711 = vrot.lane.b32.xlu0 %v1709, 32
    %v1712 = vpop.permute.xlu0 %1711
    %v1714 = vadd.f32 %v1704, %v1712
    %v1715 = vtanh.pop %v1714
    %1717 = vrot.lane.b32.xlu0 %v1715, 64
    %v1718 = vpop.permute.xlu0 %1717
    %v1720 = vmul.f32 %v1701, %v1718
    %1722 = vrot.lane.b32.xlu0 %v1720, 32
    %v1723 = vpop.permute.xlu0 %1722
    %v1725 = vsel %vm323, %v1723, 0.0
    %v1726 = vsel %vm376, %v1725, 0.0
    %1727 = vrot.lane.b32.xlu0 %v1720, 64
    %v1728 = vpop.permute.xlu0 %1727
    %v1730 = vrot.slane %v1720, 2
    %1731 = vrot.lane.b32.xlu0 %v1730, 96
    %v1732 = vpop.permute.xlu0 %1731
    %v1734 = vsel %vm323, 0.0, %v1728
    %v1735 = vsel %vm376, %v1734, %v1732
    %v1737 = vrot.slane %v1735, 6
    %v1739 = vsel %vm466, %v1726, %v1737
    %v1741 = vrot.slane %v1291, 2
    %v1743 = vsel %vm466, %v1741, %v1308
    %v1745 = vsel %vm378, %v1739, 0
    %1747 = vmatpush.msra.mxu0 0.0
    %1748 = vmatpush.msra.mxu0 0.0
    %1749 = vmatpush.msra.mxu0 0.0
    %1750 = vmatpush.msra.mxu0 0.0
    %1751 = vmatpush.msra.mxu0 %v1304
    %1752 = vmatpush.msra.mxu0 %v1303
    %1753 = vmatpush.msra.mxu0 %v1302
    %1754 = vmatpush.msra.mxu0 %v1301
    %1755 = vmatpush.msra.mxu0 %v1300
    %1756 = vmatpush.msra.mxu0 %v1299
    %1757 = vmatpush.msra.mxu0 %v1298
    %1758 = vmatpush.msra.mxu0 %v1297
    %1759 = vmatpush.msra.mxu0 %v1296
    %1760 = vmatpush.msra.mxu0 %v1295
    %1761 = vmatpush.msra.mxu0 %v1294
    %1762 = vmatpush.msra.mxu0 %v1293
    %1763 = vmatmul.f32.gmra.mxu0 %v1745
    %v1764 = vpop.f32.mrf.mxu0
    %v1765 = vadd.f32 %v1743, %v1764
    %1766 = vdwg.mxu0
    %v1767 = vmul.f32 %v1765, 2.0
    %v1768 = vsel %vm404, %v1767, %v1765
    %v1769 = vxor.u32 %v1768, 2147483648
    %v1770 = vmul.f32 %v1769, 1.442695
    %v1771 = vpow.pop %v1770
    %v1772 = vadd.f32 %v1771, 1.0
    %v1773 = vrcp.pop %v1772
    %v1774 = vmul.f32 %v1772, %v1773
    %v1775 = vsub.f32 1.0, %v1774
    %v1776 = vmul.f32 %v1773, %v1775
    %v1777 = vadd.f32 %v1773, %v1776
    %vm1778 = vweird.f32 %v1772
    %vm1779 = vweird.f32 %v1773
    %vm1780 = vmor %vm1778, %vm1779
    %v1781 = vsel %vm1780, %v1773, %v1777
    %v1782 = vand.u32 2147483647, %v1772
    %vm1783 = vcmp.eq.f32.partialorder %v1782, 8.507059e+37
    %v1784 = vand.u32 %v1772, 2147483648
    %v1785 = vor.u32 1.1754944e-38, %v1784
    %v1786 = vsel %vm1783, %v1785, %v1781
    %v1787 = vmul.f32 1.0, %v1786
    %v1788 = vmul.f32 %v1787, 2.0
    %v1789 = vsub.f32 %v1788, 1.0
    %v1790 = vmul.f32 %v1787, %v1714
    %1792 = vrot.lane.b32.xlu0 %v1789, 64
    %v1793 = vpop.permute.xlu0 %1792
    %v1795 = vmul.f32 %v1787, %v1793
    %1797 = vrot.lane.b32.xlu0 %v1795, 32
    %v1798 = vpop.permute.xlu0 %1797
    %v1800 = vadd.f32 %v1790, %v1798
    %v1801 = vtanh.pop %v1800
    %1803 = vrot.lane.b32.xlu0 %v1801, 64
    %v1804 = vpop.permute.xlu0 %1803
    %v1806 = vmul.f32 %v1787, %v1804
    %1808 = vrot.lane.b32.xlu0 %v1806, 32
    %v1809 = vpop.permute.xlu0 %1808
    %v1811 = vsel %vm323, %v1809, 0.0
    %v1812 = vsel %vm376, %v1811, 0.0
    %1813 = vrot.lane.b32.xlu0 %v1806, 64
    %v1814 = vpop.permute.xlu0 %1813
    %v1816 = vrot.slane %v1806, 2
    %1817 = vrot.lane.b32.xlu0 %v1816, 96
    %v1818 = vpop.permute.xlu0 %1817
    %v1820 = vsel %vm323, 0.0, %v1814
    %v1821 = vsel %vm376, %v1820, %v1818
    %v1823 = vrot.slane %v1821, 6
    %v1825 = vsel %vm466, %v1812, %v1823
    %v1826 = vrot.slane %v1291, 4
    %v1828 = vsel %vm466, %v1826, %v1308
    %v1830 = vsel %vm378, %v1825, 0
    %1832 = vmatpush.msra.mxu0 0.0
    %1833 = vmatpush.msra.mxu0 0.0
    %1834 = vmatpush.msra.mxu0 0.0
    %1835 = vmatpush.msra.mxu0 0.0
    %1836 = vmatpush.msra.mxu0 %v1304
    %1837 = vmatpush.msra.mxu0 %v1303
    %1838 = vmatpush.msra.mxu0 %v1302
    %1839 = vmatpush.msra.mxu0 %v1301
    %1840 = vmatpush.msra.mxu0 %v1300
    %1841 = vmatpush.msra.mxu0 %v1299
    %1842 = vmatpush.msra.mxu0 %v1298
    %1843 = vmatpush.msra.mxu0 %v1297
    %1844 = vmatpush.msra.mxu0 %v1296
    %1845 = vmatpush.msra.mxu0 %v1295
    %1846 = vmatpush.msra.mxu0 %v1294
    %1847 = vmatpush.msra.mxu0 %v1293
    %1848 = vmatmul.f32.gmra.mxu0 %v1830
    %v1849 = vpop.f32.mrf.mxu0
    %v1850 = vadd.f32 %v1828, %v1849
    %1851 = vdwg.mxu0
    %v1852 = vmul.f32 %v1850, 2.0
    %v1853 = vsel %vm404, %v1852, %v1850
    %v1854 = vxor.u32 %v1853, 2147483648
    %v1855 = vmul.f32 %v1854, 1.442695
    %v1856 = vpow.pop %v1855
    %v1857 = vadd.f32 %v1856, 1.0
    %v1858 = vrcp.pop %v1857
    %v1859 = vmul.f32 %v1857, %v1858
    %v1860 = vsub.f32 1.0, %v1859
    %v1861 = vmul.f32 %v1858, %v1860
    %v1862 = vadd.f32 %v1858, %v1861
    %vm1863 = vweird.f32 %v1857
    %vm1864 = vweird.f32 %v1858
    %vm1865 = vmor %vm1863, %vm1864
    %v1866 = vsel %vm1865, %v1858, %v1862
    %v1867 = vand.u32 2147483647, %v1857
    %vm1868 = vcmp.eq.f32.partialorder %v1867, 8.507059e+37
    %v1869 = vand.u32 %v1857, 2147483648
    %v1870 = vor.u32 1.1754944e-38, %v1869
    %v1871 = vsel %vm1868, %v1870, %v1866
    %v1872 = vmul.f32 1.0, %v1871
    %v1873 = vmul.f32 %v1872, 2.0
    %v1874 = vsub.f32 %v1873, 1.0
    %v1875 = vmul.f32 %v1872, %v1800
    %1877 = vrot.lane.b32.xlu0 %v1874, 64
    %v1878 = vpop.permute.xlu0 %1877
    %v1880 = vmul.f32 %v1872, %v1878
    %1882 = vrot.lane.b32.xlu0 %v1880, 32
    %v1883 = vpop.permute.xlu0 %1882
    %v1885 = vadd.f32 %v1875, %v1883
    %v1886 = vtanh.pop %v1885
    %1888 = vrot.lane.b32.xlu0 %v1886, 64
    %v1889 = vpop.permute.xlu0 %1888
    %v1891 = vmul.f32 %v1872, %v1889
    %1893 = vrot.lane.b32.xlu0 %v1891, 32
    %v1894 = vpop.permute.xlu0 %1893
    %v1896 = vsel %vm323, %v1894, 0.0
    %v1897 = vsel %vm376, %v1896, 0.0
    %1898 = vrot.lane.b32.xlu0 %v1891, 64
    %v1899 = vpop.permute.xlu0 %1898
    %v1901 = vrot.slane %v1891, 2
    %1902 = vrot.lane.b32.xlu0 %v1901, 96
    %v1903 = vpop.permute.xlu0 %1902
    %v1905 = vsel %vm323, 0.0, %v1899
    %v1906 = vsel %vm376, %v1905, %v1903
    %v1908 = vrot.slane %v1906, 6
    %v1910 = vsel %vm466, %v1897, %v1908
    %v1911 = vrot.slane %v1291, 6
    %v1913 = vsel %vm466, %v1911, %v1308
    %v1915 = vsel %vm378, %v1910, 0
    %1917 = vmatpush.msra.mxu0 0.0
    %1918 = vmatpush.msra.mxu0 0.0
    %1919 = vmatpush.msra.mxu0 0.0
    %1920 = vmatpush.msra.mxu0 0.0
    %1921 = vmatpush.msra.mxu0 %v1304
    %1922 = vmatpush.msra.mxu0 %v1303
    %1923 = vmatpush.msra.mxu0 %v1302
    %1924 = vmatpush.msra.mxu0 %v1301
    %1925 = vmatpush.msra.mxu0 %v1300
    %1926 = vmatpush.msra.mxu0 %v1299
    %1927 = vmatpush.msra.mxu0 %v1298
    %1928 = vmatpush.msra.mxu0 %v1297
    %1929 = vmatpush.msra.mxu0 %v1296
    %1930 = vmatpush.msra.mxu0 %v1295
    %1931 = vmatpush.msra.mxu0 %v1294
    %1932 = vmatpush.msra.mxu0 %v1293
    %1933 = vmatmul.f32.gmra.mxu0 %v1915
    %v1934 = vpop.f32.mrf.mxu0
    %v1935 = vadd.f32 %v1913, %v1934
    %1936 = vdwg.mxu0
    %v1937 = vmul.f32 %v1935, 2.0
    %v1938 = vsel %vm404, %v1937, %v1935
    %v1939 = vxor.u32 %v1938, 2147483648
    %v1940 = vmul.f32 %v1939, 1.442695
    %v1941 = vpow.pop %v1940
    %v1942 = vadd.f32 %v1941, 1.0
    %v1943 = vrcp.pop %v1942
    %v1944 = vmul.f32 %v1942, %v1943
    %v1945 = vsub.f32 1.0, %v1944
    %v1946 = vmul.f32 %v1943, %v1945
    %v1947 = vadd.f32 %v1943, %v1946
    %vm1948 = vweird.f32 %v1942
    %vm1949 = vweird.f32 %v1943
    %vm1950 = vmor %vm1948, %vm1949
    %v1951 = vsel %vm1950, %v1943, %v1947
    %v1952 = vand.u32 2147483647, %v1942
    %vm1953 = vcmp.eq.f32.partialorder %v1952, 8.507059e+37
    %v1954 = vand.u32 %v1942, 2147483648
    %v1955 = vor.u32 1.1754944e-38, %v1954
    %v1956 = vsel %vm1953, %v1955, %v1951
    %v1957 = vmul.f32 1.0, %v1956
    %v1958 = vmul.f32 %v1957, 2.0
    %v1959 = vsub.f32 %v1958, 1.0
    %v1960 = vmul.f32 %v1957, %v1885
    %1962 = vrot.lane.b32.xlu0 %v1959, 64
    %v1963 = vpop.permute.xlu0 %1962
    %v1965 = vmul.f32 %v1957, %v1963
    %1967 = vrot.lane.b32.xlu0 %v1965, 32
    %v1968 = vpop.permute.xlu0 %1967
    %v1970 = vadd.f32 %v1960, %v1968
    %v1971 = vtanh.pop %v1970
    %1973 = vrot.lane.b32.xlu0 %v1971, 64
    %v1974 = vpop.permute.xlu0 %1973
    %v1976 = vmul.f32 %v1957, %v1974
    %1978 = vrot.lane.b32.xlu0 %v1976, 64
    %v1979 = vpop.permute.xlu0 %1978
    %v1981 = vrot.slane %v1976, 2
    %1982 = vrot.lane.b32.xlu0 %v1981, 96
    %v1983 = vpop.permute.xlu0 %1982
    %v1985 = vsel %vm323, 0.0, %v1979
    %v1986 = vsel %vm376, %v1985, %v1983
    %v1988 = vsel %vm378, %v1986, 0
    %1990 = vmatpush.msra.mxu0 0.0
    %1991 = vmatpush.msra.mxu0 0.0
    %1992 = vmatpush.msra.mxu0 0.0
    %1993 = vmatpush.msra.mxu0 0.0
    %1994 = vmatpush.msra.mxu0 %v1304
    %1995 = vmatpush.msra.mxu0 %v1303
    %1996 = vmatpush.msra.mxu0 %v1302
    %1997 = vmatpush.msra.mxu0 %v1301
    %1998 = vmatpush.msra.mxu0 %v1300
    %1999 = vmatpush.msra.mxu0 %v1299
    %2000 = vmatpush.msra.mxu0 %v1298
    %2001 = vmatpush.msra.mxu0 %v1297
    %2002 = vmatpush.msra.mxu0 %v1296
    %2003 = vmatpush.msra.mxu0 %v1295
    %2004 = vmatpush.msra.mxu0 %v1294
    %2005 = vmatpush.msra.mxu0 %v1293
    %2006 = vmatmul.f32.gmra.mxu0 %v1988
    %v2007 = vpop.f32.mrf.mxu0
    %v2008 = vadd.f32 %v1308, %v2007
    %2009 = vdwg.mxu0
    %v2010 = vmul.f32 %v2008, 2.0
    %v2011 = vsel %vm404, %v2010, %v2008
    %v2012 = vxor.u32 %v2011, 2147483648
    %v2013 = vmul.f32 %v2012, 1.442695
    %v2014 = vpow.pop %v2013
    %v2015 = vadd.f32 %v2014, 1.0
    %v2016 = vrcp.pop %v2015
    %v2017 = vmul.f32 %v2015, %v2016
    %v2018 = vsub.f32 1.0, %v2017
    %v2019 = vmul.f32 %v2016, %v2018
    %v2020 = vadd.f32 %v2016, %v2019
    %vm2021 = vweird.f32 %v2015
    %vm2022 = vweird.f32 %v2016
    %vm2023 = vmor %vm2021, %vm2022
    %v2024 = vsel %vm2023, %v2016, %v2020
    %v2025 = vand.u32 2147483647, %v2015
    %vm2026 = vcmp.eq.f32.partialorder %v2025, 8.507059e+37
    %v2027 = vand.u32 %v2015, 2147483648
    %v2028 = vor.u32 1.1754944e-38, %v2027
    %v2029 = vsel %vm2026, %v2028, %v2024
    %v2030 = vmul.f32 1.0, %v2029
    %v2031 = vmul.f32 %v2030, 2.0
    %v2032 = vsub.f32 %v2031, 1.0
    %v2034 = vrot.slane %v1970, 2
    %v2036 = vmul.f32 %v2030, %v2034
    %2038 = vrot.lane.b32.xlu0 %v2032, 64
    %v2039 = vpop.permute.xlu0 %2038
    %v2041 = vmul.f32 %v2030, %v2039
    %2043 = vrot.lane.b32.xlu0 %v2041, 32
    %v2044 = vpop.permute.xlu0 %2043
    %v2046 = vadd.f32 %v2036, %v2044
    %v2047 = vtanh.pop %v2046
    %2049 = vrot.lane.b32.xlu0 %v2047, 64
    %v2050 = vpop.permute.xlu0 %2049
    %v2052 = vmul.f32 %v2030, %v2050
    %v2054 = vrot.slane %v1637, 6
    %v2056 = vrot.slane %v1720, 4
    %v2059 = vrot.slane %v1976, 6
    %v2062 = vrot.slane %v2052, 2
    %v2064 = vsel %vm466, %v1477, %v1552
    %v2065 = vsel %vm1135, %v2064, %v2054
    %v2066 = vsel %vm1137, %v2065, %v2056
    %v2067 = vsel %vm466, %v1816, %v1891
    %v2068 = vsel %vm1135, %v2067, %v2059
    %v2069 = vsel %vm1137, %v2068, %v2062
    %v2070 = vld [vmem:[%s17] sm:$0xff]
    %v2071 = vld [vmem:[%s17 + $0x8] sm:$0xff]
    %v2072 = vld [vmem:[%s17 + $0x10] sm:$0xff]
    %v2073 = vld [vmem:[%s17 + $0x18] sm:$0xff]
    %v2074 = vld [vmem:[#allocation21] sm:$0x1]
    %v2076 = vperm.slane %v2074, 0
    %2080 = vrot.lane.b32.xlu0 %v2066, 32
    %v2081 = vpop.permute.xlu0 %2080
    %2082 = vrot.lane.b32.xlu0 %v2069, 32
    %v2083 = vpop.permute.xlu0 %2082
    %v2084 = vsel %vm323, %v2081, 0
    %v2086 = vsel %vm323, %v2083, 0
    %2088 = vmatpush.msra.mxu0 0.0
    %2089 = vmatpush.msra.mxu0 0.0
    %2090 = vmatpush.msra.mxu0 0.0
    %2091 = vmatpush.msra.mxu0 0.0
    %2092 = vmatpush.msra.mxu0 0.0
    %2093 = vmatpush.msra.mxu0 0.0
    %2094 = vmatpush.msra.mxu0 0.0
    %2095 = vmatpush.msra.mxu0 0.0
    %2096 = vmatpush.msra.mxu0 0.0
    %2097 = vmatpush.msra.mxu0 0.0
    %2098 = vmatpush.msra.mxu0 0.0
    %2099 = vmatpush.msra.mxu0 0.0
    %2100 = vmatpush.msra.mxu0 %v2073
    %2101 = vmatpush.msra.mxu0 %v2072
    %2102 = vmatpush.msra.mxu0 %v2071
    %2103 = vmatpush.msra.mxu0 %v2070
    %2104 = vmatmul.f32.gmra.mxu0 %v2084
    %v2105 = vpop.f32.mrf.mxu0
    %v2106 = vadd.f32 %v2076, %v2105
    %2107 = vmatmul.f32.gmra.mxu0 %v2086
    %v2108 = vpop.f32.mrf.mxu0
    %v2109 = vadd.f32 %v2076, %v2108
    %2110 = vdwg.mxu0
    %v2111 = vxor.u32 %v2106, 2147483648
    %v2112 = vxor.u32 %v2109, 2147483648
    %v2113 = vmul.f32 %v2111, 1.442695
    %v2114 = vpow.pop %v2113
    %v2115 = vmul.f32 %v2112, 1.442695
    %v2116 = vpow.pop %v2115
    %v2117 = vadd.f32 %v2114, 1.0
    %v2118 = vadd.f32 %v2116, 1.0
    %v2119 = vrcp.pop %v2117
    %v2120 = vmul.f32 %v2117, %v2119
    %v2121 = vsub.f32 1.0, %v2120
    %v2122 = vmul.f32 %v2119, %v2121
    %v2123 = vadd.f32 %v2119, %v2122
    %vm2124 = vweird.f32 %v2117
    %vm2125 = vweird.f32 %v2119
    %vm2126 = vmor %vm2124, %vm2125
    %v2127 = vsel %vm2126, %v2119, %v2123
    %v2128 = vand.u32 2147483647, %v2117
    %vm2129 = vcmp.eq.f32.partialorder %v2128, 8.507059e+37
    %v2130 = vand.u32 %v2117, 2147483648
    %v2131 = vor.u32 1.1754944e-38, %v2130
    %v2132 = vsel %vm2129, %v2131, %v2127
    %v2133 = vmul.f32 1.0, %v2132
    %v2134 = vrcp.pop %v2118
    %v2135 = vmul.f32 %v2118, %v2134
    %v2136 = vsub.f32 1.0, %v2135
    %v2137 = vmul.f32 %v2134, %v2136
    %v2138 = vadd.f32 %v2134, %v2137
    %vm2139 = vweird.f32 %v2118
    %vm2140 = vweird.f32 %v2134
    %vm2141 = vmor %vm2139, %vm2140
    %v2142 = vsel %vm2141, %v2134, %v2138
    %v2143 = vand.u32 2147483647, %v2118
    %vm2144 = vcmp.eq.f32.partialorder %v2143, 8.507059e+37
    %v2145 = vand.u32 %v2118, 2147483648
    %v2146 = vor.u32 1.1754944e-38, %v2145
    %v2147 = vsel %vm2144, %v2146, %v2142
    %v2148 = vmul.f32 1.0, %v2147
    %vm2149 = vcmask 31744
    %2150 = vst.msk [vmem:[%s19] sm:$0xff] %vm2149, %v2133
    %2151 = vst.msk [vmem:[%s19 + $0x8] sm:$0xff] %vm2149, %v2148
    // Predicated region
    $region130: #{coord_generator_forward.1} parent=1 // pred_check
      _
    $region131: #{coord_generator_forward.1} parent=1 // pred_check_branch
      %2153 = sbr.rel (0) target = $region133
    $region132: #{coord_generator_forward.1} parent=1 // pred_region
      _
    $region133: #{coord_generator_forward.1} parent=1 // pred_fallthru
      _
    // Predicated region
    $region134: #{coord_generator_forward.1} parent=1 // pred_check
      _
    $region135: #{coord_generator_forward.1} parent=1 // pred_check_branch
      %2155 = sbr.rel (0) target = $region137
    $region136: #{coord_generator_forward.1} parent=1 // pred_region
      _
    $region137: #{coord_generator_forward.1} parent=1 // pred_fallthru
      _
    %2156 = vsyncpa [#allocation3], 1
    %2157 = vsyncpa [#allocation7], 1
    %2158 = vsyncpa [#allocation10], 1
    %2159 = vsyncpa [#allocation13], 1
    %2160 = vsyncpa [#allocation16], 1
    %2161 = vsyncpa [#allocation19], 1
    %2162 = vsyncpa [#allocation22], 1
    %2163 = vsyncpa [#allocation4], 1

</llo_original>
